<compile_context>
chip_gen: v5e
topology: v5e:2x2
jax: 0.10.0
libtpu: 0.0.40
codegen_flags: <defaults>
</compile_context>

<pallas_src>
import math

import jax
import jax.numpy as jnp
from jax.experimental import pallas as pl
from jax.experimental.pallas import tpu as pltpu

# ----------------------------- config (small, synthetic) -----------------------------
B = 2                      # batch
C, T, H, W = 3, 4, 16, 16  # video input (NCTHW, like PyTorch)
PATCH_T, PATCH_S = 2, 8    # temporal / spatial patch size
WIDTH_V, HEADS_V, LAYERS_V = 32, 2, 2      # MViT (simplified) width / heads / depth
EMBED_DIM = 32             # cfg.MODEL.NUM_CLASSES (shared image/text embedding dim)
CLS_CLASSES = 10           # cfg.MODEL.CLS_CLASSES (head_cls output)
VOCAB, CTX_LEN = 64, 8     # cfg.TEXT_NET.VOCAB_SIZE / CONTEXT_LENGTH
WIDTH_T, HEADS_T, LAYERS_T = 32, 2, 2      # text transformer
TEMPERATURE = 0.07         # cfg.TEMPERATURE -> logit_scale = log(1/T)

_N_PATCH = (T // PATCH_T) * (H // PATCH_S) * (W // PATCH_S)   # 8
_PATCH_DIM = C * PATCH_T * PATCH_S * PATCH_S                  # 384
_N_TOK_V = 1 + _N_PATCH                                       # 9  (CLS + patches)
_NT_V = ((_N_TOK_V + 7) // 8) * 8                             # 16 (8-aligned token count)
_NT_T = CTX_LEN                                               # 8


def _vmem():
    return pl.BlockSpec(memory_space=pltpu.MemorySpace.VMEM)


# ----------------------------- Pallas kernels -----------------------------
def _patch_embed_kernel(x_ref, w_ref, b_ref, o_ref):
    o_ref[...] = jnp.dot(x_ref[...].astype(jnp.bfloat16), w_ref[...],
                         preferred_element_type=jnp.float32) + b_ref[...]


def _layernorm(x, g, b):
    mean = jnp.mean(x, axis=-1, keepdims=True)
    d = x - mean
    var = jnp.mean(d * d, axis=-1, keepdims=True)
    return d * jax.lax.rsqrt(var + 1e-5) * g + b


def _make_encoder_kernel(nt, dim, heads):
    """Fused pre-LN transformer encoder: one grid step == one layer of one batch row.

    Grid = (batch, layers).  The token tensor lives in a VMEM scratch across the layer
    axis; @pl.when(l==0) loads the input tokens, @pl.when(l==last) does final LN +
    pooling + projection + L2-normalize and writes the [1, EMBED] output block.
    """
    dh = dim // heads
    scale = 1.0 / math.sqrt(dh)

    def kernel(x0_ref, bias_ref, pool_ref,
               ln1_g, ln1_b, w_qkv, b_qkv, w_o, b_o,
               ln2_g, ln2_b, w_fc1, b_fc1, w_fc2, b_fc2,
               lnf_g, lnf_b, proj_w, proj_b,
               out_ref, x_scr):
        l = pl.program_id(1)

        @pl.when(l == 0)
        def _():
            x_scr[...] = x0_ref[0]

        x = x_scr[...]                       # [nt, dim] f32, VMEM-resident across layers
        bias = bias_ref[...]                 # [nt, nt]  additive attention mask

        # --- pre-LN multi-head self-attention (fused QKV, head split by lane slices) ---
        h = _layernorm(x, ln1_g[0], ln1_b[0])
        qkv = jnp.dot(h.astype(jnp.bfloat16), w_qkv[0],
                      preferred_element_type=jnp.float32) + b_qkv[0]   # [nt, 3*dim]
        w_o_full = w_o[0]                                              # [dim, dim] bf16
        attn = jnp.zeros((nt, dim), jnp.float32)
        for hh in range(heads):                                        # static unroll
            q = qkv[:, hh * dh:(hh + 1) * dh]
            k = qkv[:, dim + hh * dh: dim + (hh + 1) * dh]
            v = qkv[:, 2 * dim + hh * dh: 2 * dim + (hh + 1) * dh]
            s = jax.lax.dot_general(                                   # q @ k.T (trans_b)
                q.astype(jnp.bfloat16), k.astype(jnp.bfloat16),
                (((1,), (1,)), ((), ())),
                preferred_element_type=jnp.float32) * scale + bias
            p = jax.nn.softmax(s, axis=-1)                             # f32 softmax
            o = jnp.dot(p.astype(jnp.bfloat16), v.astype(jnp.bfloat16),
                        preferred_element_type=jnp.float32)            # [nt, dh]
            # per-head partial out-projection (avoids lane concat of heads)
            attn = attn + jnp.dot(o.astype(jnp.bfloat16),
                                  w_o_full[hh * dh:(hh + 1) * dh, :],
                                  preferred_element_type=jnp.float32)
        x = x + attn + b_o[0]

        # --- MLP ---
        h = _layernorm(x, ln2_g[0], ln2_b[0])
        f = jnp.dot(h.astype(jnp.bfloat16), w_fc1[0],
                    preferred_element_type=jnp.float32) + b_fc1[0]
        # TODO(synk): PyTorch nn.GELU defaults to the exact erf form; tanh approx used here.
        f = jax.nn.gelu(f, approximate=True)
        f = jnp.dot(f.astype(jnp.bfloat16), w_fc2[0],
                    preferred_element_type=jnp.float32) + b_fc2[0]
        x = x + f
        x_scr[...] = x

        # --- final LN + pooling + projection + L2 normalize (last layer only) ---
        @pl.when(l == pl.num_programs(1) - 1)
        def _():
            xf = _layernorm(x, lnf_g[...], lnf_b[...])
            pooled = jnp.dot(pool_ref[0], xf,
                             preferred_element_type=jnp.float32)       # [1, dim]
            feat = jnp.dot(pooled.astype(jnp.bfloat16), proj_w[...],
                           preferred_element_type=jnp.float32) + proj_b[...]
            inv = jax.lax.rsqrt(
                jnp.maximum(jnp.sum(feat * feat, axis=-1, keepdims=True), 1e-24))
            out_ref[0] = feat * inv                                    # L2-normalized

    return kernel


def _epilogue_kernel(scale_ref, img_ref, txt_ref, head_w_ref, head_b_ref,
                     logits_ref, cls_ref):
    img = img_ref[...]
    # logits_per_image = exp(logit_scale) * image_features @ text_features.T
    logits_ref[...] = scale_ref[0, 0] * jax.lax.dot_general(
        img, txt_ref[...], (((1,), (1,)), ((), ())),
        preferred_element_type=jnp.float32)
    # head_cls(image_features)  (TransformerBasicHead linear; dropout omitted)
    cls_ref[...] = jnp.dot(img.astype(jnp.bfloat16), head_w_ref[...],
                           preferred_element_type=jnp.float32) + head_b_ref[...]


# ----------------------------- encoder driver -----------------------------
def _run_encoder(x0, attn_bias, pool, blocks, lnf_g, lnf_b, proj_w, proj_b, heads):
    bsz, nt, dim = x0.shape
    layers = blocks["w_qkv"].shape[0]
    emb = proj_w.shape[1]

    wmat = lambda k1, k2: pl.BlockSpec((1, k1, k2), lambda b, l: (l, 0, 0))
    wvec = lambda k: pl.BlockSpec((1, 1, k), lambda b, l: (l, 0, 0))
    const = lambda s: pl.BlockSpec(s, lambda b, l: (0,) * len(s))

    in_specs = [
        pl.BlockSpec((1, nt, dim), lambda b, l: (b, 0, 0)),   # x0 (per-batch token block)
        const((nt, nt)),                                      # additive attention bias
        pl.BlockSpec((1, 1, nt), lambda b, l: (b, 0, 0)),     # pooling one-hot row
        wvec(dim), wvec(dim),                                 # ln1 gamma / beta
        wmat(dim, 3 * dim), wvec(3 * dim),                    # qkv
        wmat(dim, dim), wvec(dim),                            # out-proj
        wvec(dim), wvec(dim),                                 # ln2 gamma / beta
        wmat(dim, 4 * dim), wvec(4 * dim),                    # fc1
        wmat(4 * dim, dim), wvec(dim),                        # fc2
        const((1, dim)), const((1, dim)),                     # final LN
        const((dim, emb)), const((1, emb)),                   # projection
    ]
    out = pl.pallas_call(
        _make_encoder_kernel(nt, dim, heads),
        out_shape=jax.ShapeDtypeStruct((bsz, 1, emb), jnp.float32),
        grid=(bsz, layers),
        in_specs=in_specs,
        out_specs=pl.BlockSpec((1, 1, emb), lambda b, l: (b, 0, 0)),
        scratch_shapes=[pltpu.VMEM((nt, dim), jnp.float32)],
        compiler_params=pltpu.CompilerParams(
            dimension_semantics=("parallel", "arbitrary")),
    )(x0, attn_bias, pool,
      blocks["ln1_g"], blocks["ln1_b"],
      blocks["w_qkv"], blocks["b_qkv"],
      blocks["w_o"], blocks["b_o"],
      blocks["ln2_g"], blocks["ln2_b"],
      blocks["w_fc1"], blocks["b_fc1"],
      blocks["w_fc2"], blocks["b_fc2"],
      lnf_g, lnf_b, proj_w, proj_b)
    return out.reshape(bsz, emb)


# ----------------------------- model pieces (glue + kernels) -----------------------------
def encode_image(image, p):
    """Simplified MViT: patch embed -> [CLS]+pos -> fused transformer -> LN -> proj -> L2."""
    bsz = image.shape[0]
    # patchify NCTHW -> [B*N_PATCH, PATCH_DIM]  (pure layout glue in plain JAX)
    x = image.reshape(bsz, C, T // PATCH_T, PATCH_T, H // PATCH_S, PATCH_S,
                      W // PATCH_S, PATCH_S)
    x = x.transpose(0, 2, 4, 6, 1, 3, 5, 7).reshape(bsz * _N_PATCH, _PATCH_DIM)
    emb = pl.pallas_call(
        _patch_embed_kernel,
        out_shape=jax.ShapeDtypeStruct((bsz * _N_PATCH, WIDTH_V), jnp.float32),
        in_specs=[_vmem()] * 3,
        out_specs=_vmem(),
    )(x, p["patch_w"], p["patch_b"]).reshape(bsz, _N_PATCH, WIDTH_V)

    cls = jnp.broadcast_to(p["cls_token"], (bsz, 1, WIDTH_V))
    tok = jnp.concatenate([cls, emb], axis=1) + p["pos_embed"]          # [B, 9, WIDTH_V]
    x0 = jnp.pad(tok, ((0, 0), (0, _NT_V - _N_TOK_V), (0, 0)))          # pad tokens 9 -> 16

    # additive bias computed once here (not per layer): mask out padded key columns
    col = jnp.arange(_NT_V)
    bias = jnp.broadcast_to(
        jnp.where(col[None, :] < _N_TOK_V, 0.0, -1e9).astype(jnp.float32),
        (_NT_V, _NT_V))
    pool = jnp.zeros((bsz, 1, _NT_V), jnp.float32).at[:, 0, 0].set(1.0)  # CLS pooling
    return _run_encoder(x0, bias, pool, p["blocks"], p["ln_g"], p["ln_b"],
                        p["proj_w"], p["proj_b"], HEADS_V)


def encode_text(tokens, p):
    """CLIP-style text transformer: tok+pos embed -> fused causal transformer -> LN -> EOT -> proj -> L2."""
    bsz, slen = tokens.shape
    x0 = p["tok_embed"][tokens] + p["pos_embed"]                        # [B, L, WIDTH_T]
    row = jnp.arange(slen)
    bias = jnp.where(row[:, None] >= row[None, :], 0.0, -1e9).astype(jnp.float32)
    eot = jnp.argmax(tokens, axis=-1)
    pool = jax.nn.one_hot(eot, slen, dtype=jnp.float32).reshape(bsz, 1, slen)
    return _run_encoder(x0, bias, pool, p["blocks"], p["ln_g"], p["ln_b"],
                        p["proj_w"], p["proj_b"], HEADS_T)


def clipmvit_forward(params, image, text):
    """Training branch with loss_type='local':
       returns (logits_per_image, head_cls(normalized_image_features))."""
    img_feat = encode_image(image, params["visual"])   # already L2-normalized in-kernel
    txt_feat = encode_text(text, params["text"])       # already L2-normalized in-kernel
    bsz = img_feat.shape[0]
    scale = jnp.exp(params["logit_scale"]).reshape(1, 1).astype(jnp.float32)
    logits_per_image, cls_logits = pl.pallas_call(
        _epilogue_kernel,
        out_shape=(jax.ShapeDtypeStruct((bsz, bsz), jnp.float32),
                   jax.ShapeDtypeStruct((bsz, CLS_CLASSES), jnp.float32)),
        in_specs=[pl.BlockSpec(memory_space=pltpu.MemorySpace.SMEM),   # exp(logit_scale)
                  _vmem(), _vmem(), _vmem(), _vmem()],
        out_specs=(_vmem(), _vmem()),
    )(scale, img_feat, txt_feat, params["head"]["w"], params["head"]["b"])
    return logits_per_image, cls_logits


# ----------------------------- deterministic parameter init -----------------------------
def _normal(key, shape, scale=0.02):
    return scale * jax.random.normal(key, shape, jnp.float32)


def _init_blocks(key, width, layers):
    ks = jax.random.split(key, 4)
    return {
        "ln1_g": jnp.ones((layers, 1, width), jnp.float32),
        "ln1_b": jnp.zeros((layers, 1, width), jnp.float32),
        "w_qkv": _normal(ks[0], (layers, width, 3 * width)).astype(jnp.bfloat16),
        "b_qkv": jnp.zeros((layers, 1, 3 * width), jnp.float32),
        "w_o": _normal(ks[1], (layers, width, width)).astype(jnp.bfloat16),
        "b_o": jnp.zeros((layers, 1, width), jnp.float32),
        "ln2_g": jnp.ones((layers, 1, width), jnp.float32),
        "ln2_b": jnp.zeros((layers, 1, width), jnp.float32),
        "w_fc1": _normal(ks[2], (layers, width, 4 * width)).astype(jnp.bfloat16),
        "b_fc1": jnp.zeros((layers, 1, 4 * width), jnp.float32),
        "w_fc2": _normal(ks[3], (layers, 4 * width, width)).astype(jnp.bfloat16),
        "b_fc2": jnp.zeros((layers, 1, width), jnp.float32),
    }


def init_params(key):
    kv, kt, kh = jax.random.split(key, 3)

    kvs = jax.random.split(kv, 5)
    visual = {
        "patch_w": _normal(kvs[0], (_PATCH_DIM, WIDTH_V)).astype(jnp.bfloat16),
        "patch_b": jnp.zeros((1, WIDTH_V), jnp.float32),
        "cls_token": _normal(kvs[1], (1, 1, WIDTH_V)),
        "pos_embed": _normal(kvs[2], (1, _N_TOK_V, WIDTH_V)),
        "blocks": _init_blocks(kvs[3], WIDTH_V, LAYERS_V),
        "ln_g": jnp.ones((1, WIDTH_V), jnp.float32),
        "ln_b": jnp.zeros((1, WIDTH_V), jnp.float32),
        "proj_w": _normal(kvs[4], (WIDTH_V, EMBED_DIM)).astype(jnp.bfloat16),
        "proj_b": jnp.zeros((1, EMBED_DIM), jnp.float32),
    }

    kts = jax.random.split(kt, 4)
    text = {
        "tok_embed": _normal(kts[0], (VOCAB, WIDTH_T)),
        "pos_embed": _normal(kts[1], (1, CTX_LEN, WIDTH_T)),
        "blocks": _init_blocks(kts[2], WIDTH_T, LAYERS_T),
        "ln_g": jnp.ones((1, WIDTH_T), jnp.float32),
        "ln_b": jnp.zeros((1, WIDTH_T), jnp.float32),
        "proj_w": _normal(kts[3], (WIDTH_T, EMBED_DIM)).astype(jnp.bfloat16),
        "proj_b": jnp.zeros((1, EMBED_DIM), jnp.float32),
    }

    head = {
        "w": _normal(kh, (EMBED_DIM, CLS_CLASSES)).astype(jnp.bfloat16),
        "b": jnp.zeros((1, CLS_CLASSES), jnp.float32),
    }

    return {"visual": visual, "text": text, "head": head,
            "logit_scale": jnp.log(jnp.array(1.0 / TEMPERATURE, jnp.float32))}


# ----------------------------- main -----------------------------
if __name__ == "__main__":
    key = jax.random.PRNGKey(0)
    k_param, k_img, k_txt = jax.random.split(key, 3)

    params = init_params(k_param)

    image = jax.random.normal(k_img, (B, C, T, H, W), jnp.float32)     # NCTHW, like PyTorch
    text = jax.random.randint(k_txt, (B, CTX_LEN), 1, VOCAB - 1, jnp.int32)
    text = text.at[:, -1].set(VOCAB - 1)                               # EOT token (argmax pooling)

    fwd = jax.jit(clipmvit_forward)
    logits_per_image, cls_logits = fwd(params, image, text)
    jax.block_until_ready((logits_per_image, cls_logits))

    assert logits_per_image.shape == (B, B)
    assert cls_logits.shape == (B, CLS_CLASSES)
    assert bool(jnp.all(jnp.isfinite(logits_per_image)))
    assert bool(jnp.all(jnp.isfinite(cls_logits)))
    print("KERNEL_OK")
</pallas_src>

<mosaic_0001>
module attributes {stable_mosaic.version = 11 : i64} {
  func.func @_patch_embed_kernel(%arg0: memref<16x384xf32, #tpu.memory_space<vmem>>, %arg1: memref<384x32xbf16, #tpu.memory_space<vmem>>, %arg2: memref<1x32xf32, #tpu.memory_space<vmem>>, %arg3: memref<16x32xf32, #tpu.memory_space<vmem>>) attributes {dimension_semantics = [], scalar_prefetch = 0 : i64, scratch_operands = 0 : i64, tpu.core_type = #tpu.core_type<tc>} {
    %c0 = arith.constant 0 : index
    %c0_0 = arith.constant 0 : index
    %0 = vector.load %arg0[%c0, %c0_0] : memref<16x384xf32, #tpu.memory_space<vmem>>, vector<16x384xf32>
    %1 = arith.truncf %0 : vector<16x384xf32> to vector<16x384xbf16>
    %c0_1 = arith.constant 0 : index
    %c0_2 = arith.constant 0 : index
    %2 = vector.load %arg1[%c0_1, %c0_2] : memref<384x32xbf16, #tpu.memory_space<vmem>>, vector<384x32xbf16>
    %cst = arith.constant dense<0.000000e+00> : vector<16x32xf32>
    %3 = tpu.matmul %1, %2, %cst {dimension_numbers = #tpu.dot_dimension_numbers<[1], [0], [0], [1], [0, 0, 1, 1], [], []>} : vector<16x384xbf16>, vector<384x32xbf16>, vector<16x32xf32> -> vector<16x32xf32>
    %c0_3 = arith.constant 0 : index
    %c0_4 = arith.constant 0 : index
    %4 = vector.load %arg2[%c0_3, %c0_4] : memref<1x32xf32, #tpu.memory_space<vmem>>, vector<1x32xf32>
    %5 = vector.broadcast %4 : vector<1x32xf32> to vector<16x32xf32>
    %6 = arith.addf %3, %5 : vector<16x32xf32>
    %c0_5 = arith.constant 0 : index
    %c0_6 = arith.constant 0 : index
    %7 = vector.load %arg3[%c0_5, %c0_6] : memref<16x32xf32, #tpu.memory_space<vmem>>, vector<16x32xf32>
    tpu.vector_store %arg3[%c0_5, %c0_6], %6 {strides = array<i32>} : memref<16x32xf32, #tpu.memory_space<vmem>>, vector<16x32xf32>,
    return
  }
}

module attributes {stable_mosaic.version = 11 : i64} {
  func.func @kernel(%arg0: i32, %arg1: i32, %arg2: memref<1x16x32xf32, #tpu.memory_space<vmem>>, %arg3: memref<16x16xf32, #tpu.memory_space<vmem>>, %arg4: memref<1x1x16xf32, #tpu.memory_space<vmem>>, %arg5: memref<1x1x32xf32, #tpu.memory_space<vmem>>, %arg6: memref<1x1x32xf32, #tpu.memory_space<vmem>>, %arg7: memref<1x32x96xbf16, #tpu.memory_space<vmem>>, %arg8: memref<1x1x96xf32, #tpu.memory_space<vmem>>, %arg9: memref<1x32x32xbf16, #tpu.memory_space<vmem>>, %arg10: memref<1x1x32xf32, #tpu.memory_space<vmem>>, %arg11: memref<1x1x32xf32, #tpu.memory_space<vmem>>, %arg12: memref<1x1x32xf32, #tpu.memory_space<vmem>>, %arg13: memref<1x32x128xbf16, #tpu.memory_space<vmem>>, %arg14: memref<1x1x128xf32, #tpu.memory_space<vmem>>, %arg15: memref<1x128x32xbf16, #tpu.memory_space<vmem>>, %arg16: memref<1x1x32xf32, #tpu.memory_space<vmem>>, %arg17: memref<1x32xf32, #tpu.memory_space<vmem>>, %arg18: memref<1x32xf32, #tpu.memory_space<vmem>>, %arg19: memref<32x32xbf16, #tpu.memory_space<vmem>>, %arg20: memref<1x32xf32, #tpu.memory_space<vmem>>, %arg21: memref<1x1x32xf32, #tpu.memory_space<vmem>>, %arg22: memref<16x32xf32, #tpu.memory_space<vmem>>) attributes {dimension_semantics = [#tpu.dimension_semantics<parallel>, #tpu.dimension_semantics<arbitrary>], iteration_bounds = array<i64: 2, 2>, scalar_prefetch = 0 : i64, scratch_operands = 1 : i64, tpu.core_type = #tpu.core_type<tc>, window_params = [{transform_indices = @transform_0, window_bounds = array<i64: 1, 16, 32>}, {pipeline_mode = #tpu.pipeline_mode<synchronous>, transform_indices = @transform_1, window_bounds = array<i64: 16, 16>}, {transform_indices = @transform_2, window_bounds = array<i64: 1, 1, 16>}, {transform_indices = @transform_3, window_bounds = array<i64: 1, 1, 32>}, {transform_indices = @transform_4, window_bounds = array<i64: 1, 1, 32>}, {transform_indices = @transform_5, window_bounds = array<i64: 1, 32, 96>}, {transform_indices = @transform_6, window_bounds = array<i64: 1, 1, 96>}, {transform_indices = @transform_7, window_bounds = array<i64: 1, 32, 32>}, {transform_indices = @transform_8, window_bounds = array<i64: 1, 1, 32>}, {transform_indices = @transform_9, window_bounds = array<i64: 1, 1, 32>}, {transform_indices = @transform_10, window_bounds = array<i64: 1, 1, 32>}, {transform_indices = @transform_11, window_bounds = array<i64: 1, 32, 128>}, {transform_indices = @transform_12, window_bounds = array<i64: 1, 1, 128>}, {transform_indices = @transform_13, window_bounds = array<i64: 1, 128, 32>}, {transform_indices = @transform_14, window_bounds = array<i64: 1, 1, 32>}, {pipeline_mode = #tpu.pipeline_mode<synchronous>, transform_indices = @transform_15, window_bounds = array<i64: 1, 32>}, {pipeline_mode = #tpu.pipeline_mode<synchronous>, transform_indices = @transform_16, window_bounds = array<i64: 1, 32>}, {pipeline_mode = #tpu.pipeline_mode<synchronous>, transform_indices = @transform_17, window_bounds = array<i64: 32, 32>}, {pipeline_mode = #tpu.pipeline_mode<synchronous>, transform_indices = @transform_18, window_bounds = array<i64: 1, 32>}, {transform_indices = @transform_19, window_bounds = array<i64: 1, 1, 32>}]} {
    %c0_i32 = arith.constant 0 : i32
    %0 = arith.cmpi eq, %arg1, %c0_i32 : i32
    %1 = arith.extui %0 : i1 to i32
    %c0_i32_0 = arith.constant 0 : i32
    %2 = arith.cmpi ne, %1, %c0_i32_0 : i32
    scf.if %2 {
      %c0_74 = arith.constant 0 : index
      %c0_75 = arith.constant 0 : index
      %c0_76 = arith.constant 0 : index
      %157 = vector.load %arg2[%c0_74, %c0_75, %c0_76] : memref<1x16x32xf32, #tpu.memory_space<vmem>>, vector<1x16x32xf32>
      %158 = vector.shape_cast %157 : vector<1x16x32xf32> to vector<16x32xf32>
      %c0_77 = arith.constant 0 : index
      %c0_78 = arith.constant 0 : index
      %159 = vector.load %arg22[%c0_77, %c0_78] : memref<16x32xf32, #tpu.memory_space<vmem>>, vector<16x32xf32>
      tpu.vector_store %arg22[%c0_77, %c0_78], %158 {strides = array<i32>} : memref<16x32xf32, #tpu.memory_space<vmem>>, vector<16x32xf32>,
    } else {
    }
    %c0 = arith.constant 0 : index
    %c0_1 = arith.constant 0 : index
    %3 = vector.load %arg22[%c0, %c0_1] : memref<16x32xf32, #tpu.memory_space<vmem>>, vector<16x32xf32>
    %c0_2 = arith.constant 0 : index
    %c0_3 = arith.constant 0 : index
    %4 = vector.load %arg3[%c0_2, %c0_3] : memref<16x16xf32, #tpu.memory_space<vmem>>, vector<16x16xf32>
    %c0_4 = arith.constant 0 : index
    %c0_5 = arith.constant 0 : index
    %c0_6 = arith.constant 0 : index
    %5 = vector.load %arg5[%c0_4, %c0_5, %c0_6] : memref<1x1x32xf32, #tpu.memory_space<vmem>>, vector<1x1x32xf32>
    %6 = vector.shape_cast %5 : vector<1x1x32xf32> to vector<1x32xf32>
    %c0_7 = arith.constant 0 : index
    %c0_8 = arith.constant 0 : index
    %c0_9 = arith.constant 0 : index
    %7 = vector.load %arg6[%c0_7, %c0_8, %c0_9] : memref<1x1x32xf32, #tpu.memory_space<vmem>>, vector<1x1x32xf32>
    %8 = vector.shape_cast %7 : vector<1x1x32xf32> to vector<1x32xf32>
    %cst = arith.constant dense<0.000000e+00> : vector<16xf32>
    %9 = vector.multi_reduction <add>, %3, %cst [1] : vector<16x32xf32> to vector<16xf32>
    %10 = vector.shape_cast %9 : vector<16xf32> to vector<16x1xf32>
    %cst_10 = arith.constant 3.200000e+01 : f32
    %11 = vector.broadcast %cst_10 : f32 to vector<16x1xf32>
    %12 = arith.divf %10, %11 : vector<16x1xf32>
    %13 = vector.broadcast %12 : vector<16x1xf32> to vector<16x32xf32>
    %14 = arith.subf %3, %13 : vector<16x32xf32>
    %15 = arith.mulf %14, %14 : vector<16x32xf32>
    %cst_11 = arith.constant dense<0.000000e+00> : vector<16xf32>
    %16 = vector.multi_reduction <add>, %15, %cst_11 [1] : vector<16x32xf32> to vector<16xf32>
    %17 = vector.shape_cast %16 : vector<16xf32> to vector<16x1xf32>
    %cst_12 = arith.constant 3.200000e+01 : f32
    %18 = vector.broadcast %cst_12 : f32 to vector<16x1xf32>
    %19 = arith.divf %17, %18 : vector<16x1xf32>
    %cst_13 = arith.constant 9.99999974E-6 : f32
    %20 = vector.broadcast %cst_13 : f32 to vector<16x1xf32>
    %21 = arith.addf %19, %20 : vector<16x1xf32>
    %22 = math.rsqrt %21 : vector<16x1xf32>
    %23 = vector.broadcast %22 : vector<16x1xf32> to vector<16x32xf32>
    %24 = arith.mulf %14, %23 : vector<16x32xf32>
    %25 = vector.broadcast %6 : vector<1x32xf32> to vector<16x32xf32>
    %26 = arith.mulf %24, %25 : vector<16x32xf32>
    %27 = vector.broadcast %8 : vector<1x32xf32> to vector<16x32xf32>
    %28 = arith.addf %26, %27 : vector<16x32xf32>
    %29 = arith.truncf %28 : vector<16x32xf32> to vector<16x32xbf16>
    %c0_14 = arith.constant 0 : index
    %c0_15 = arith.constant 0 : index
    %c0_16 = arith.constant 0 : index
    %30 = vector.load %arg7[%c0_14, %c0_15, %c0_16] : memref<1x32x96xbf16, #tpu.memory_space<vmem>>, vector<1x32x96xbf16>
    %31 = vector.shape_cast %30 : vector<1x32x96xbf16> to vector<32x96xbf16>
    %cst_17 = arith.constant dense<0.000000e+00> : vector<16x96xf32>
    %32 = tpu.matmul %29, %31, %cst_17 {dimension_numbers = #tpu.dot_dimension_numbers<[1], [0], [0], [1], [0, 0, 1, 1], [], []>} : vector<16x32xbf16>, vector<32x96xbf16>, vector<16x96xf32> -> vector<16x96xf32>
    %c0_18 = arith.constant 0 : index
    %c0_19 = arith.constant 0 : index
    %c0_20 = arith.constant 0 : index
    %33 = vector.load %arg8[%c0_18, %c0_19, %c0_20] : memref<1x1x96xf32, #tpu.memory_space<vmem>>, vector<1x1x96xf32>
    %34 = vector.shape_cast %33 : vector<1x1x96xf32> to vector<1x96xf32>
    %35 = vector.broadcast %34 : vector<1x96xf32> to vector<16x96xf32>
    %36 = arith.addf %32, %35 : vector<16x96xf32>
    %c0_21 = arith.constant 0 : index
    %c0_22 = arith.constant 0 : index
    %c0_23 = arith.constant 0 : index
    %37 = vector.load %arg9[%c0_21, %c0_22, %c0_23] : memref<1x32x32xbf16, #tpu.memory_space<vmem>>, vector<1x32x32xbf16>
    %38 = vector.shape_cast %37 : vector<1x32x32xbf16> to vector<32x32xbf16>
    %cst_24 = arith.constant 0.000000e+00 : f32
    %39 = vector.broadcast %cst_24 : f32 to vector<16x32xf32>
    %40 = vector.extract_strided_slice %36 {offsets = [0, 0], sizes = [16, 16], strides = [1, 1]} : vector<16x96xf32> to vector<16x16xf32>
    %41 = vector.extract_strided_slice %36 {offsets = [0, 32], sizes = [16, 16], strides = [1, 1]} : vector<16x96xf32> to vector<16x16xf32>
    %42 = vector.extract_strided_slice %36 {offsets = [0, 64], sizes = [16, 16], strides = [1, 1]} : vector<16x96xf32> to vector<16x16xf32>
    %43 = arith.truncf %40 : vector<16x16xf32> to vector<16x16xbf16>
    %44 = arith.truncf %41 : vector<16x16xf32> to vector<16x16xbf16>
    %cst_25 = arith.constant dense<0.000000e+00> : vector<16x16xf32>
    %45 = tpu.matmul %43, %44, %cst_25 {dimension_numbers = #tpu.dot_dimension_numbers<[1], [1], [0], [0], [0, 0, 1, 0], [], []>} : vector<16x16xbf16>, vector<16x16xbf16>, vector<16x16xf32> -> vector<16x16xf32>
    %cst_26 = arith.constant 2.500000e-01 : f32
    %46 = vector.broadcast %cst_26 : f32 to vector<16x16xf32>
    %47 = arith.mulf %45, %46 : vector<16x16xf32>
    %48 = arith.addf %47, %4 : vector<16x16xf32>
    %cst_27 = arith.constant dense<0xFF800000> : vector<16xf32>
    %49 = vector.multi_reduction <maximumf>, %48, %cst_27 [1] : vector<16x16xf32> to vector<16xf32>
    %cst_28 = arith.constant 0xFF800000 : f32
    %50 = vector.broadcast %cst_28 : f32 to vector<16xf32>
    %51 = arith.maximumf %50, %49 : vector<16xf32>
    %52 = vector.shape_cast %51 : vector<16xf32> to vector<16x1xf32>
    %53 = vector.broadcast %52 : vector<16x1xf32> to vector<16x16xf32>
    %54 = arith.subf %48, %53 : vector<16x16xf32>
    %55 = math.exp %54 : vector<16x16xf32>
    %cst_29 = arith.constant dense<0.000000e+00> : vector<16xf32>
    %56 = vector.multi_reduction <add>, %55, %cst_29 [1] : vector<16x16xf32> to vector<16xf32>
    %57 = vector.shape_cast %56 : vector<16xf32> to vector<16x1xf32>
    %58 = vector.broadcast %57 : vector<16x1xf32> to vector<16x16xf32>
    %59 = arith.divf %55, %58 : vector<16x16xf32>
    %60 = arith.truncf %59 : vector<16x16xf32> to vector<16x16xbf16>
    %61 = arith.truncf %42 : vector<16x16xf32> to vector<16x16xbf16>
    %cst_30 = arith.constant dense<0.000000e+00> : vector<16x16xf32>
    %62 = tpu.matmul %60, %61, %cst_30 {dimension_numbers = #tpu.dot_dimension_numbers<[1], [0], [0], [1], [0, 0, 1, 1], [], []>} : vector<16x16xbf16>, vector<16x16xbf16>, vector<16x16xf32> -> vector<16x16xf32>
    %63 = arith.truncf %62 : vector<16x16xf32> to vector<16x16xbf16>
    %64 = vector.extract_strided_slice %38 {offsets = [0, 0], sizes = [16, 32], strides = [1, 1]} : vector<32x32xbf16> to vector<16x32xbf16>
    %cst_31 = arith.constant dense<0.000000e+00> : vector<16x32xf32>
    %65 = tpu.matmul %63, %64, %cst_31 {dimension_numbers = #tpu.dot_dimension_numbers<[1], [0], [0], [1], [0, 0, 1, 1], [], []>} : vector<16x16xbf16>, vector<16x32xbf16>, vector<16x32xf32> -> vector<16x32xf32>
    %66 = arith.addf %39, %65 : vector<16x32xf32>
    %67 = vector.extract_strided_slice %36 {offsets = [0, 16], sizes = [16, 16], strides = [1, 1]} : vector<16x96xf32> to vector<16x16xf32>
    %68 = vector.extract_strided_slice %36 {offsets = [0, 48], sizes = [16, 16], strides = [1, 1]} : vector<16x96xf32> to vector<16x16xf32>
    %69 = vector.extract_strided_slice %36 {offsets = [0, 80], sizes = [16, 16], strides = [1, 1]} : vector<16x96xf32> to vector<16x16xf32>
    %70 = arith.truncf %67 : vector<16x16xf32> to vector<16x16xbf16>
    %71 = arith.truncf %68 : vector<16x16xf32> to vector<16x16xbf16>
    %cst_32 = arith.constant dense<0.000000e+00> : vector<16x16xf32>
    %72 = tpu.matmul %70, %71, %cst_32 {dimension_numbers = #tpu.dot_dimension_numbers<[1], [1], [0], [0], [0, 0, 1, 0], [], []>} : vector<16x16xbf16>, vector<16x16xbf16>, vector<16x16xf32> -> vector<16x16xf32>
    %cst_33 = arith.constant 2.500000e-01 : f32
    %73 = vector.broadcast %cst_33 : f32 to vector<16x16xf32>
    %74 = arith.mulf %72, %73 : vector<16x16xf32>
    %75 = arith.addf %74, %4 : vector<16x16xf32>
    %cst_34 = arith.constant dense<0xFF800000> : vector<16xf32>
    %76 = vector.multi_reduction <maximumf>, %75, %cst_34 [1] : vector<16x16xf32> to vector<16xf32>
    %cst_35 = arith.constant 0xFF800000 : f32
    %77 = vector.broadcast %cst_35 : f32 to vector<16xf32>
    %78 = arith.maximumf %77, %76 : vector<16xf32>
    %79 = vector.shape_cast %78 : vector<16xf32> to vector<16x1xf32>
    %80 = vector.broadcast %79 : vector<16x1xf32> to vector<16x16xf32>
    %81 = arith.subf %75, %80 : vector<16x16xf32>
    %82 = math.exp %81 : vector<16x16xf32>
    %cst_36 = arith.constant dense<0.000000e+00> : vector<16xf32>
    %83 = vector.multi_reduction <add>, %82, %cst_36 [1] : vector<16x16xf32> to vector<16xf32>
    %84 = vector.shape_cast %83 : vector<16xf32> to vector<16x1xf32>
    %85 = vector.broadcast %84 : vector<16x1xf32> to vector<16x16xf32>
    %86 = arith.divf %82, %85 : vector<16x16xf32>
    %87 = arith.truncf %86 : vector<16x16xf32> to vector<16x16xbf16>
    %88 = arith.truncf %69 : vector<16x16xf32> to vector<16x16xbf16>
    %cst_37 = arith.constant dense<0.000000e+00> : vector<16x16xf32>
    %89 = tpu.matmul %87, %88, %cst_37 {dimension_numbers = #tpu.dot_dimension_numbers<[1], [0], [0], [1], [0, 0, 1, 1], [], []>} : vector<16x16xbf16>, vector<16x16xbf16>, vector<16x16xf32> -> vector<16x16xf32>
    %90 = arith.truncf %89 : vector<16x16xf32> to vector<16x16xbf16>
    %91 = vector.extract_strided_slice %38 {offsets = [16, 0], sizes = [16, 32], strides = [1, 1]} : vector<32x32xbf16> to vector<16x32xbf16>
    %cst_38 = arith.constant dense<0.000000e+00> : vector<16x32xf32>
    %92 = tpu.matmul %90, %91, %cst_38 {dimension_numbers = #tpu.dot_dimension_numbers<[1], [0], [0], [1], [0, 0, 1, 1], [], []>} : vector<16x16xbf16>, vector<16x32xbf16>, vector<16x32xf32> -> vector<16x32xf32>
    %93 = arith.addf %66, %92 : vector<16x32xf32>
    %94 = arith.addf %3, %93 : vector<16x32xf32>
    %c0_39 = arith.constant 0 : index
    %c0_40 = arith.constant 0 : index
    %c0_41 = arith.constant 0 : index
    %95 = vector.load %arg10[%c0_39, %c0_40, %c0_41] : memref<1x1x32xf32, #tpu.memory_space<vmem>>, vector<1x1x32xf32>
    %96 = vector.shape_cast %95 : vector<1x1x32xf32> to vector<1x32xf32>
    %97 = vector.broadcast %96 : vector<1x32xf32> to vector<16x32xf32>
    %98 = arith.addf %94, %97 : vector<16x32xf32>
    %c0_42 = arith.constant 0 : index
    %c0_43 = arith.constant 0 : index
    %c0_44 = arith.constant 0 : index
    %99 = vector.load %arg11[%c0_42, %c0_43, %c0_44] : memref<1x1x32xf32, #tpu.memory_space<vmem>>, vector<1x1x32xf32>
    %100 = vector.shape_cast %99 : vector<1x1x32xf32> to vector<1x32xf32>
    %c0_45 = arith.constant 0 : index
    %c0_46 = arith.constant 0 : index
    %c0_47 = arith.constant 0 : index
    %101 = vector.load %arg12[%c0_45, %c0_46, %c0_47] : memref<1x1x32xf32, #tpu.memory_space<vmem>>, vector<1x1x32xf32>
    %102 = vector.shape_cast %101 : vector<1x1x32xf32> to vector<1x32xf32>
    %cst_48 = arith.constant dense<0.000000e+00> : vector<16xf32>
    %103 = vector.multi_reduction <add>, %98, %cst_48 [1] : vector<16x32xf32> to vector<16xf32>
    %104 = vector.shape_cast %103 : vector<16xf32> to vector<16x1xf32>
    %cst_49 = arith.constant 3.200000e+01 : f32
    %105 = vector.broadcast %cst_49 : f32 to vector<16x1xf32>
    %106 = arith.divf %104, %105 : vector<16x1xf32>
    %107 = vector.broadcast %106 : vector<16x1xf32> to vector<16x32xf32>
    %108 = arith.subf %98, %107 : vector<16x32xf32>
    %109 = arith.mulf %108, %108 : vector<16x32xf32>
    %cst_50 = arith.constant dense<0.000000e+00> : vector<16xf32>
    %110 = vector.multi_reduction <add>, %109, %cst_50 [1] : vector<16x32xf32> to vector<16xf32>
    %111 = vector.shape_cast %110 : vector<16xf32> to vector<16x1xf32>
    %cst_51 = arith.constant 3.200000e+01 : f32
    %112 = vector.broadcast %cst_51 : f32 to vector<16x1xf32>
    %113 = arith.divf %111, %112 : vector<16x1xf32>
    %cst_52 = arith.constant 9.99999974E-6 : f32
    %114 = vector.broadcast %cst_52 : f32 to vector<16x1xf32>
    %115 = arith.addf %113, %114 : vector<16x1xf32>
    %116 = math.rsqrt %115 : vector<16x1xf32>
    %117 = vector.broadcast %116 : vector<16x1xf32> to vector<16x32xf32>
    %118 = arith.mulf %108, %117 : vector<16x32xf32>
    %119 = vector.broadcast %100 : vector<1x32xf32> to vector<16x32xf32>
    %120 = arith.mulf %118, %119 : vector<16x32xf32>
    %121 = vector.broadcast %102 : vector<1x32xf32> to vector<16x32xf32>
    %122 = arith.addf %120, %121 : vector<16x32xf32>
    %123 = arith.truncf %122 : vector<16x32xf32> to vector<16x32xbf16>
    %c0_53 = arith.constant 0 : index
    %c0_54 = arith.constant 0 : index
    %c0_55 = arith.constant 0 : index
    %124 = vector.load %arg13[%c0_53, %c0_54, %c0_55] : memref<1x32x128xbf16, #tpu.memory_space<vmem>>, vector<1x32x128xbf16>
    %125 = vector.shape_cast %124 : vector<1x32x128xbf16> to vector<32x128xbf16>
    %cst_56 = arith.constant dense<0.000000e+00> : vector<16x128xf32>
    %126 = tpu.matmul %123, %125, %cst_56 {dimension_numbers = #tpu.dot_dimension_numbers<[1], [0], [0], [1], [0, 0, 1, 1], [], []>} : vector<16x32xbf16>, vector<32x128xbf16>, vector<16x128xf32> -> vector<16x128xf32>
    %c0_57 = arith.constant 0 : index
    %c0_58 = arith.constant 0 : index
    %c0_59 = arith.constant 0 : index
    %127 = vector.load %arg14[%c0_57, %c0_58, %c0_59] : memref<1x1x128xf32, #tpu.memory_space<vmem>>, vector<1x1x128xf32>
    %128 = vector.shape_cast %127 : vector<1x1x128xf32> to vector<1x128xf32>
    %129 = vector.broadcast %128 : vector<1x128xf32> to vector<16x128xf32>
    %130 = arith.addf %126, %129 : vector<16x128xf32>
    %131 = arith.mulf %130, %130 : vector<16x128xf32>
    %132 = arith.mulf %130, %131 : vector<16x128xf32>
    %cst_60 = arith.constant 4.471500e-02 : f32
    %133 = vector.broadcast %cst_60 : f32 to vector<16x128xf32>
    %134 = arith.mulf %133, %132 : vector<16x128xf32>
    %135 = arith.addf %130, %134 : vector<16x128xf32>
    %cst_61 = arith.constant 0.797884583 : f32
    %136 = vector.broadcast %cst_61 : f32 to vector<16x128xf32>
    %137 = arith.mulf %136, %135 : vector<16x128xf32>
    %138 = math.tanh %137 : vector<16x128xf32>
    %cst_62 = arith.constant 1.000000e+00 : f32
    %139 = vector.broadcast %cst_62 : f32 to vector<16x128xf32>
    %140 = arith.addf %139, %138 : vector<16x128xf32>
    %cst_63 = arith.constant 5.000000e-01 : f32
    %141 = vector.broadcast %cst_63 : f32 to vector<16x128xf32>
    %142 = arith.mulf %141, %140 : vector<16x128xf32>
    %143 = arith.mulf %130, %142 : vector<16x128xf32>
    %144 = arith.truncf %143 : vector<16x128xf32> to vector<16x128xbf16>
    %c0_64 = arith.constant 0 : index
    %c0_65 = arith.constant 0 : index
    %c0_66 = arith.constant 0 : index
    %145 = vector.load %arg15[%c0_64, %c0_65, %c0_66] : memref<1x128x32xbf16, #tpu.memory_space<vmem>>, vector<1x128x32xbf16>
    %146 = vector.shape_cast %145 : vector<1x128x32xbf16> to vector<128x32xbf16>
    %cst_67 = arith.constant dense<0.000000e+00> : vector<16x32xf32>
    %147 = tpu.matmul %144, %146, %cst_67 {dimension_numbers = #tpu.dot_dimension_numbers<[1], [0], [0], [1], [0, 0, 1, 1], [], []>} : vector<16x128xbf16>, vector<128x32xbf16>, vector<16x32xf32> -> vector<16x32xf32>
    %c0_68 = arith.constant 0 : index
    %c0_69 = arith.constant 0 : index
    %c0_70 = arith.constant 0 : index
    %148 = vector.load %arg16[%c0_68, %c0_69, %c0_70] : memref<1x1x32xf32, #tpu.memory_space<vmem>>, vector<1x1x32xf32>
    %149 = vector.shape_cast %148 : vector<1x1x32xf32> to vector<1x32xf32>
    %150 = vector.broadcast %149 : vector<1x32xf32> to vector<16x32xf32>
    %151 = arith.addf %147, %150 : vector<16x32xf32>
    %152 = arith.addf %98, %151 : vector<16x32xf32>
    %c0_71 = arith.constant 0 : index
    %c0_72 = arith.constant 0 : index
    %153 = vector.load %arg22[%c0_71, %c0_72] : memref<16x32xf32, #tpu.memory_space<vmem>>, vector<16x32xf32>
    tpu.vector_store %arg22[%c0_71, %c0_72], %152 {strides = array<i32>} : memref<16x32xf32, #tpu.memory_space<vmem>>, vector<16x32xf32>,
    %c1_i32 = arith.constant 1 : i32
    %154 = arith.cmpi eq, %arg1, %c1_i32 : i32
    %155 = arith.extui %154 : i1 to i32
    %c0_i32_73 = arith.constant 0 : i32
    %156 = arith.cmpi ne, %155, %c0_i32_73 : i32
    scf.if %156 {
      %c0_74 = arith.constant 0 : index
      %c0_75 = arith.constant 0 : index
      %157 = vector.load %arg17[%c0_74, %c0_75] : memref<1x32xf32, #tpu.memory_space<vmem>>, vector<1x32xf32>
      %c0_76 = arith.constant 0 : index
      %c0_77 = arith.constant 0 : index
      %158 = vector.load %arg18[%c0_76, %c0_77] : memref<1x32xf32, #tpu.memory_space<vmem>>, vector<1x32xf32>
      %cst_78 = arith.constant dense<0.000000e+00> : vector<16xf32>
      %159 = vector.multi_reduction <add>, %152, %cst_78 [1] : vector<16x32xf32> to vector<16xf32>
      %160 = vector.shape_cast %159 : vector<16xf32> to vector<16x1xf32>
      %cst_79 = arith.constant 3.200000e+01 : f32
      %161 = vector.broadcast %cst_79 : f32 to vector<16x1xf32>
      %162 = arith.divf %160, %161 : vector<16x1xf32>
      %163 = vector.broadcast %162 : vector<16x1xf32> to vector<16x32xf32>
      %164 = arith.subf %152, %163 : vector<16x32xf32>
      %165 = arith.mulf %164, %164 : vector<16x32xf32>
      %cst_80 = arith.constant dense<0.000000e+00> : vector<16xf32>
      %166 = vector.multi_reduction <add>, %165, %cst_80 [1] : vector<16x32xf32> to vector<16xf32>
      %167 = vector.shape_cast %166 : vector<16xf32> to vector<16x1xf32>
      %cst_81 = arith.constant 3.200000e+01 : f32
      %168 = vector.broadcast %cst_81 : f32 to vector<16x1xf32>
      %169 = arith.divf %167, %168 : vector<16x1xf32>
      %cst_82 = arith.constant 9.99999974E-6 : f32
      %170 = vector.broadcast %cst_82 : f32 to vector<16x1xf32>
      %171 = arith.addf %169, %170 : vector<16x1xf32>
      %172 = math.rsqrt %171 : vector<16x1xf32>
      %173 = vector.broadcast %172 : vector<16x1xf32> to vector<16x32xf32>
      %174 = arith.mulf %164, %173 : vector<16x32xf32>
      %175 = vector.broadcast %157 : vector<1x32xf32> to vector<16x32xf32>
      %176 = arith.mulf %174, %175 : vector<16x32xf32>
      %177 = vector.broadcast %158 : vector<1x32xf32> to vector<16x32xf32>
      %178 = arith.addf %176, %177 : vector<16x32xf32>
      %c0_83 = arith.constant 0 : index
      %c0_84 = arith.constant 0 : index
      %c0_85 = arith.constant 0 : index
      %179 = vector.load %arg4[%c0_83, %c0_84, %c0_85] : memref<1x1x16xf32, #tpu.memory_space<vmem>>, vector<1x1x16xf32>
      %180 = vector.shape_cast %179 : vector<1x1x16xf32> to vector<1x16xf32>
      %cst_86 = arith.constant dense<0.000000e+00> : vector<1x32xf32>
      %181 = tpu.matmul %180, %178, %cst_86 {dimension_numbers = #tpu.dot_dimension_numbers<[1], [0], [0], [1], [0, 0, 1, 1], [], []>} : vector<1x16xf32>, vector<16x32xf32>, vector<1x32xf32> -> vector<1x32xf32>
      %182 = arith.truncf %181 : vector<1x32xf32> to vector<1x32xbf16>
      %c0_87 = arith.constant 0 : index
      %c0_88 = arith.constant 0 : index
      %183 = vector.load %arg19[%c0_87, %c0_88] : memref<32x32xbf16, #tpu.memory_space<vmem>>, vector<32x32xbf16>
      %cst_89 = arith.constant dense<0.000000e+00> : vector<1x32xf32>
      %184 = tpu.matmul %182, %183, %cst_89 {dimension_numbers = #tpu.dot_dimension_numbers<[1], [0], [0], [1], [0, 0, 1, 1], [], []>} : vector<1x32xbf16>, vector<32x32xbf16>, vector<1x32xf32> -> vector<1x32xf32>
      %c0_90 = arith.constant 0 : index
      %c0_91 = arith.constant 0 : index
      %185 = vector.load %arg20[%c0_90, %c0_91] : memref<1x32xf32, #tpu.memory_space<vmem>>, vector<1x32xf32>
      %186 = arith.addf %184, %185 : vector<1x32xf32>
      %187 = arith.mulf %186, %186 : vector<1x32xf32>
      %cst_92 = arith.constant dense<0.000000e+00> : vector<1xf32>
      %188 = vector.multi_reduction <add>, %187, %cst_92 [1] : vector<1x32xf32> to vector<1xf32>
      %189 = vector.shape_cast %188 : vector<1xf32> to vector<1x1xf32>
      %cst_93 = arith.constant 1.000000e-24 : f32
      %190 = vector.broadcast %cst_93 : f32 to vector<1x1xf32>
      %191 = arith.maximumf %189, %190 : vector<1x1xf32>
      %192 = math.rsqrt %191 : vector<1x1xf32>
      %193 = vector.broadcast %192 : vector<1x1xf32> to vector<1x32xf32>
      %194 = arith.mulf %186, %193 : vector<1x32xf32>
      %c0_94 = arith.constant 0 : index
      %c0_95 = arith.constant 0 : index
      %c0_96 = arith.constant 0 : index
      %195 = vector.load %arg21[%c0_94, %c0_95, %c0_96] : memref<1x1x32xf32, #tpu.memory_space<vmem>>, vector<1x1x32xf32>
      %196 = vector.shape_cast %195 : vector<1x1x32xf32> to vector<1x32xf32>
      %197 = vector.shape_cast %194 : vector<1x32xf32> to vector<1x1x32xf32>
      tpu.vector_store %arg21[%c0_94, %c0_95, %c0_96], %197 {strides = array<i32>} : memref<1x1x32xf32, #tpu.memory_space<vmem>>, vector<1x1x32xf32>,
    } else {
    }
    return
  }
  func.func @transform_0(%arg0: i32, %arg1: i32) -> (i32, i32, i32) {
    %c0_i32 = arith.constant 0 : i32
    %c0_i32_0 = arith.constant 0 : i32
    %c0_i32_1 = arith.constant 0 : i32
    return %arg0, %c0_i32, %c0_i32_0 : i32, i32, i32
  }
  func.func @transform_1(%arg0: i32, %arg1: i32) -> (i32, i32) {
    %c0_i32 = arith.constant 0 : i32
    %c0_i32_0 = arith.constant 0 : i32
    %c0_i32_1 = arith.constant 0 : i32
    return %c0_i32, %c0_i32_0 : i32, i32
  }
  func.func @transform_2(%arg0: i32, %arg1: i32) -> (i32, i32, i32) {
    %c0_i32 = arith.constant 0 : i32
    %c0_i32_0 = arith.constant 0 : i32
    %c0_i32_1 = arith.constant 0 : i32
    return %arg0, %c0_i32, %c0_i32_0 : i32, i32, i32
  }
  func.func @transform_3(%arg0: i32, %arg1: i32) -> (i32, i32, i32) {
    %c0_i32 = arith.constant 0 : i32
    %c0_i32_0 = arith.constant 0 : i32
    %c0_i32_1 = arith.constant 0 : i32
    return %arg1, %c0_i32, %c0_i32_0 : i32, i32, i32
  }
  func.func @transform_4(%arg0: i32, %arg1: i32) -> (i32, i32, i32) {
    %c0_i32 = arith.constant 0 : i32
    %c0_i32_0 = arith.constant 0 : i32
    %c0_i32_1 = arith.constant 0 : i32
    return %arg1, %c0_i32, %c0_i32_0 : i32, i32, i32
  }
  func.func @transform_5(%arg0: i32, %arg1: i32) -> (i32, i32, i32) {
    %c0_i32 = arith.constant 0 : i32
    %c0_i32_0 = arith.constant 0 : i32
    %c0_i32_1 = arith.constant 0 : i32
    return %arg1, %c0_i32, %c0_i32_0 : i32, i32, i32
  }
  func.func @transform_6(%arg0: i32, %arg1: i32) -> (i32, i32, i32) {
    %c0_i32 = arith.constant 0 : i32
    %c0_i32_0 = arith.constant 0 : i32
    %c0_i32_1 = arith.constant 0 : i32
    return %arg1, %c0_i32, %c0_i32_0 : i32, i32, i32
  }
  func.func @transform_7(%arg0: i32, %arg1: i32) -> (i32, i32, i32) {
    %c0_i32 = arith.constant 0 : i32
    %c0_i32_0 = arith.constant 0 : i32
    %c0_i32_1 = arith.constant 0 : i32
    return %arg1, %c0_i32, %c0_i32_0 : i32, i32, i32
  }
  func.func @transform_8(%arg0: i32, %arg1: i32) -> (i32, i32, i32) {
    %c0_i32 = arith.constant 0 : i32
    %c0_i32_0 = arith.constant 0 : i32
    %c0_i32_1 = arith.constant 0 : i32
    return %arg1, %c0_i32, %c0_i32_0 : i32, i32, i32
  }
  func.func @transform_9(%arg0: i32, %arg1: i32) -> (i32, i32, i32) {
    %c0_i32 = arith.constant 0 : i32
    %c0_i32_0 = arith.constant 0 : i32
    %c0_i32_1 = arith.constant 0 : i32
    return %arg1, %c0_i32, %c0_i32_0 : i32, i32, i32
  }
  func.func @transform_10(%arg0: i32, %arg1: i32) -> (i32, i32, i32) {
    %c0_i32 = arith.constant 0 : i32
    %c0_i32_0 = arith.constant 0 : i32
    %c0_i32_1 = arith.constant 0 : i32
    return %arg1, %c0_i32, %c0_i32_0 : i32, i32, i32
  }
  func.func @transform_11(%arg0: i32, %arg1: i32) -> (i32, i32, i32) {
    %c0_i32 = arith.constant 0 : i32
    %c0_i32_0 = arith.constant 0 : i32
    %c0_i32_1 = arith.constant 0 : i32
    return %arg1, %c0_i32, %c0_i32_0 : i32, i32, i32
  }
  func.func @transform_12(%arg0: i32, %arg1: i32) -> (i32, i32, i32) {
    %c0_i32 = arith.constant 0 : i32
    %c0_i32_0 = arith.constant 0 : i32
    %c0_i32_1 = arith.constant 0 : i32
    return %arg1, %c0_i32, %c0_i32_0 : i32, i32, i32
  }
  func.func @transform_13(%arg0: i32, %arg1: i32) -> (i32, i32, i32) {
    %c0_i32 = arith.constant 0 : i32
    %c0_i32_0 = arith.constant 0 : i32
    %c0_i32_1 = arith.constant 0 : i32
    return %arg1, %c0_i32, %c0_i32_0 : i32, i32, i32
  }
  func.func @transform_14(%arg0: i32, %arg1: i32) -> (i32, i32, i32) {
    %c0_i32 = arith.constant 0 : i32
    %c0_i32_0 = arith.constant 0 : i32
    %c0_i32_1 = arith.constant 0 : i32
    return %arg1, %c0_i32, %c0_i32_0 : i32, i32, i32
  }
  func.func @transform_15(%arg0: i32, %arg1: i32) -> (i32, i32) {
    %c0_i32 = arith.constant 0 : i32
    %c0_i32_0 = arith.constant 0 : i32
    %c0_i32_1 = arith.constant 0 : i32
    return %c0_i32, %c0_i32_0 : i32, i32
  }
  func.func @transform_16(%arg0: i32, %arg1: i32) -> (i32, i32) {
    %c0_i32 = arith.constant 0 : i32
    %c0_i32_0 = arith.constant 0 : i32
    %c0_i32_1 = arith.constant 0 : i32
    return %c0_i32, %c0_i32_0 : i32, i32
  }
  func.func @transform_17(%arg0: i32, %arg1: i32) -> (i32, i32) {
    %c0_i32 = arith.constant 0 : i32
    %c0_i32_0 = arith.constant 0 : i32
    %c0_i32_1 = arith.constant 0 : i32
    return %c0_i32, %c0_i32_0 : i32, i32
  }
  func.func @transform_18(%arg0: i32, %arg1: i32) -> (i32, i32) {
    %c0_i32 = arith.constant 0 : i32
    %c0_i32_0 = arith.constant 0 : i32
    %c0_i32_1 = arith.constant 0 : i32
    return %c0_i32, %c0_i32_0 : i32, i32
  }
  func.func @transform_19(%arg0: i32, %arg1: i32) -> (i32, i32, i32) {
    %c0_i32 = arith.constant 0 : i32
    %c0_i32_0 = arith.constant 0 : i32
    %c0_i32_1 = arith.constant 0 : i32
    return %arg0, %c0_i32, %c0_i32_0 : i32, i32, i32
  }
}

module attributes {stable_mosaic.version = 11 : i64} {
  func.func @_epilogue_kernel(%arg0: memref<1x1xf32, #tpu.memory_space<smem>>, %arg1: memref<2x32xf32, #tpu.memory_space<vmem>>, %arg2: memref<2x32xf32, #tpu.memory_space<vmem>>, %arg3: memref<32x10xbf16, #tpu.memory_space<vmem>>, %arg4: memref<1x10xf32, #tpu.memory_space<vmem>>, %arg5: memref<2x2xf32, #tpu.memory_space<vmem>>, %arg6: memref<2x10xf32, #tpu.memory_space<vmem>>) attributes {dimension_semantics = [], scalar_prefetch = 0 : i64, scratch_operands = 0 : i64, tpu.core_type = #tpu.core_type<tc>} {
    %c0 = arith.constant 0 : index
    %c0_0 = arith.constant 0 : index
    %0 = vector.load %arg1[%c0, %c0_0] : memref<2x32xf32, #tpu.memory_space<vmem>>, vector<2x32xf32>
    %c0_1 = arith.constant 0 : index
    %c0_2 = arith.constant 0 : index
    %1 = memref.load %arg0[%c0_1, %c0_2] : memref<1x1xf32, #tpu.memory_space<smem>>
    %c0_3 = arith.constant 0 : index
    %c0_4 = arith.constant 0 : index
    %2 = vector.load %arg2[%c0_3, %c0_4] : memref<2x32xf32, #tpu.memory_space<vmem>>, vector<2x32xf32>
    %cst = arith.constant dense<0.000000e+00> : vector<2x2xf32>
    %3 = tpu.matmul %0, %2, %cst {dimension_numbers = #tpu.dot_dimension_numbers<[1], [1], [0], [0], [0, 0, 1, 0], [], []>} : vector<2x32xf32>, vector<2x32xf32>, vector<2x2xf32> -> vector<2x2xf32>
    %4 = vector.broadcast %1 : f32 to vector<2x2xf32>
    %5 = arith.mulf %4, %3 : vector<2x2xf32>
    %c0_5 = arith.constant 0 : index
    %c0_6 = arith.constant 0 : index
    %6 = vector.load %arg5[%c0_5, %c0_6] : memref<2x2xf32, #tpu.memory_space<vmem>>, vector<2x2xf32>
    tpu.vector_store %arg5[%c0_5, %c0_6], %5 {strides = array<i32>} : memref<2x2xf32, #tpu.memory_space<vmem>>, vector<2x2xf32>,
    %7 = arith.truncf %0 : vector<2x32xf32> to vector<2x32xbf16>
    %c0_7 = arith.constant 0 : index
    %c0_8 = arith.constant 0 : index
    %8 = vector.load %arg3[%c0_7, %c0_8] : memref<32x10xbf16, #tpu.memory_space<vmem>>, vector<32x10xbf16>
    %cst_9 = arith.constant dense<0.000000e+00> : vector<2x10xf32>
    %9 = tpu.matmul %7, %8, %cst_9 {dimension_numbers = #tpu.dot_dimension_numbers<[1], [0], [0], [1], [0, 0, 1, 1], [], []>} : vector<2x32xbf16>, vector<32x10xbf16>, vector<2x10xf32> -> vector<2x10xf32>
    %c0_10 = arith.constant 0 : index
    %c0_11 = arith.constant 0 : index
    %10 = vector.load %arg4[%c0_10, %c0_11] : memref<1x10xf32, #tpu.memory_space<vmem>>, vector<1x10xf32>
    %11 = vector.broadcast %10 : vector<1x10xf32> to vector<2x10xf32>
    %12 = arith.addf %9, %11 : vector<2x10xf32>
    %c0_12 = arith.constant 0 : index
    %c0_13 = arith.constant 0 : index
    %13 = vector.load %arg6[%c0_12, %c0_13] : memref<2x10xf32, #tpu.memory_space<vmem>>, vector<2x10xf32>
    tpu.vector_store %arg6[%c0_12, %c0_13], %12 {strides = array<i32>} : memref<2x10xf32, #tpu.memory_space<vmem>>, vector<2x10xf32>,
    return
  }
}

module attributes {stable_mosaic.version = 11 : i64} {
  func.func @kernel(%arg0: i32, %arg1: i32, %arg2: memref<1x8x32xf32, #tpu.memory_space<vmem>>, %arg3: memref<8x8xf32, #tpu.memory_space<vmem>>, %arg4: memref<1x1x8xf32, #tpu.memory_space<vmem>>, %arg5: memref<1x1x32xf32, #tpu.memory_space<vmem>>, %arg6: memref<1x1x32xf32, #tpu.memory_space<vmem>>, %arg7: memref<1x32x96xbf16, #tpu.memory_space<vmem>>, %arg8: memref<1x1x96xf32, #tpu.memory_space<vmem>>, %arg9: memref<1x32x32xbf16, #tpu.memory_space<vmem>>, %arg10: memref<1x1x32xf32, #tpu.memory_space<vmem>>, %arg11: memref<1x1x32xf32, #tpu.memory_space<vmem>>, %arg12: memref<1x1x32xf32, #tpu.memory_space<vmem>>, %arg13: memref<1x32x128xbf16, #tpu.memory_space<vmem>>, %arg14: memref<1x1x128xf32, #tpu.memory_space<vmem>>, %arg15: memref<1x128x32xbf16, #tpu.memory_space<vmem>>, %arg16: memref<1x1x32xf32, #tpu.memory_space<vmem>>, %arg17: memref<1x32xf32, #tpu.memory_space<vmem>>, %arg18: memref<1x32xf32, #tpu.memory_space<vmem>>, %arg19: memref<32x32xbf16, #tpu.memory_space<vmem>>, %arg20: memref<1x32xf32, #tpu.memory_space<vmem>>, %arg21: memref<1x1x32xf32, #tpu.memory_space<vmem>>, %arg22: memref<8x32xf32, #tpu.memory_space<vmem>>) attributes {dimension_semantics = [#tpu.dimension_semantics<parallel>, #tpu.dimension_semantics<arbitrary>], iteration_bounds = array<i64: 2, 2>, scalar_prefetch = 0 : i64, scratch_operands = 1 : i64, tpu.core_type = #tpu.core_type<tc>, window_params = [{transform_indices = @transform_0, window_bounds = array<i64: 1, 8, 32>}, {pipeline_mode = #tpu.pipeline_mode<synchronous>, transform_indices = @transform_1, window_bounds = array<i64: 8, 8>}, {transform_indices = @transform_2, window_bounds = array<i64: 1, 1, 8>}, {transform_indices = @transform_3, window_bounds = array<i64: 1, 1, 32>}, {transform_indices = @transform_4, window_bounds = array<i64: 1, 1, 32>}, {transform_indices = @transform_5, window_bounds = array<i64: 1, 32, 96>}, {transform_indices = @transform_6, window_bounds = array<i64: 1, 1, 96>}, {transform_indices = @transform_7, window_bounds = array<i64: 1, 32, 32>}, {transform_indices = @transform_8, window_bounds = array<i64: 1, 1, 32>}, {transform_indices = @transform_9, window_bounds = array<i64: 1, 1, 32>}, {transform_indices = @transform_10, window_bounds = array<i64: 1, 1, 32>}, {transform_indices = @transform_11, window_bounds = array<i64: 1, 32, 128>}, {transform_indices = @transform_12, window_bounds = array<i64: 1, 1, 128>}, {transform_indices = @transform_13, window_bounds = array<i64: 1, 128, 32>}, {transform_indices = @transform_14, window_bounds = array<i64: 1, 1, 32>}, {pipeline_mode = #tpu.pipeline_mode<synchronous>, transform_indices = @transform_15, window_bounds = array<i64: 1, 32>}, {pipeline_mode = #tpu.pipeline_mode<synchronous>, transform_indices = @transform_16, window_bounds = array<i64: 1, 32>}, {pipeline_mode = #tpu.pipeline_mode<synchronous>, transform_indices = @transform_17, window_bounds = array<i64: 32, 32>}, {pipeline_mode = #tpu.pipeline_mode<synchronous>, transform_indices = @transform_18, window_bounds = array<i64: 1, 32>}, {transform_indices = @transform_19, window_bounds = array<i64: 1, 1, 32>}]} {
    %c0_i32 = arith.constant 0 : i32
    %0 = arith.cmpi eq, %arg1, %c0_i32 : i32
    %1 = arith.extui %0 : i1 to i32
    %c0_i32_0 = arith.constant 0 : i32
    %2 = arith.cmpi ne, %1, %c0_i32_0 : i32
    scf.if %2 {
      %c0_74 = arith.constant 0 : index
      %c0_75 = arith.constant 0 : index
      %c0_76 = arith.constant 0 : index
      %157 = vector.load %arg2[%c0_74, %c0_75, %c0_76] : memref<1x8x32xf32, #tpu.memory_space<vmem>>, vector<1x8x32xf32>
      %158 = vector.shape_cast %157 : vector<1x8x32xf32> to vector<8x32xf32>
      %c0_77 = arith.constant 0 : index
      %c0_78 = arith.constant 0 : index
      %159 = vector.load %arg22[%c0_77, %c0_78] : memref<8x32xf32, #tpu.memory_space<vmem>>, vector<8x32xf32>
      tpu.vector_store %arg22[%c0_77, %c0_78], %158 {strides = array<i32>} : memref<8x32xf32, #tpu.memory_space<vmem>>, vector<8x32xf32>,
    } else {
    }
    %c0 = arith.constant 0 : index
    %c0_1 = arith.constant 0 : index
    %3 = vector.load %arg22[%c0, %c0_1] : memref<8x32xf32, #tpu.memory_space<vmem>>, vector<8x32xf32>
    %c0_2 = arith.constant 0 : index
    %c0_3 = arith.constant 0 : index
    %4 = vector.load %arg3[%c0_2, %c0_3] : memref<8x8xf32, #tpu.memory_space<vmem>>, vector<8x8xf32>
    %c0_4 = arith.constant 0 : index
    %c0_5 = arith.constant 0 : index
    %c0_6 = arith.constant 0 : index
    %5 = vector.load %arg5[%c0_4, %c0_5, %c0_6] : memref<1x1x32xf32, #tpu.memory_space<vmem>>, vector<1x1x32xf32>
    %6 = vector.shape_cast %5 : vector<1x1x32xf32> to vector<1x32xf32>
    %c0_7 = arith.constant 0 : index
    %c0_8 = arith.constant 0 : index
    %c0_9 = arith.constant 0 : index
    %7 = vector.load %arg6[%c0_7, %c0_8, %c0_9] : memref<1x1x32xf32, #tpu.memory_space<vmem>>, vector<1x1x32xf32>
    %8 = vector.shape_cast %7 : vector<1x1x32xf32> to vector<1x32xf32>
    %cst = arith.constant dense<0.000000e+00> : vector<8xf32>
    %9 = vector.multi_reduction <add>, %3, %cst [1] : vector<8x32xf32> to vector<8xf32>
    %10 = vector.shape_cast %9 : vector<8xf32> to vector<8x1xf32>
    %cst_10 = arith.constant 3.200000e+01 : f32
    %11 = vector.broadcast %cst_10 : f32 to vector<8x1xf32>
    %12 = arith.divf %10, %11 : vector<8x1xf32>
    %13 = vector.broadcast %12 : vector<8x1xf32> to vector<8x32xf32>
    %14 = arith.subf %3, %13 : vector<8x32xf32>
    %15 = arith.mulf %14, %14 : vector<8x32xf32>
    %cst_11 = arith.constant dense<0.000000e+00> : vector<8xf32>
    %16 = vector.multi_reduction <add>, %15, %cst_11 [1] : vector<8x32xf32> to vector<8xf32>
    %17 = vector.shape_cast %16 : vector<8xf32> to vector<8x1xf32>
    %cst_12 = arith.constant 3.200000e+01 : f32
    %18 = vector.broadcast %cst_12 : f32 to vector<8x1xf32>
    %19 = arith.divf %17, %18 : vector<8x1xf32>
    %cst_13 = arith.constant 9.99999974E-6 : f32
    %20 = vector.broadcast %cst_13 : f32 to vector<8x1xf32>
    %21 = arith.addf %19, %20 : vector<8x1xf32>
    %22 = math.rsqrt %21 : vector<8x1xf32>
    %23 = vector.broadcast %22 : vector<8x1xf32> to vector<8x32xf32>
    %24 = arith.mulf %14, %23 : vector<8x32xf32>
    %25 = vector.broadcast %6 : vector<1x32xf32> to vector<8x32xf32>
    %26 = arith.mulf %24, %25 : vector<8x32xf32>
    %27 = vector.broadcast %8 : vector<1x32xf32> to vector<8x32xf32>
    %28 = arith.addf %26, %27 : vector<8x32xf32>
    %29 = arith.truncf %28 : vector<8x32xf32> to vector<8x32xbf16>
    %c0_14 = arith.constant 0 : index
    %c0_15 = arith.constant 0 : index
    %c0_16 = arith.constant 0 : index
    %30 = vector.load %arg7[%c0_14, %c0_15, %c0_16] : memref<1x32x96xbf16, #tpu.memory_space<vmem>>, vector<1x32x96xbf16>
    %31 = vector.shape_cast %30 : vector<1x32x96xbf16> to vector<32x96xbf16>
    %cst_17 = arith.constant dense<0.000000e+00> : vector<8x96xf32>
    %32 = tpu.matmul %29, %31, %cst_17 {dimension_numbers = #tpu.dot_dimension_numbers<[1], [0], [0], [1], [0, 0, 1, 1], [], []>} : vector<8x32xbf16>, vector<32x96xbf16>, vector<8x96xf32> -> vector<8x96xf32>
    %c0_18 = arith.constant 0 : index
    %c0_19 = arith.constant 0 : index
    %c0_20 = arith.constant 0 : index
    %33 = vector.load %arg8[%c0_18, %c0_19, %c0_20] : memref<1x1x96xf32, #tpu.memory_space<vmem>>, vector<1x1x96xf32>
    %34 = vector.shape_cast %33 : vector<1x1x96xf32> to vector<1x96xf32>
    %35 = vector.broadcast %34 : vector<1x96xf32> to vector<8x96xf32>
    %36 = arith.addf %32, %35 : vector<8x96xf32>
    %c0_21 = arith.constant 0 : index
    %c0_22 = arith.constant 0 : index
    %c0_23 = arith.constant 0 : index
    %37 = vector.load %arg9[%c0_21, %c0_22, %c0_23] : memref<1x32x32xbf16, #tpu.memory_space<vmem>>, vector<1x32x32xbf16>
    %38 = vector.shape_cast %37 : vector<1x32x32xbf16> to vector<32x32xbf16>
    %cst_24 = arith.constant 0.000000e+00 : f32
    %39 = vector.broadcast %cst_24 : f32 to vector<8x32xf32>
    %40 = vector.extract_strided_slice %36 {offsets = [0, 0], sizes = [8, 16], strides = [1, 1]} : vector<8x96xf32> to vector<8x16xf32>
    %41 = vector.extract_strided_slice %36 {offsets = [0, 32], sizes = [8, 16], strides = [1, 1]} : vector<8x96xf32> to vector<8x16xf32>
    %42 = vector.extract_strided_slice %36 {offsets = [0, 64], sizes = [8, 16], strides = [1, 1]} : vector<8x96xf32> to vector<8x16xf32>
    %43 = arith.truncf %40 : vector<8x16xf32> to vector<8x16xbf16>
    %44 = arith.truncf %41 : vector<8x16xf32> to vector<8x16xbf16>
    %cst_25 = arith.constant dense<0.000000e+00> : vector<8x8xf32>
    %45 = tpu.matmul %43, %44, %cst_25 {dimension_numbers = #tpu.dot_dimension_numbers<[1], [1], [0], [0], [0, 0, 1, 0], [], []>} : vector<8x16xbf16>, vector<8x16xbf16>, vector<8x8xf32> -> vector<8x8xf32>
    %cst_26 = arith.constant 2.500000e-01 : f32
    %46 = vector.broadcast %cst_26 : f32 to vector<8x8xf32>
    %47 = arith.mulf %45, %46 : vector<8x8xf32>
    %48 = arith.addf %47, %4 : vector<8x8xf32>
    %cst_27 = arith.constant dense<0xFF800000> : vector<8xf32>
    %49 = vector.multi_reduction <maximumf>, %48, %cst_27 [1] : vector<8x8xf32> to vector<8xf32>
    %cst_28 = arith.constant 0xFF800000 : f32
    %50 = vector.broadcast %cst_28 : f32 to vector<8xf32>
    %51 = arith.maximumf %50, %49 : vector<8xf32>
    %52 = vector.shape_cast %51 : vector<8xf32> to vector<8x1xf32>
    %53 = vector.broadcast %52 : vector<8x1xf32> to vector<8x8xf32>
    %54 = arith.subf %48, %53 : vector<8x8xf32>
    %55 = math.exp %54 : vector<8x8xf32>
    %cst_29 = arith.constant dense<0.000000e+00> : vector<8xf32>
    %56 = vector.multi_reduction <add>, %55, %cst_29 [1] : vector<8x8xf32> to vector<8xf32>
    %57 = vector.shape_cast %56 : vector<8xf32> to vector<8x1xf32>
    %58 = vector.broadcast %57 : vector<8x1xf32> to vector<8x8xf32>
    %59 = arith.divf %55, %58 : vector<8x8xf32>
    %60 = arith.truncf %59 : vector<8x8xf32> to vector<8x8xbf16>
    %61 = arith.truncf %42 : vector<8x16xf32> to vector<8x16xbf16>
    %cst_30 = arith.constant dense<0.000000e+00> : vector<8x16xf32>
    %62 = tpu.matmul %60, %61, %cst_30 {dimension_numbers = #tpu.dot_dimension_numbers<[1], [0], [0], [1], [0, 0, 1, 1], [], []>} : vector<8x8xbf16>, vector<8x16xbf16>, vector<8x16xf32> -> vector<8x16xf32>
    %63 = arith.truncf %62 : vector<8x16xf32> to vector<8x16xbf16>
    %64 = vector.extract_strided_slice %38 {offsets = [0, 0], sizes = [16, 32], strides = [1, 1]} : vector<32x32xbf16> to vector<16x32xbf16>
    %cst_31 = arith.constant dense<0.000000e+00> : vector<8x32xf32>
    %65 = tpu.matmul %63, %64, %cst_31 {dimension_numbers = #tpu.dot_dimension_numbers<[1], [0], [0], [1], [0, 0, 1, 1], [], []>} : vector<8x16xbf16>, vector<16x32xbf16>, vector<8x32xf32> -> vector<8x32xf32>
    %66 = arith.addf %39, %65 : vector<8x32xf32>
    %67 = vector.extract_strided_slice %36 {offsets = [0, 16], sizes = [8, 16], strides = [1, 1]} : vector<8x96xf32> to vector<8x16xf32>
    %68 = vector.extract_strided_slice %36 {offsets = [0, 48], sizes = [8, 16], strides = [1, 1]} : vector<8x96xf32> to vector<8x16xf32>
    %69 = vector.extract_strided_slice %36 {offsets = [0, 80], sizes = [8, 16], strides = [1, 1]} : vector<8x96xf32> to vector<8x16xf32>
    %70 = arith.truncf %67 : vector<8x16xf32> to vector<8x16xbf16>
    %71 = arith.truncf %68 : vector<8x16xf32> to vector<8x16xbf16>
    %cst_32 = arith.constant dense<0.000000e+00> : vector<8x8xf32>
    %72 = tpu.matmul %70, %71, %cst_32 {dimension_numbers = #tpu.dot_dimension_numbers<[1], [1], [0], [0], [0, 0, 1, 0], [], []>} : vector<8x16xbf16>, vector<8x16xbf16>, vector<8x8xf32> -> vector<8x8xf32>
    %cst_33 = arith.constant 2.500000e-01 : f32
    %73 = vector.broadcast %cst_33 : f32 to vector<8x8xf32>
    %74 = arith.mulf %72, %73 : vector<8x8xf32>
    %75 = arith.addf %74, %4 : vector<8x8xf32>
    %cst_34 = arith.constant dense<0xFF800000> : vector<8xf32>
    %76 = vector.multi_reduction <maximumf>, %75, %cst_34 [1] : vector<8x8xf32> to vector<8xf32>
    %cst_35 = arith.constant 0xFF800000 : f32
    %77 = vector.broadcast %cst_35 : f32 to vector<8xf32>
    %78 = arith.maximumf %77, %76 : vector<8xf32>
    %79 = vector.shape_cast %78 : vector<8xf32> to vector<8x1xf32>
    %80 = vector.broadcast %79 : vector<8x1xf32> to vector<8x8xf32>
    %81 = arith.subf %75, %80 : vector<8x8xf32>
    %82 = math.exp %81 : vector<8x8xf32>
    %cst_36 = arith.constant dense<0.000000e+00> : vector<8xf32>
    %83 = vector.multi_reduction <add>, %82, %cst_36 [1] : vector<8x8xf32> to vector<8xf32>
    %84 = vector.shape_cast %83 : vector<8xf32> to vector<8x1xf32>
    %85 = vector.broadcast %84 : vector<8x1xf32> to vector<8x8xf32>
    %86 = arith.divf %82, %85 : vector<8x8xf32>
    %87 = arith.truncf %86 : vector<8x8xf32> to vector<8x8xbf16>
    %88 = arith.truncf %69 : vector<8x16xf32> to vector<8x16xbf16>
    %cst_37 = arith.constant dense<0.000000e+00> : vector<8x16xf32>
    %89 = tpu.matmul %87, %88, %cst_37 {dimension_numbers = #tpu.dot_dimension_numbers<[1], [0], [0], [1], [0, 0, 1, 1], [], []>} : vector<8x8xbf16>, vector<8x16xbf16>, vector<8x16xf32> -> vector<8x16xf32>
    %90 = arith.truncf %89 : vector<8x16xf32> to vector<8x16xbf16>
    %91 = vector.extract_strided_slice %38 {offsets = [16, 0], sizes = [16, 32], strides = [1, 1]} : vector<32x32xbf16> to vector<16x32xbf16>
    %cst_38 = arith.constant dense<0.000000e+00> : vector<8x32xf32>
    %92 = tpu.matmul %90, %91, %cst_38 {dimension_numbers = #tpu.dot_dimension_numbers<[1], [0], [0], [1], [0, 0, 1, 1], [], []>} : vector<8x16xbf16>, vector<16x32xbf16>, vector<8x32xf32> -> vector<8x32xf32>
    %93 = arith.addf %66, %92 : vector<8x32xf32>
    %94 = arith.addf %3, %93 : vector<8x32xf32>
    %c0_39 = arith.constant 0 : index
    %c0_40 = arith.constant 0 : index
    %c0_41 = arith.constant 0 : index
    %95 = vector.load %arg10[%c0_39, %c0_40, %c0_41] : memref<1x1x32xf32, #tpu.memory_space<vmem>>, vector<1x1x32xf32>
    %96 = vector.shape_cast %95 : vector<1x1x32xf32> to vector<1x32xf32>
    %97 = vector.broadcast %96 : vector<1x32xf32> to vector<8x32xf32>
    %98 = arith.addf %94, %97 : vector<8x32xf32>
    %c0_42 = arith.constant 0 : index
    %c0_43 = arith.constant 0 : index
    %c0_44 = arith.constant 0 : index
    %99 = vector.load %arg11[%c0_42, %c0_43, %c0_44] : memref<1x1x32xf32, #tpu.memory_space<vmem>>, vector<1x1x32xf32>
    %100 = vector.shape_cast %99 : vector<1x1x32xf32> to vector<1x32xf32>
    %c0_45 = arith.constant 0 : index
    %c0_46 = arith.constant 0 : index
    %c0_47 = arith.constant 0 : index
    %101 = vector.load %arg12[%c0_45, %c0_46, %c0_47] : memref<1x1x32xf32, #tpu.memory_space<vmem>>, vector<1x1x32xf32>
    %102 = vector.shape_cast %101 : vector<1x1x32xf32> to vector<1x32xf32>
    %cst_48 = arith.constant dense<0.000000e+00> : vector<8xf32>
    %103 = vector.multi_reduction <add>, %98, %cst_48 [1] : vector<8x32xf32> to vector<8xf32>
    %104 = vector.shape_cast %103 : vector<8xf32> to vector<8x1xf32>
    %cst_49 = arith.constant 3.200000e+01 : f32
    %105 = vector.broadcast %cst_49 : f32 to vector<8x1xf32>
    %106 = arith.divf %104, %105 : vector<8x1xf32>
    %107 = vector.broadcast %106 : vector<8x1xf32> to vector<8x32xf32>
    %108 = arith.subf %98, %107 : vector<8x32xf32>
    %109 = arith.mulf %108, %108 : vector<8x32xf32>
    %cst_50 = arith.constant dense<0.000000e+00> : vector<8xf32>
    %110 = vector.multi_reduction <add>, %109, %cst_50 [1] : vector<8x32xf32> to vector<8xf32>
    %111 = vector.shape_cast %110 : vector<8xf32> to vector<8x1xf32>
    %cst_51 = arith.constant 3.200000e+01 : f32
    %112 = vector.broadcast %cst_51 : f32 to vector<8x1xf32>
    %113 = arith.divf %111, %112 : vector<8x1xf32>
    %cst_52 = arith.constant 9.99999974E-6 : f32
    %114 = vector.broadcast %cst_52 : f32 to vector<8x1xf32>
    %115 = arith.addf %113, %114 : vector<8x1xf32>
    %116 = math.rsqrt %115 : vector<8x1xf32>
    %117 = vector.broadcast %116 : vector<8x1xf32> to vector<8x32xf32>
    %118 = arith.mulf %108, %117 : vector<8x32xf32>
    %119 = vector.broadcast %100 : vector<1x32xf32> to vector<8x32xf32>
    %120 = arith.mulf %118, %119 : vector<8x32xf32>
    %121 = vector.broadcast %102 : vector<1x32xf32> to vector<8x32xf32>
    %122 = arith.addf %120, %121 : vector<8x32xf32>
    %123 = arith.truncf %122 : vector<8x32xf32> to vector<8x32xbf16>
    %c0_53 = arith.constant 0 : index
    %c0_54 = arith.constant 0 : index
    %c0_55 = arith.constant 0 : index
    %124 = vector.load %arg13[%c0_53, %c0_54, %c0_55] : memref<1x32x128xbf16, #tpu.memory_space<vmem>>, vector<1x32x128xbf16>
    %125 = vector.shape_cast %124 : vector<1x32x128xbf16> to vector<32x128xbf16>
    %cst_56 = arith.constant dense<0.000000e+00> : vector<8x128xf32>
    %126 = tpu.matmul %123, %125, %cst_56 {dimension_numbers = #tpu.dot_dimension_numbers<[1], [0], [0], [1], [0, 0, 1, 1], [], []>} : vector<8x32xbf16>, vector<32x128xbf16>, vector<8x128xf32> -> vector<8x128xf32>
    %c0_57 = arith.constant 0 : index
    %c0_58 = arith.constant 0 : index
    %c0_59 = arith.constant 0 : index
    %127 = vector.load %arg14[%c0_57, %c0_58, %c0_59] : memref<1x1x128xf32, #tpu.memory_space<vmem>>, vector<1x1x128xf32>
    %128 = vector.shape_cast %127 : vector<1x1x128xf32> to vector<1x128xf32>
    %129 = vector.broadcast %128 : vector<1x128xf32> to vector<8x128xf32>
    %130 = arith.addf %126, %129 : vector<8x128xf32>
    %131 = arith.mulf %130, %130 : vector<8x128xf32>
    %132 = arith.mulf %130, %131 : vector<8x128xf32>
    %cst_60 = arith.constant 4.471500e-02 : f32
    %133 = vector.broadcast %cst_60 : f32 to vector<8x128xf32>
    %134 = arith.mulf %133, %132 : vector<8x128xf32>
    %135 = arith.addf %130, %134 : vector<8x128xf32>
    %cst_61 = arith.constant 0.797884583 : f32
    %136 = vector.broadcast %cst_61 : f32 to vector<8x128xf32>
    %137 = arith.mulf %136, %135 : vector<8x128xf32>
    %138 = math.tanh %137 : vector<8x128xf32>
    %cst_62 = arith.constant 1.000000e+00 : f32
    %139 = vector.broadcast %cst_62 : f32 to vector<8x128xf32>
    %140 = arith.addf %139, %138 : vector<8x128xf32>
    %cst_63 = arith.constant 5.000000e-01 : f32
    %141 = vector.broadcast %cst_63 : f32 to vector<8x128xf32>
    %142 = arith.mulf %141, %140 : vector<8x128xf32>
    %143 = arith.mulf %130, %142 : vector<8x128xf32>
    %144 = arith.truncf %143 : vector<8x128xf32> to vector<8x128xbf16>
    %c0_64 = arith.constant 0 : index
    %c0_65 = arith.constant 0 : index
    %c0_66 = arith.constant 0 : index
    %145 = vector.load %arg15[%c0_64, %c0_65, %c0_66] : memref<1x128x32xbf16, #tpu.memory_space<vmem>>, vector<1x128x32xbf16>
    %146 = vector.shape_cast %145 : vector<1x128x32xbf16> to vector<128x32xbf16>
    %cst_67 = arith.constant dense<0.000000e+00> : vector<8x32xf32>
    %147 = tpu.matmul %144, %146, %cst_67 {dimension_numbers = #tpu.dot_dimension_numbers<[1], [0], [0], [1], [0, 0, 1, 1], [], []>} : vector<8x128xbf16>, vector<128x32xbf16>, vector<8x32xf32> -> vector<8x32xf32>
    %c0_68 = arith.constant 0 : index
    %c0_69 = arith.constant 0 : index
    %c0_70 = arith.constant 0 : index
    %148 = vector.load %arg16[%c0_68, %c0_69, %c0_70] : memref<1x1x32xf32, #tpu.memory_space<vmem>>, vector<1x1x32xf32>
    %149 = vector.shape_cast %148 : vector<1x1x32xf32> to vector<1x32xf32>
    %150 = vector.broadcast %149 : vector<1x32xf32> to vector<8x32xf32>
    %151 = arith.addf %147, %150 : vector<8x32xf32>
    %152 = arith.addf %98, %151 : vector<8x32xf32>
    %c0_71 = arith.constant 0 : index
    %c0_72 = arith.constant 0 : index
    %153 = vector.load %arg22[%c0_71, %c0_72] : memref<8x32xf32, #tpu.memory_space<vmem>>, vector<8x32xf32>
    tpu.vector_store %arg22[%c0_71, %c0_72], %152 {strides = array<i32>} : memref<8x32xf32, #tpu.memory_space<vmem>>, vector<8x32xf32>,
    %c1_i32 = arith.constant 1 : i32
    %154 = arith.cmpi eq, %arg1, %c1_i32 : i32
    %155 = arith.extui %154 : i1 to i32
    %c0_i32_73 = arith.constant 0 : i32
    %156 = arith.cmpi ne, %155, %c0_i32_73 : i32
    scf.if %156 {
      %c0_74 = arith.constant 0 : index
      %c0_75 = arith.constant 0 : index
      %157 = vector.load %arg17[%c0_74, %c0_75] : memref<1x32xf32, #tpu.memory_space<vmem>>, vector<1x32xf32>
      %c0_76 = arith.constant 0 : index
      %c0_77 = arith.constant 0 : index
      %158 = vector.load %arg18[%c0_76, %c0_77] : memref<1x32xf32, #tpu.memory_space<vmem>>, vector<1x32xf32>
      %cst_78 = arith.constant dense<0.000000e+00> : vector<8xf32>
      %159 = vector.multi_reduction <add>, %152, %cst_78 [1] : vector<8x32xf32> to vector<8xf32>
      %160 = vector.shape_cast %159 : vector<8xf32> to vector<8x1xf32>
      %cst_79 = arith.constant 3.200000e+01 : f32
      %161 = vector.broadcast %cst_79 : f32 to vector<8x1xf32>
      %162 = arith.divf %160, %161 : vector<8x1xf32>
      %163 = vector.broadcast %162 : vector<8x1xf32> to vector<8x32xf32>
      %164 = arith.subf %152, %163 : vector<8x32xf32>
      %165 = arith.mulf %164, %164 : vector<8x32xf32>
      %cst_80 = arith.constant dense<0.000000e+00> : vector<8xf32>
      %166 = vector.multi_reduction <add>, %165, %cst_80 [1] : vector<8x32xf32> to vector<8xf32>
      %167 = vector.shape_cast %166 : vector<8xf32> to vector<8x1xf32>
      %cst_81 = arith.constant 3.200000e+01 : f32
      %168 = vector.broadcast %cst_81 : f32 to vector<8x1xf32>
      %169 = arith.divf %167, %168 : vector<8x1xf32>
      %cst_82 = arith.constant 9.99999974E-6 : f32
      %170 = vector.broadcast %cst_82 : f32 to vector<8x1xf32>
      %171 = arith.addf %169, %170 : vector<8x1xf32>
      %172 = math.rsqrt %171 : vector<8x1xf32>
      %173 = vector.broadcast %172 : vector<8x1xf32> to vector<8x32xf32>
      %174 = arith.mulf %164, %173 : vector<8x32xf32>
      %175 = vector.broadcast %157 : vector<1x32xf32> to vector<8x32xf32>
      %176 = arith.mulf %174, %175 : vector<8x32xf32>
      %177 = vector.broadcast %158 : vector<1x32xf32> to vector<8x32xf32>
      %178 = arith.addf %176, %177 : vector<8x32xf32>
      %c0_83 = arith.constant 0 : index
      %c0_84 = arith.constant 0 : index
      %c0_85 = arith.constant 0 : index
      %179 = vector.load %arg4[%c0_83, %c0_84, %c0_85] : memref<1x1x8xf32, #tpu.memory_space<vmem>>, vector<1x1x8xf32>
      %180 = vector.shape_cast %179 : vector<1x1x8xf32> to vector<1x8xf32>
      %cst_86 = arith.constant dense<0.000000e+00> : vector<1x32xf32>
      %181 = tpu.matmul %180, %178, %cst_86 {dimension_numbers = #tpu.dot_dimension_numbers<[1], [0], [0], [1], [0, 0, 1, 1], [], []>} : vector<1x8xf32>, vector<8x32xf32>, vector<1x32xf32> -> vector<1x32xf32>
      %182 = arith.truncf %181 : vector<1x32xf32> to vector<1x32xbf16>
      %c0_87 = arith.constant 0 : index
      %c0_88 = arith.constant 0 : index
      %183 = vector.load %arg19[%c0_87, %c0_88] : memref<32x32xbf16, #tpu.memory_space<vmem>>, vector<32x32xbf16>
      %cst_89 = arith.constant dense<0.000000e+00> : vector<1x32xf32>
      %184 = tpu.matmul %182, %183, %cst_89 {dimension_numbers = #tpu.dot_dimension_numbers<[1], [0], [0], [1], [0, 0, 1, 1], [], []>} : vector<1x32xbf16>, vector<32x32xbf16>, vector<1x32xf32> -> vector<1x32xf32>
      %c0_90 = arith.constant 0 : index
      %c0_91 = arith.constant 0 : index
      %185 = vector.load %arg20[%c0_90, %c0_91] : memref<1x32xf32, #tpu.memory_space<vmem>>, vector<1x32xf32>
      %186 = arith.addf %184, %185 : vector<1x32xf32>
      %187 = arith.mulf %186, %186 : vector<1x32xf32>
      %cst_92 = arith.constant dense<0.000000e+00> : vector<1xf32>
      %188 = vector.multi_reduction <add>, %187, %cst_92 [1] : vector<1x32xf32> to vector<1xf32>
      %189 = vector.shape_cast %188 : vector<1xf32> to vector<1x1xf32>
      %cst_93 = arith.constant 1.000000e-24 : f32
      %190 = vector.broadcast %cst_93 : f32 to vector<1x1xf32>
      %191 = arith.maximumf %189, %190 : vector<1x1xf32>
      %192 = math.rsqrt %191 : vector<1x1xf32>
      %193 = vector.broadcast %192 : vector<1x1xf32> to vector<1x32xf32>
      %194 = arith.mulf %186, %193 : vector<1x32xf32>
      %c0_94 = arith.constant 0 : index
      %c0_95 = arith.constant 0 : index
      %c0_96 = arith.constant 0 : index
      %195 = vector.load %arg21[%c0_94, %c0_95, %c0_96] : memref<1x1x32xf32, #tpu.memory_space<vmem>>, vector<1x1x32xf32>
      %196 = vector.shape_cast %195 : vector<1x1x32xf32> to vector<1x32xf32>
      %197 = vector.shape_cast %194 : vector<1x32xf32> to vector<1x1x32xf32>
      tpu.vector_store %arg21[%c0_94, %c0_95, %c0_96], %197 {strides = array<i32>} : memref<1x1x32xf32, #tpu.memory_space<vmem>>, vector<1x1x32xf32>,
    } else {
    }
    return
  }
  func.func @transform_0(%arg0: i32, %arg1: i32) -> (i32, i32, i32) {
    %c0_i32 = arith.constant 0 : i32
    %c0_i32_0 = arith.constant 0 : i32
    %c0_i32_1 = arith.constant 0 : i32
    return %arg0, %c0_i32, %c0_i32_0 : i32, i32, i32
  }
  func.func @transform_1(%arg0: i32, %arg1: i32) -> (i32, i32) {
    %c0_i32 = arith.constant 0 : i32
    %c0_i32_0 = arith.constant 0 : i32
    %c0_i32_1 = arith.constant 0 : i32
    return %c0_i32, %c0_i32_0 : i32, i32
  }
  func.func @transform_2(%arg0: i32, %arg1: i32) -> (i32, i32, i32) {
    %c0_i32 = arith.constant 0 : i32
    %c0_i32_0 = arith.constant 0 : i32
    %c0_i32_1 = arith.constant 0 : i32
    return %arg0, %c0_i32, %c0_i32_0 : i32, i32, i32
  }
  func.func @transform_3(%arg0: i32, %arg1: i32) -> (i32, i32, i32) {
    %c0_i32 = arith.constant 0 : i32
    %c0_i32_0 = arith.constant 0 : i32
    %c0_i32_1 = arith.constant 0 : i32
    return %arg1, %c0_i32, %c0_i32_0 : i32, i32, i32
  }
  func.func @transform_4(%arg0: i32, %arg1: i32) -> (i32, i32, i32) {
    %c0_i32 = arith.constant 0 : i32
    %c0_i32_0 = arith.constant 0 : i32
    %c0_i32_1 = arith.constant 0 : i32
    return %arg1, %c0_i32, %c0_i32_0 : i32, i32, i32
  }
  func.func @transform_5(%arg0: i32, %arg1: i32) -> (i32, i32, i32) {
    %c0_i32 = arith.constant 0 : i32
    %c0_i32_0 = arith.constant 0 : i32
    %c0_i32_1 = arith.constant 0 : i32
    return %arg1, %c0_i32, %c0_i32_0 : i32, i32, i32
  }
  func.func @transform_6(%arg0: i32, %arg1: i32) -> (i32, i32, i32) {
    %c0_i32 = arith.constant 0 : i32
    %c0_i32_0 = arith.constant 0 : i32
    %c0_i32_1 = arith.constant 0 : i32
    return %arg1, %c0_i32, %c0_i32_0 : i32, i32, i32
  }
  func.func @transform_7(%arg0: i32, %arg1: i32) -> (i32, i32, i32) {
    %c0_i32 = arith.constant 0 : i32
    %c0_i32_0 = arith.constant 0 : i32
    %c0_i32_1 = arith.constant 0 : i32
    return %arg1, %c0_i32, %c0_i32_0 : i32, i32, i32
  }
  func.func @transform_8(%arg0: i32, %arg1: i32) -> (i32, i32, i32) {
    %c0_i32 = arith.constant 0 : i32
    %c0_i32_0 = arith.constant 0 : i32
    %c0_i32_1 = arith.constant 0 : i32
    return %arg1, %c0_i32, %c0_i32_0 : i32, i32, i32
  }
  func.func @transform_9(%arg0: i32, %arg1: i32) -> (i32, i32, i32) {
    %c0_i32 = arith.constant 0 : i32
    %c0_i32_0 = arith.constant 0 : i32
    %c0_i32_1 = arith.constant 0 : i32
    return %arg1, %c0_i32, %c0_i32_0 : i32, i32, i32
  }
  func.func @transform_10(%arg0: i32, %arg1: i32) -> (i32, i32, i32) {
    %c0_i32 = arith.constant 0 : i32
    %c0_i32_0 = arith.constant 0 : i32
    %c0_i32_1 = arith.constant 0 : i32
    return %arg1, %c0_i32, %c0_i32_0 : i32, i32, i32
  }
  func.func @transform_11(%arg0: i32, %arg1: i32) -> (i32, i32, i32) {
    %c0_i32 = arith.constant 0 : i32
    %c0_i32_0 = arith.constant 0 : i32
    %c0_i32_1 = arith.constant 0 : i32
    return %arg1, %c0_i32, %c0_i32_0 : i32, i32, i32
  }
  func.func @transform_12(%arg0: i32, %arg1: i32) -> (i32, i32, i32) {
    %c0_i32 = arith.constant 0 : i32
    %c0_i32_0 = arith.constant 0 : i32
    %c0_i32_1 = arith.constant 0 : i32
    return %arg1, %c0_i32, %c0_i32_0 : i32, i32, i32
  }
  func.func @transform_13(%arg0: i32, %arg1: i32) -> (i32, i32, i32) {
    %c0_i32 = arith.constant 0 : i32
    %c0_i32_0 = arith.constant 0 : i32
    %c0_i32_1 = arith.constant 0 : i32
    return %arg1, %c0_i32, %c0_i32_0 : i32, i32, i32
  }
  func.func @transform_14(%arg0: i32, %arg1: i32) -> (i32, i32, i32) {
    %c0_i32 = arith.constant 0 : i32
    %c0_i32_0 = arith.constant 0 : i32
    %c0_i32_1 = arith.constant 0 : i32
    return %arg1, %c0_i32, %c0_i32_0 : i32, i32, i32
  }
  func.func @transform_15(%arg0: i32, %arg1: i32) -> (i32, i32) {
    %c0_i32 = arith.constant 0 : i32
    %c0_i32_0 = arith.constant 0 : i32
    %c0_i32_1 = arith.constant 0 : i32
    return %c0_i32, %c0_i32_0 : i32, i32
  }
  func.func @transform_16(%arg0: i32, %arg1: i32) -> (i32, i32) {
    %c0_i32 = arith.constant 0 : i32
    %c0_i32_0 = arith.constant 0 : i32
    %c0_i32_1 = arith.constant 0 : i32
    return %c0_i32, %c0_i32_0 : i32, i32
  }
  func.func @transform_17(%arg0: i32, %arg1: i32) -> (i32, i32) {
    %c0_i32 = arith.constant 0 : i32
    %c0_i32_0 = arith.constant 0 : i32
    %c0_i32_1 = arith.constant 0 : i32
    return %c0_i32, %c0_i32_0 : i32, i32
  }
  func.func @transform_18(%arg0: i32, %arg1: i32) -> (i32, i32) {
    %c0_i32 = arith.constant 0 : i32
    %c0_i32_0 = arith.constant 0 : i32
    %c0_i32_1 = arith.constant 0 : i32
    return %c0_i32, %c0_i32_0 : i32, i32
  }
  func.func @transform_19(%arg0: i32, %arg1: i32) -> (i32, i32, i32) {
    %c0_i32 = arith.constant 0 : i32
    %c0_i32_0 = arith.constant 0 : i32
    %c0_i32_1 = arith.constant 0 : i32
    return %arg0, %c0_i32, %c0_i32_0 : i32, i32, i32
  }
}

</mosaic_0001>

<llo_original>
// kernel: clipmvit_forward.4
$region0: #{clipmvit_forward.4}
  #allocation0 [shape = 'u32[]', space=smem, size = 0x4, offset = 0x4, fixed_abs, tag = 'smem constant byte address 0x4 - core index']
  #allocation1 [shape = 'u32[72,128]{1,0:T(1,128)}', space=vmem, size = 0x9000, scoped, tag = 'internal scratch']
  %s0 = inlined_call_operand.vmem [shape: f32[16,384], index: 0, kind: input, shape index: {}]
  %s1 = inlined_call_operand.vmem [shape: bf16[384,32], index: 1, kind: input, shape index: {}]
  %s2 = inlined_call_operand.vmem [shape: f32[1,32], index: 2, kind: input, shape index: {}]
  %s3 = inlined_call_operand.vmem [shape: f32[16,32], index: 3, kind: output, shape index: {}]
  %s4 = sld [smem:[#allocation0]]
  $region22: #{clipmvit_forward.4} parent=0
    _
  %s6 = ssub.s32 1, %s4
  %s7 = scalar_select 0, %s6, %s4
  // Predicated region
  $region2: #{clipmvit_forward.4} parent=0 // pred_check
    _
  $region3: #{clipmvit_forward.4} parent=0 // pred_check_branch
    %9 = sbr.rel (0) target = $region5
  $region4: #{clipmvit_forward.4} parent=0 // pred_region
    _
  $region5: #{clipmvit_forward.4} parent=0 // pred_fallthru
    _
  // Predicated region
  $region6: #{clipmvit_forward.4} parent=0 // pred_check
    _
  $region7: #{clipmvit_forward.4} parent=0 // pred_check_branch
    %11 = sbr.rel (0) target = $region9
  $region8: #{clipmvit_forward.4} parent=0 // pred_region
    _
  $region9: #{clipmvit_forward.4} parent=0 // pred_fallthru
    _
  // Predicated region
  $region10: #{clipmvit_forward.4} parent=0 // pred_check
    _
  $region11: #{clipmvit_forward.4} parent=0 // pred_check_branch
    %13 = sbr.rel (0) target = $region13
  $region12: #{clipmvit_forward.4} parent=0 // pred_region
    _
  $region13: #{clipmvit_forward.4} parent=0 // pred_fallthru
    _
  %v14 = vld [vmem:[%s0] sm:$0xff]
  %v15 = vld [vmem:[%s0 + $0x8] sm:$0xff]
  %v16 = vld [vmem:[%s0 + $0x10] sm:$0xff]
  %v17 = vld [vmem:[%s0 + $0x18] sm:$0xff]
  %v18 = vld [vmem:[%s0 + $0x20] sm:$0xff]
  %v19 = vld [vmem:[%s0 + $0x28] sm:$0xff]
  %v20 = vpack.c.bf16 %v17, %v14
  %v21 = vpack.c.bf16 %v18, %v15
  %v22 = vpack.c.bf16 %v19, %v16
  %v23 = vld [vmem:[%s1] sm:$0xf]
  %v24 = vld [vmem:[%s1 + $0x4] sm:$0xf]
  %v25 = vld [vmem:[%s1 + $0x8] sm:$0xf]
  %v26 = vld [vmem:[%s1 + $0xc] sm:$0xf]
  %v27 = vld [vmem:[%s1 + $0x10] sm:$0xf]
  %v28 = vld [vmem:[%s1 + $0x14] sm:$0xf]
  %v29 = vld [vmem:[%s1 + $0x18] sm:$0xf]
  %v30 = vld [vmem:[%s1 + $0x1c] sm:$0xf]
  %v31 = vld [vmem:[%s1 + $0x20] sm:$0xf]
  %v32 = vld [vmem:[%s1 + $0x24] sm:$0xf]
  %v33 = vld [vmem:[%s1 + $0x28] sm:$0xf]
  %v34 = vld [vmem:[%s1 + $0x2c] sm:$0xf]
  %v35 = vld [vmem:[%s1 + $0x30] sm:$0xf]
  %v36 = vld [vmem:[%s1 + $0x34] sm:$0xf]
  %v37 = vld [vmem:[%s1 + $0x38] sm:$0xf]
  %v38 = vld [vmem:[%s1 + $0x3c] sm:$0xf]
  %v39 = vld [vmem:[%s1 + $0x40] sm:$0xf]
  %v40 = vld [vmem:[%s1 + $0x44] sm:$0xf]
  %v41 = vld [vmem:[%s1 + $0x48] sm:$0xf]
  %v42 = vld [vmem:[%s1 + $0x4c] sm:$0xf]
  %v43 = vld [vmem:[%s1 + $0x50] sm:$0xf]
  %v44 = vld [vmem:[%s1 + $0x54] sm:$0xf]
  %v45 = vld [vmem:[%s1 + $0x58] sm:$0xf]
  %v46 = vld [vmem:[%s1 + $0x5c] sm:$0xf]
  %v47 = vld [vmem:[%s1 + $0x60] sm:$0xf]
  %v48 = vld [vmem:[%s1 + $0x64] sm:$0xf]
  %v49 = vld [vmem:[%s1 + $0x68] sm:$0xf]
  %v50 = vld [vmem:[%s1 + $0x6c] sm:$0xf]
  %v51 = vld [vmem:[%s1 + $0x70] sm:$0xf]
  %v52 = vld [vmem:[%s1 + $0x74] sm:$0xf]
  %v53 = vld [vmem:[%s1 + $0x78] sm:$0xf]
  %v54 = vld [vmem:[%s1 + $0x7c] sm:$0xf]
  %v55 = vld [vmem:[%s1 + $0x80] sm:$0xf]
  %v56 = vld [vmem:[%s1 + $0x84] sm:$0xf]
  %v57 = vld [vmem:[%s1 + $0x88] sm:$0xf]
  %v58 = vld [vmem:[%s1 + $0x8c] sm:$0xf]
  %v59 = vld [vmem:[%s1 + $0x90] sm:$0xf]
  %v60 = vld [vmem:[%s1 + $0x94] sm:$0xf]
  %v61 = vld [vmem:[%s1 + $0x98] sm:$0xf]
  %v62 = vld [vmem:[%s1 + $0x9c] sm:$0xf]
  %v63 = vld [vmem:[%s1 + $0xa0] sm:$0xf]
  %v64 = vld [vmem:[%s1 + $0xa4] sm:$0xf]
  %v65 = vld [vmem:[%s1 + $0xa8] sm:$0xf]
  %v66 = vld [vmem:[%s1 + $0xac] sm:$0xf]
  %v67 = vld [vmem:[%s1 + $0xb0] sm:$0xf]
  %v68 = vld [vmem:[%s1 + $0xb4] sm:$0xf]
  %v69 = vld [vmem:[%s1 + $0xb8] sm:$0xf]
  %v70 = vld [vmem:[%s1 + $0xbc] sm:$0xf]
  %v71 = vld [vmem:[%s2] sm:$0x1]
  %v73 = vperm.slane %v71, 0
  %v123 = vunpack.c.l.b16 %v23
  %v124 = vunpack.c.l.b16 %v24
  %v125 = vunpack.c.l.b16 %v25
  %v126 = vunpack.c.l.b16 %v26
  %v127 = vunpack.c.l.b16 %v27
  %v128 = vunpack.c.l.b16 %v28
  %v129 = vunpack.c.l.b16 %v29
  %v130 = vunpack.c.l.b16 %v30
  %v131 = vunpack.c.l.b16 %v31
  %v132 = vunpack.c.l.b16 %v32
  %v133 = vunpack.c.l.b16 %v33
  %v134 = vunpack.c.l.b16 %v34
  %v135 = vunpack.c.l.b16 %v35
  %v136 = vunpack.c.l.b16 %v36
  %v137 = vunpack.c.l.b16 %v37
  %v138 = vunpack.c.l.b16 %v38
  %v139 = vunpack.c.l.b16 %v39
  %v140 = vunpack.c.l.b16 %v40
  %v141 = vunpack.c.l.b16 %v41
  %v142 = vunpack.c.l.b16 %v42
  %v143 = vunpack.c.l.b16 %v43
  %v144 = vunpack.c.l.b16 %v44
  %v145 = vunpack.c.l.b16 %v45
  %v146 = vunpack.c.l.b16 %v46
  %v147 = vunpack.c.l.b16 %v47
  %v148 = vunpack.c.l.b16 %v48
  %v149 = vunpack.c.l.b16 %v49
  %v150 = vunpack.c.l.b16 %v50
  %v151 = vunpack.c.l.b16 %v51
  %v152 = vunpack.c.l.b16 %v52
  %v153 = vunpack.c.l.b16 %v53
  %v154 = vunpack.c.l.b16 %v54
  %v155 = vunpack.c.l.b16 %v55
  %v156 = vunpack.c.l.b16 %v56
  %v157 = vunpack.c.l.b16 %v57
  %v158 = vunpack.c.l.b16 %v58
  %v159 = vunpack.c.l.b16 %v59
  %v160 = vunpack.c.l.b16 %v60
  %v161 = vunpack.c.l.b16 %v61
  %v162 = vunpack.c.l.b16 %v62
  %v163 = vunpack.c.l.b16 %v63
  %v164 = vunpack.c.l.b16 %v64
  %v165 = vunpack.c.l.b16 %v65
  %v166 = vunpack.c.l.b16 %v66
  %v167 = vunpack.c.l.b16 %v67
  %v168 = vunpack.c.l.b16 %v68
  %v169 = vunpack.c.l.b16 %v69
  %v170 = vunpack.c.l.b16 %v70
  %v171 = vpack.c.b16 %v124, %v123
  %v172 = vpack.c.b16 %v126, %v125
  %v173 = vpack.c.b16 %v128, %v127
  %v174 = vpack.c.b16 %v130, %v129
  %v175 = vpack.c.b16 %v132, %v131
  %v176 = vpack.c.b16 %v134, %v133
  %v177 = vpack.c.b16 %v136, %v135
  %v178 = vpack.c.b16 %v138, %v137
  %v179 = vpack.c.b16 %v140, %v139
  %v180 = vpack.c.b16 %v142, %v141
  %v181 = vpack.c.b16 %v144, %v143
  %v182 = vpack.c.b16 %v146, %v145
  %v183 = vpack.c.b16 %v148, %v147
  %v184 = vpack.c.b16 %v150, %v149
  %v185 = vpack.c.b16 %v152, %v151
  %v186 = vpack.c.b16 %v154, %v153
  %v187 = vpack.c.b16 %v156, %v155
  %v188 = vpack.c.b16 %v158, %v157
  %v189 = vpack.c.b16 %v160, %v159
  %v190 = vpack.c.b16 %v162, %v161
  %v191 = vpack.c.b16 %v164, %v163
  %v192 = vpack.c.b16 %v166, %v165
  %v193 = vpack.c.b16 %v168, %v167
  %v194 = vpack.c.b16 %v170, %v169
  %219 = vmatpush.bf16.msra.mxu0 %v178
  %220 = vmatpush.bf16.msra.mxu0 %v177
  %221 = vmatpush.bf16.msra.mxu0 %v176
  %222 = vmatpush.bf16.msra.mxu0 %v175
  %223 = vmatpush.bf16.msra.mxu0 %v174
  %224 = vmatpush.bf16.msra.mxu0 %v173
  %225 = vmatpush.bf16.msra.mxu0 %v172
  %226 = vmatpush.bf16.msra.mxu0 %v171
  %227 = vmatmul.bf16.gmra.mxu0 %v20
  %v228 = vpop.f32.mrf.mxu0
  %v229 = vadd.f32 %v73, %v228
  %v230 = vpop.f32.mrf.mxu0
  %v231 = vadd.f32 %v73, %v230
  %232 = vdwg.mxu0
  %233 = vmatpush.bf16.msra.mxu0 %v186
  %234 = vmatpush.bf16.msra.mxu0 %v185
  %235 = vmatpush.bf16.msra.mxu0 %v184
  %236 = vmatpush.bf16.msra.mxu0 %v183
  %237 = vmatpush.bf16.msra.mxu0 %v182
  %238 = vmatpush.bf16.msra.mxu0 %v181
  %239 = vmatpush.bf16.msra.mxu0 %v180
  %240 = vmatpush.bf16.msra.mxu0 %v179
  %241 = vmatmul.bf16.gmra.mxu0 %v21
  %v242 = vpop.f32.mrf.mxu0
  %v243 = vadd.f32 %v229, %v242
  %v244 = vpop.f32.mrf.mxu0
  %v245 = vadd.f32 %v231, %v244
  %246 = vdwg.mxu0
  %247 = vmatpush.bf16.msra.mxu0 %v194
  %248 = vmatpush.bf16.msra.mxu0 %v193
  %249 = vmatpush.bf16.msra.mxu0 %v192
  %250 = vmatpush.bf16.msra.mxu0 %v191
  %251 = vmatpush.bf16.msra.mxu0 %v190
  %252 = vmatpush.bf16.msra.mxu0 %v189
  %253 = vmatpush.bf16.msra.mxu0 %v188
  %254 = vmatpush.bf16.msra.mxu0 %v187
  %255 = vmatmul.bf16.gmra.mxu0 %v22
  %v256 = vpop.f32.mrf.mxu0
  %v257 = vadd.f32 %v243, %v256
  %v258 = vpop.f32.mrf.mxu0
  %v259 = vadd.f32 %v245, %v258
  %260 = vdwg.mxu0
  %vm261 = vcmask 261120
  %262 = vst.msk [vmem:[%s3] sm:$0xff] %vm261, %v257
  %263 = vst.msk [vmem:[%s3 + $0x8] sm:$0xff] %vm261, %v259
  // Predicated region
  $region14: #{clipmvit_forward.4} parent=0 // pred_check
    _
  $region15: #{clipmvit_forward.4} parent=0 // pred_check_branch
    %265 = sbr.rel (0) target = $region17
  $region16: #{clipmvit_forward.4} parent=0 // pred_region
    _
  $region17: #{clipmvit_forward.4} parent=0 // pred_fallthru
    _
  // Predicated region
  $region18: #{clipmvit_forward.4} parent=0 // pred_check
    _
  $region19: #{clipmvit_forward.4} parent=0 // pred_check_branch
    %267 = sbr.rel (0) target = $region21
  $region20: #{clipmvit_forward.4} parent=0 // pred_region
    _
  $region21: #{clipmvit_forward.4} parent=0 // pred_fallthru
    _

// kernel: clipmvit_forward.7
$region0: #{clipmvit_forward.7}
  #allocation0 [shape = 'u32[]', space=smem, size = 0x4, offset = 0x4, fixed_abs, tag = 'smem constant byte address 0x4 - core index']
  #allocation1 [shape = 'u32[72,128]{1,0:T(1,128)}', space=vmem, size = 0x9000, scoped, tag = 'internal scratch']
  #allocation2 [shape = 'f32[1,1]{1,0:T(1,128)S(6)}', space=smem, size = 0x200, scoped, tag = 'scoped memory for clipmvit_forward.7']
  %s0 = inlined_call_operand.<no memory space> [shape: f32[1,1], index: 0, kind: input, shape index: {}]
  %s1 = inlined_call_operand.vmem [shape: f32[2,32], index: 1, kind: input, shape index: {}]
  %s2 = inlined_call_operand.vmem [shape: f32[2,32], index: 2, kind: input, shape index: {}]
  %s3 = inlined_call_operand.vmem [shape: bf16[32,10], index: 3, kind: input, shape index: {}]
  %s4 = inlined_call_operand.vmem [shape: f32[1,10], index: 4, kind: input, shape index: {}]
  %s5 = inlined_call_operand.hbm [shape: f32[2,2], index: 5, kind: output, shape index: {0}]
  %s6 = inlined_call_operand.hbm [shape: f32[2,10], index: 6, kind: output, shape index: {1}]
  %7 = xla_tuple %s5, %s6
  %s8 = sld [smem:[#allocation0]]
  $region38: #{clipmvit_forward.7} parent=0
    _
  %s10 = ssub.s32 1, %s8
  %s11 = scalar_select 0, %s10, %s8
  %12 = sst [smem:[#allocation2]] %s0
  $region1: #{clipmvit_forward.7} parent=0
    #allocation3 [shape = 'u8[1024]{0}', space=vmem, size = 0x400, scoped, tag = 'output window, operand 0, single buffered']
    #allocation4 [shape = 's32[1]{0}', space=sflag, size = 0x4, scoped, tag = 'scoped memory for clipmvit_forward.7']
    #allocation5 [shape = 'u8[1024]{0}', space=vmem, size = 0x400, scoped, tag = 'output window, operand 1, single buffered']
    #allocation6 [shape = 's32[1]{0}', space=sflag, size = 0x4, scoped, tag = 'scoped memory for clipmvit_forward.7']
    %13 = vsyncpa [#allocation4], 0
    %14 = vsyncpa [#allocation6], 0
    // Predicated region
    $region2: #{clipmvit_forward.7} parent=1 // pred_check
      _
    $region3: #{clipmvit_forward.7} parent=1 // pred_check_branch
      %16 = sbr.rel (0) target = $region5
    $region4: #{clipmvit_forward.7} parent=1 // pred_region
      _
    $region5: #{clipmvit_forward.7} parent=1 // pred_fallthru
      _
    // Predicated region
    $region6: #{clipmvit_forward.7} parent=1 // pred_check
      _
    $region7: #{clipmvit_forward.7} parent=1 // pred_check_branch
      %18 = sbr.rel (0) target = $region9
    $region8: #{clipmvit_forward.7} parent=1 // pred_region
      _
    $region9: #{clipmvit_forward.7} parent=1 // pred_fallthru
      _
    // Predicated region
    $region10: #{clipmvit_forward.7} parent=1 // pred_check
      _
    $region11: #{clipmvit_forward.7} parent=1 // pred_check_branch
      %20 = sbr.rel (0) target = $region13
    $region12: #{clipmvit_forward.7} parent=1 // pred_region
      _
    $region13: #{clipmvit_forward.7} parent=1 // pred_fallthru
      _
    // Predicated region
    $region14: #{clipmvit_forward.7} parent=1 // pred_check
      _
    $region15: #{clipmvit_forward.7} parent=1 // pred_check_branch
      %22 = sbr.rel (0) target = $region17
    $region16: #{clipmvit_forward.7} parent=1 // pred_region
      _
    $region17: #{clipmvit_forward.7} parent=1 // pred_fallthru
      _
    // Predicated region
    $region18: #{clipmvit_forward.7} parent=1 // pred_check
      _
    $region19: #{clipmvit_forward.7} parent=1 // pred_check_branch
      %24 = sbr.rel (0) target = $region21
    $region20: #{clipmvit_forward.7} parent=1 // pred_region
      _
    $region21: #{clipmvit_forward.7} parent=1 // pred_fallthru
      _
    %v26 = vld [vmem:[%s1] sm:$0x3]
    %s27 = sld [smem:[#allocation2]]
    %v28 = vld [vmem:[%s2] sm:$0x3]
    %vm29 = vcmask 261120
    %v31 = vsel %vm29, %v26, 0
    %v34 = vsel %vm29, %v28, 0
    %36 = vmatpush.xpose.msra.mxu0 0.0
    %37 = vmatpush.xpose.msra.mxu0 0.0
    %38 = vmatpush.xpose.msra.mxu0 0.0
    %39 = vmatpush.xpose.msra.mxu0 0.0
    %40 = vmatpush.xpose.msra.mxu0 0.0
    %41 = vmatpush.xpose.msra.mxu0 0.0
    %42 = vmatpush.xpose.msra.mxu0 0.0
    %43 = vmatpush.xpose.msra.mxu0 0.0
    %44 = vmatpush.xpose.msra.mxu0 0.0
    %45 = vmatpush.xpose.msra.mxu0 0.0
    %46 = vmatpush.xpose.msra.mxu0 0.0
    %47 = vmatpush.xpose.msra.mxu0 0.0
    %48 = vmatpush.xpose.msra.mxu0 0.0
    %49 = vmatpush.xpose.msra.mxu0 0.0
    %50 = vmatpush.xpose.msra.mxu0 0.0
    %51 = vmatpush.xpose.msra.mxu0 %v34
    %52 = vmatmul.f32.gmra.mxu0 %v31
    %v53 = vpop.f32.mrf.mxu0
    %v54 = vadd.f32 0.0, %v53
    %55 = vdwg.mxu0
    %v56 = vstv %s27
    %v57 = vmul.f32 %v56, %v54
    %vm58 = vcmask 9216
    %59 = vst.msk [vmem:[#allocation3] sm:$0x3] %vm58, %v57
    %v60 = vpack.c.bf16 %v26, %v26
    %v61 = vld [vmem:[%s3] sm:$0xf]
    %v62 = vld [vmem:[%s3 + $0x4] sm:$0xf]
    %v63 = vld [vmem:[%s3 + $0x8] sm:$0xf]
    %v64 = vld [vmem:[%s3 + $0xc] sm:$0xf]
    %v65 = vld [vmem:[%s4] sm:$0x1]
    %v67 = vperm.slane %v65, 0
    %v73 = vunpack.c.l.b16 %v61
    %v74 = vunpack.c.l.b16 %v62
    %v75 = vunpack.c.l.b16 %v63
    %v76 = vunpack.c.l.b16 %v64
    %v77 = vpack.c.b16 %v74, %v73
    %v78 = vpack.c.b16 %v76, %v75
    %v82 = vsel %vm29, %v60, 0
    %84 = vmatpush.bf16.msra.mxu0 0
    %85 = vmatpush.bf16.msra.mxu0 0
    %86 = vmatpush.bf16.msra.mxu0 0
    %87 = vmatpush.bf16.msra.mxu0 0
    %88 = vmatpush.bf16.msra.mxu0 0
    %89 = vmatpush.bf16.msra.mxu0 0
    %90 = vmatpush.bf16.msra.mxu0 %v78
    %91 = vmatpush.bf16.msra.mxu0 %v77
    %92 = vmatmul.bf16.gmra.mxu0 %v82
    %v93 = vpop.f32.mrf.mxu0
    %v94 = vadd.f32 %v67, %v93
    %v95 = vpop.f32.mrf.mxu0
    %96 = vdwg.mxu0
    %vm97 = vcmask 74752
    %98 = vst.msk [vmem:[#allocation5] sm:$0x3] %vm97, %v94
    // Predicated region
    $region22: #{clipmvit_forward.7} parent=1 // pred_check
      _
    $region23: #{clipmvit_forward.7} parent=1 // pred_check_branch
      %100 = sbr.rel (0) target = $region25
    $region24: #{clipmvit_forward.7} parent=1 // pred_region
      %102 = vsyncadd [#allocation4], 0
      %s104 = sshll.u32 [#allocation3], 4
      %s105 = int_to_ptr.vmem [resolvable:$true] %s104
      %s106 = sshll.u32 %s5, 4
      %s107 = int_to_ptr.hbm [resolvable:$true] %s106
      %109 = dma.vmem_to_hbm [thread:$0]  %s105, 32, %s107, [#allocation4]
    $region25: #{clipmvit_forward.7} parent=1 // pred_fallthru
      _
    // Predicated region
    $region26: #{clipmvit_forward.7} parent=1 // pred_check
      _
    $region27: #{clipmvit_forward.7} parent=1 // pred_check_branch
      %111 = sbr.rel (0) target = $region29
    $region28: #{clipmvit_forward.7} parent=1 // pred_region
      %113 = vsyncadd [#allocation6], 0
      %s115 = sshll.u32 [#allocation5], 4
      %s116 = int_to_ptr.vmem [resolvable:$true] %s115
      %s117 = sshll.u32 %s6, 4
      %s118 = int_to_ptr.hbm [resolvable:$true] %s117
      %120 = dma.vmem_to_hbm [thread:$0]  %s116, 32, %s118, [#allocation6]
    $region29: #{clipmvit_forward.7} parent=1 // pred_fallthru
      _
    // Predicated region
    $region30: #{clipmvit_forward.7} parent=1 // pred_check
      _
    $region31: #{clipmvit_forward.7} parent=1 // pred_check_branch
      %122 = sbr.rel (0) target = $region33
    $region32: #{clipmvit_forward.7} parent=1 // pred_region
      %124 = dma.done [#allocation4], 32
    $region33: #{clipmvit_forward.7} parent=1 // pred_fallthru
      _
    // Predicated region
    $region34: #{clipmvit_forward.7} parent=1 // pred_check
      _
    $region35: #{clipmvit_forward.7} parent=1 // pred_check_branch
      %126 = sbr.rel (0) target = $region37
    $region36: #{clipmvit_forward.7} parent=1 // pred_region
      %128 = dma.done [#allocation6], 32
    $region37: #{clipmvit_forward.7} parent=1 // pred_fallthru
      _
    %129 = vsyncpa [#allocation4], 1
    %130 = vsyncpa [#allocation6], 1

// kernel: clipmvit_forward.5
$region0: #{clipmvit_forward.5}
  #allocation0 [shape = 'u32[]', space=smem, size = 0x4, offset = 0x4, fixed_abs, tag = 'smem constant byte address 0x4 - core index']
  #allocation1 [shape = 'u32[72,128]{1,0:T(1,128)}', space=vmem, size = 0x9000, scoped, tag = 'internal scratch']
  #allocation2 [shape = 'f32[16,32]{1,0:T(8,128)}', space=vmem, size = 0x2000, scoped, tag = 'scratch operand']
  %s0 = inlined_call_operand.vmem [shape: f32[2,16,32], index: 0, kind: input, shape index: {}]
  %s1 = inlined_call_operand.vmem [shape: f32[16,16], index: 1, kind: input, shape index: {}]
  %s2 = inlined_call_operand.vmem [shape: f32[2,1,16], index: 2, kind: input, shape index: {}]
  %s3 = inlined_call_operand.vmem [shape: f32[2,1,32], index: 3, kind: input, shape index: {}]
  %s4 = inlined_call_operand.vmem [shape: f32[2,1,32], index: 4, kind: input, shape index: {}]
  %s5 = inlined_call_operand.vmem [shape: bf16[2,32,96], index: 5, kind: input, shape index: {}]
  %s6 = inlined_call_operand.vmem [shape: f32[2,1,96], index: 6, kind: input, shape index: {}]
  %s7 = inlined_call_operand.vmem [shape: bf16[2,32,32], index: 7, kind: input, shape index: {}]
  %s8 = inlined_call_operand.vmem [shape: f32[2,1,32], index: 8, kind: input, shape index: {}]
  %s9 = inlined_call_operand.vmem [shape: f32[2,1,32], index: 9, kind: input, shape index: {}]
  %s10 = inlined_call_operand.vmem [shape: f32[2,1,32], index: 10, kind: input, shape index: {}]
  %s11 = inlined_call_operand.vmem [shape: bf16[2,32,128], index: 11, kind: input, shape index: {}]
  %s12 = inlined_call_operand.vmem [shape: f32[2,1,128], index: 12, kind: input, shape index: {}]
  %s13 = inlined_call_operand.vmem [shape: bf16[2,128,32], index: 13, kind: input, shape index: {}]
  %s14 = inlined_call_operand.vmem [shape: f32[2,1,32], index: 14, kind: input, shape index: {}]
  %s15 = inlined_call_operand.vmem [shape: f32[1,32], index: 15, kind: input, shape index: {}]
  %s16 = inlined_call_operand.vmem [shape: f32[1,32], index: 16, kind: input, shape index: {}]
  %s17 = inlined_call_operand.vmem [shape: bf16[32,32], index: 17, kind: input, shape index: {}]
  %s18 = inlined_call_operand.vmem [shape: f32[1,32], index: 18, kind: input, shape index: {}]
  %s19 = inlined_call_operand.vmem [shape: f32[2,1,32], index: 19, kind: output, shape index: {}]
  %s20 = sld [smem:[#allocation0]]
  $region117: #{clipmvit_forward.5} parent=0
    _
  %s22 = ssub.s32 1, %s20
  %s23 = scalar_select 0, %s22, %s20
  loop: start=0, step=1, limit=6
  $region2: #{clipmvit_forward.5} parent=0 // loop_pre_header
    _
  $region3: #{clipmvit_forward.5} parent=0 // loop_header
    %s25 = sphi 0, %s29
    %p26 = scmp.ge.s32.totalorder %s25, 6
    %s32 = sphi 0, %s44
    %s33 = sphi 0, %s40
    %s34 = sphi 0, %s32
    %s35 = sphi 0, %s33
    %s36 = sphi 0, %s34
    %s37 = sphi 0, %s35
    %s47 = sphi 0, %s49
    %s50 = sphi 0, %s47
    %s51 = sphi 0, %s50
    %s67 = sphi 0, %s51
    %s71 = sphi 0, %s71
    %s73 = sphi 0, %s71
    %s74 = sphi 0, %s73
    %s88 = sphi 0, %s74
    %s94 = sphi 0, %s96
    %s97 = sphi 0, %s94
    %s98 = sphi 0, %s97
    %s114 = sphi 0, %s98
    %s120 = sphi 0, %s122
    %s123 = sphi 0, %s120
    %s124 = sphi 0, %s123
    %s140 = sphi 0, %s124
    %s146 = sphi 0, %s148
    %s149 = sphi 0, %s146
    %s150 = sphi 0, %s149
    %s166 = sphi 0, %s150
    %s172 = sphi 0, %s174
    %s175 = sphi 0, %s172
    %s176 = sphi 0, %s175
    %s192 = sphi 0, %s176
    %s198 = sphi 0, %s200
    %s201 = sphi 0, %s198
    %s202 = sphi 0, %s201
    %s218 = sphi 0, %s202
    %s224 = sphi 0, %s226
    %s227 = sphi 0, %s224
    %s228 = sphi 0, %s227
    %s244 = sphi 0, %s228
    %s250 = sphi 0, %s252
    %s253 = sphi 0, %s250
    %s254 = sphi 0, %s253
    %s270 = sphi 0, %s254
    %s276 = sphi 0, %s278
    %s279 = sphi 0, %s276
    %s280 = sphi 0, %s279
    %s296 = sphi 0, %s280
    %s302 = sphi 0, %s304
    %s305 = sphi 0, %s302
    %s306 = sphi 0, %s305
    %s322 = sphi 0, %s306
    %s328 = sphi 0, %s330
    %s331 = sphi 0, %s328
    %s332 = sphi 0, %s331
    %s348 = sphi 0, %s332
    %s354 = sphi 0, %s356
    %s357 = sphi 0, %s354
    %s358 = sphi 0, %s357
    %s374 = sphi 0, %s358
    %s380 = sphi 0, %s382
    %s383 = sphi 0, %s380
    %s384 = sphi 0, %s383
    %s400 = sphi 0, %s384
    %s406 = sphi 0, %s408
    %s409 = sphi 0, %s406
    %s410 = sphi 0, %s409
    %s426 = sphi 0, %s410
    %s430 = sphi 0, %s430
    %s432 = sphi 0, %s430
    %s433 = sphi 0, %s432
    %s447 = sphi 0, %s433
    %s451 = sphi 0, %s451
    %s453 = sphi 0, %s451
    %s454 = sphi 0, %s453
    %s468 = sphi 0, %s454
    %s472 = sphi 0, %s472
    %s474 = sphi 0, %s472
    %s475 = sphi 0, %s474
    %s489 = sphi 0, %s475
    %s493 = sphi 0, %s493
    %s495 = sphi 0, %s493
    %s496 = sphi 0, %s495
    %s510 = sphi 0, %s496
    %s516 = sphi 0, %s518
    %s519 = sphi 0, %s516
    %s520 = sphi 0, %s519
    %s536 = sphi 0, %s520
  $region4: #{clipmvit_forward.5} parent=0 // loop_header_branch
    %28 = sbr.rel (%p26) target = $region8
  $region5: #{clipmvit_forward.5} parent=0 // loop_body
    %s30 = ssub.s32 %s25, 1
    %s31 = ssub.s32 %s25, 2
    %s38 = sadd.s32 1, %s33
    %p39 = scmp.ge.s32.totalorder %s38, 2
    %s40 = scalar_select %p39, 0, %s38
    %s41 = sadd.s32 1, %s32
    %s42 = scalar_select %p39, %s41, %s32
    %p43 = scmp.ge.s32.totalorder %s42, 2
    %s44 = scalar_select %p43, 0, %s42
    %s45 = ssub.s32 %s32, %s44
    %p46 = scmp.eq.s32.totalorder %s45, 0
    %s48 = sadd.s32 %s47, 1
    %s49 = scalar_select %p46, %s47, %s48
    %p52 = pneg %p46
    %p53 = scmp.eq.s32.totalorder %s25, 3
    %p54 = por %p52, %p53
    %p55 = scmp.ne.s32.totalorder %s47, %s50
    %p56 = scmp.eq.s32.totalorder %s25, 0
    %p57 = por %p55, %p56
    %p58 = scmp.ne.s32.totalorder %s47, %s50
    %p59 = scmp.eq.s32.totalorder %s30, 3
    %p60 = por %p58, %p59
    %p61 = scmp.ne.s32.totalorder %s50, %s51
    %p62 = scmp.eq.s32.totalorder %s30, 0
    %p63 = por %p61, %p62
    %p64 = scmp.ne.s32.totalorder %s50, %s51
    %p65 = scmp.eq.s32.totalorder %s31, 3
    %p66 = por %p64, %p65
    %p68 = scmp.ne.s32.totalorder %s51, %s67
    %p69 = scmp.eq.s32.totalorder %s31, 0
    %p70 = por %p68, %p69
    %s72 = sadd.s32 %s71, 1
    %p75 = scmp.eq.s32.totalorder %s25, 3
    %p76 = scmp.ne.s32.totalorder %s71, %s73
    %p77 = scmp.eq.s32.totalorder %s25, 0
    %p78 = por %p76, %p77
    %p79 = scmp.ne.s32.totalorder %s71, %s73
    %p80 = scmp.eq.s32.totalorder %s30, 3
    %p81 = por %p79, %p80
    %p82 = scmp.ne.s32.totalorder %s73, %s74
    %p83 = scmp.eq.s32.totalorder %s30, 0
    %p84 = por %p82, %p83
    %p85 = scmp.ne.s32.totalorder %s73, %s74
    %p86 = scmp.eq.s32.totalorder %s31, 3
    %p87 = por %p85, %p86
    %p89 = scmp.ne.s32.totalorder %s74, %s88
    %p90 = scmp.eq.s32.totalorder %s31, 0
    %p91 = por %p89, %p90
    %s92 = ssub.s32 %s32, %s44
    %p93 = scmp.eq.s32.totalorder %s92, 0
    %s95 = sadd.s32 %s94, 1
    %s96 = scalar_select %p93, %s94, %s95
    %p99 = pneg %p93
    %p100 = scmp.eq.s32.totalorder %s25, 3
    %p101 = por %p99, %p100
    %p102 = scmp.ne.s32.totalorder %s94, %s97
    %p103 = scmp.eq.s32.totalorder %s25, 0
    %p104 = por %p102, %p103
    %p105 = scmp.ne.s32.totalorder %s94, %s97
    %p106 = scmp.eq.s32.totalorder %s30, 3
    %p107 = por %p105, %p106
    %p108 = scmp.ne.s32.totalorder %s97, %s98
    %p109 = scmp.eq.s32.totalorder %s30, 0
    %p110 = por %p108, %p109
    %p111 = scmp.ne.s32.totalorder %s97, %s98
    %p112 = scmp.eq.s32.totalorder %s31, 3
    %p113 = por %p111, %p112
    %p115 = scmp.ne.s32.totalorder %s98, %s114
    %p116 = scmp.eq.s32.totalorder %s31, 0
    %p117 = por %p115, %p116
    %s118 = ssub.s32 %s33, %s40
    %p119 = scmp.eq.s32.totalorder %s118, 0
    %s121 = sadd.s32 %s120, 1
    %s122 = scalar_select %p119, %s120, %s121
    %p125 = pneg %p119
    %p126 = scmp.eq.s32.totalorder %s25, 3
    %p127 = por %p125, %p126
    %p128 = scmp.ne.s32.totalorder %s120, %s123
    %p129 = scmp.eq.s32.totalorder %s25, 0
    %p130 = por %p128, %p129
    %p131 = scmp.ne.s32.totalorder %s120, %s123
    %p132 = scmp.eq.s32.totalorder %s30, 3
    %p133 = por %p131, %p132
    %p134 = scmp.ne.s32.totalorder %s123, %s124
    %p135 = scmp.eq.s32.totalorder %s30, 0
    %p136 = por %p134, %p135
    %p137 = scmp.ne.s32.totalorder %s123, %s124
    %p138 = scmp.eq.s32.totalorder %s31, 3
    %p139 = por %p137, %p138
    %p141 = scmp.ne.s32.totalorder %s124, %s140
    %p142 = scmp.eq.s32.totalorder %s31, 0
    %p143 = por %p141, %p142
    %s144 = ssub.s32 %s33, %s40
    %p145 = scmp.eq.s32.totalorder %s144, 0
    %s147 = sadd.s32 %s146, 1
    %s148 = scalar_select %p145, %s146, %s147
    %p151 = pneg %p145
    %p152 = scmp.eq.s32.totalorder %s25, 3
    %p153 = por %p151, %p152
    %p154 = scmp.ne.s32.totalorder %s146, %s149
    %p155 = scmp.eq.s32.totalorder %s25, 0
    %p156 = por %p154, %p155
    %p157 = scmp.ne.s32.totalorder %s146, %s149
    %p158 = scmp.eq.s32.totalorder %s30, 3
    %p159 = por %p157, %p158
    %p160 = scmp.ne.s32.totalorder %s149, %s150
    %p161 = scmp.eq.s32.totalorder %s30, 0
    %p162 = por %p160, %p161
    %p163 = scmp.ne.s32.totalorder %s149, %s150
    %p164 = scmp.eq.s32.totalorder %s31, 3
    %p165 = por %p163, %p164
    %p167 = scmp.ne.s32.totalorder %s150, %s166
    %p168 = scmp.eq.s32.totalorder %s31, 0
    %p169 = por %p167, %p168
    %s170 = ssub.s32 %s33, %s40
    %p171 = scmp.eq.s32.totalorder %s170, 0
    %s173 = sadd.s32 %s172, 1
    %s174 = scalar_select %p171, %s172, %s173
    %p177 = pneg %p171
    %p178 = scmp.eq.s32.totalorder %s25, 3
    %p179 = por %p177, %p178
    %p180 = scmp.ne.s32.totalorder %s172, %s175
    %p181 = scmp.eq.s32.totalorder %s25, 0
    %p182 = por %p180, %p181
    %p183 = scmp.ne.s32.totalorder %s172, %s175
    %p184 = scmp.eq.s32.totalorder %s30, 3
    %p185 = por %p183, %p184
    %p186 = scmp.ne.s32.totalorder %s175, %s176
    %p187 = scmp.eq.s32.totalorder %s30, 0
    %p188 = por %p186, %p187
    %p189 = scmp.ne.s32.totalorder %s175, %s176
    %p190 = scmp.eq.s32.totalorder %s31, 3
    %p191 = por %p189, %p190
    %p193 = scmp.ne.s32.totalorder %s176, %s192
    %p194 = scmp.eq.s32.totalorder %s31, 0
    %p195 = por %p193, %p194
    %s196 = ssub.s32 %s33, %s40
    %p197 = scmp.eq.s32.totalorder %s196, 0
    %s199 = sadd.s32 %s198, 1
    %s200 = scalar_select %p197, %s198, %s199
    %p203 = pneg %p197
    %p204 = scmp.eq.s32.totalorder %s25, 3
    %p205 = por %p203, %p204
    %p206 = scmp.ne.s32.totalorder %s198, %s201
    %p207 = scmp.eq.s32.totalorder %s25, 0
    %p208 = por %p206, %p207
    %p209 = scmp.ne.s32.totalorder %s198, %s201
    %p210 = scmp.eq.s32.totalorder %s30, 3
    %p211 = por %p209, %p210
    %p212 = scmp.ne.s32.totalorder %s201, %s202
    %p213 = scmp.eq.s32.totalorder %s30, 0
    %p214 = por %p212, %p213
    %p215 = scmp.ne.s32.totalorder %s201, %s202
    %p216 = scmp.eq.s32.totalorder %s31, 3
    %p217 = por %p215, %p216
    %p219 = scmp.ne.s32.totalorder %s202, %s218
    %p220 = scmp.eq.s32.totalorder %s31, 0
    %p221 = por %p219, %p220
    %s222 = ssub.s32 %s33, %s40
    %p223 = scmp.eq.s32.totalorder %s222, 0
    %s225 = sadd.s32 %s224, 1
    %s226 = scalar_select %p223, %s224, %s225
    %p229 = pneg %p223
    %p230 = scmp.eq.s32.totalorder %s25, 3
    %p231 = por %p229, %p230
    %p232 = scmp.ne.s32.totalorder %s224, %s227
    %p233 = scmp.eq.s32.totalorder %s25, 0
    %p234 = por %p232, %p233
    %p235 = scmp.ne.s32.totalorder %s224, %s227
    %p236 = scmp.eq.s32.totalorder %s30, 3
    %p237 = por %p235, %p236
    %p238 = scmp.ne.s32.totalorder %s227, %s228
    %p239 = scmp.eq.s32.totalorder %s30, 0
    %p240 = por %p238, %p239
    %p241 = scmp.ne.s32.totalorder %s227, %s228
    %p242 = scmp.eq.s32.totalorder %s31, 3
    %p243 = por %p241, %p242
    %p245 = scmp.ne.s32.totalorder %s228, %s244
    %p246 = scmp.eq.s32.totalorder %s31, 0
    %p247 = por %p245, %p246
    %s248 = ssub.s32 %s33, %s40
    %p249 = scmp.eq.s32.totalorder %s248, 0
    %s251 = sadd.s32 %s250, 1
    %s252 = scalar_select %p249, %s250, %s251
    %p255 = pneg %p249
    %p256 = scmp.eq.s32.totalorder %s25, 3
    %p257 = por %p255, %p256
    %p258 = scmp.ne.s32.totalorder %s250, %s253
    %p259 = scmp.eq.s32.totalorder %s25, 0
    %p260 = por %p258, %p259
    %p261 = scmp.ne.s32.totalorder %s250, %s253
    %p262 = scmp.eq.s32.totalorder %s30, 3
    %p263 = por %p261, %p262
    %p264 = scmp.ne.s32.totalorder %s253, %s254
    %p265 = scmp.eq.s32.totalorder %s30, 0
    %p266 = por %p264, %p265
    %p267 = scmp.ne.s32.totalorder %s253, %s254
    %p268 = scmp.eq.s32.totalorder %s31, 3
    %p269 = por %p267, %p268
    %p271 = scmp.ne.s32.totalorder %s254, %s270
    %p272 = scmp.eq.s32.totalorder %s31, 0
    %p273 = por %p271, %p272
    %s274 = ssub.s32 %s33, %s40
    %p275 = scmp.eq.s32.totalorder %s274, 0
    %s277 = sadd.s32 %s276, 1
    %s278 = scalar_select %p275, %s276, %s277
    %p281 = pneg %p275
    %p282 = scmp.eq.s32.totalorder %s25, 3
    %p283 = por %p281, %p282
    %p284 = scmp.ne.s32.totalorder %s276, %s279
    %p285 = scmp.eq.s32.totalorder %s25, 0
    %p286 = por %p284, %p285
    %p287 = scmp.ne.s32.totalorder %s276, %s279
    %p288 = scmp.eq.s32.totalorder %s30, 3
    %p289 = por %p287, %p288
    %p290 = scmp.ne.s32.totalorder %s279, %s280
    %p291 = scmp.eq.s32.totalorder %s30, 0
    %p292 = por %p290, %p291
    %p293 = scmp.ne.s32.totalorder %s279, %s280
    %p294 = scmp.eq.s32.totalorder %s31, 3
    %p295 = por %p293, %p294
    %p297 = scmp.ne.s32.totalorder %s280, %s296
    %p298 = scmp.eq.s32.totalorder %s31, 0
    %p299 = por %p297, %p298
    %s300 = ssub.s32 %s33, %s40
    %p301 = scmp.eq.s32.totalorder %s300, 0
    %s303 = sadd.s32 %s302, 1
    %s304 = scalar_select %p301, %s302, %s303
    %p307 = pneg %p301
    %p308 = scmp.eq.s32.totalorder %s25, 3
    %p309 = por %p307, %p308
    %p310 = scmp.ne.s32.totalorder %s302, %s305
    %p311 = scmp.eq.s32.totalorder %s25, 0
    %p312 = por %p310, %p311
    %p313 = scmp.ne.s32.totalorder %s302, %s305
    %p314 = scmp.eq.s32.totalorder %s30, 3
    %p315 = por %p313, %p314
    %p316 = scmp.ne.s32.totalorder %s305, %s306
    %p317 = scmp.eq.s32.totalorder %s30, 0
    %p318 = por %p316, %p317
    %p319 = scmp.ne.s32.totalorder %s305, %s306
    %p320 = scmp.eq.s32.totalorder %s31, 3
    %p321 = por %p319, %p320
    %p323 = scmp.ne.s32.totalorder %s306, %s322
    %p324 = scmp.eq.s32.totalorder %s31, 0
    %p325 = por %p323, %p324
    %s326 = ssub.s32 %s33, %s40
    %p327 = scmp.eq.s32.totalorder %s326, 0
    %s329 = sadd.s32 %s328, 1
    %s330 = scalar_select %p327, %s328, %s329
    %p333 = pneg %p327
    %p334 = scmp.eq.s32.totalorder %s25, 3
    %p335 = por %p333, %p334
    %p336 = scmp.ne.s32.totalorder %s328, %s331
    %p337 = scmp.eq.s32.totalorder %s25, 0
    %p338 = por %p336, %p337
    %p339 = scmp.ne.s32.totalorder %s328, %s331
    %p340 = scmp.eq.s32.totalorder %s30, 3
    %p341 = por %p339, %p340
    %p342 = scmp.ne.s32.totalorder %s331, %s332
    %p343 = scmp.eq.s32.totalorder %s30, 0
    %p344 = por %p342, %p343
    %p345 = scmp.ne.s32.totalorder %s331, %s332
    %p346 = scmp.eq.s32.totalorder %s31, 3
    %p347 = por %p345, %p346
    %p349 = scmp.ne.s32.totalorder %s332, %s348
    %p350 = scmp.eq.s32.totalorder %s31, 0
    %p351 = por %p349, %p350
    %s352 = ssub.s32 %s33, %s40
    %p353 = scmp.eq.s32.totalorder %s352, 0
    %s355 = sadd.s32 %s354, 1
    %s356 = scalar_select %p353, %s354, %s355
    %p359 = pneg %p353
    %p360 = scmp.eq.s32.totalorder %s25, 3
    %p361 = por %p359, %p360
    %p362 = scmp.ne.s32.totalorder %s354, %s357
    %p363 = scmp.eq.s32.totalorder %s25, 0
    %p364 = por %p362, %p363
    %p365 = scmp.ne.s32.totalorder %s354, %s357
    %p366 = scmp.eq.s32.totalorder %s30, 3
    %p367 = por %p365, %p366
    %p368 = scmp.ne.s32.totalorder %s357, %s358
    %p369 = scmp.eq.s32.totalorder %s30, 0
    %p370 = por %p368, %p369
    %p371 = scmp.ne.s32.totalorder %s357, %s358
    %p372 = scmp.eq.s32.totalorder %s31, 3
    %p373 = por %p371, %p372
    %p375 = scmp.ne.s32.totalorder %s358, %s374
    %p376 = scmp.eq.s32.totalorder %s31, 0
    %p377 = por %p375, %p376
    %s378 = ssub.s32 %s33, %s40
    %p379 = scmp.eq.s32.totalorder %s378, 0
    %s381 = sadd.s32 %s380, 1
    %s382 = scalar_select %p379, %s380, %s381
    %p385 = pneg %p379
    %p386 = scmp.eq.s32.totalorder %s25, 3
    %p387 = por %p385, %p386
    %p388 = scmp.ne.s32.totalorder %s380, %s383
    %p389 = scmp.eq.s32.totalorder %s25, 0
    %p390 = por %p388, %p389
    %p391 = scmp.ne.s32.totalorder %s380, %s383
    %p392 = scmp.eq.s32.totalorder %s30, 3
    %p393 = por %p391, %p392
    %p394 = scmp.ne.s32.totalorder %s383, %s384
    %p395 = scmp.eq.s32.totalorder %s30, 0
    %p396 = por %p394, %p395
    %p397 = scmp.ne.s32.totalorder %s383, %s384
    %p398 = scmp.eq.s32.totalorder %s31, 3
    %p399 = por %p397, %p398
    %p401 = scmp.ne.s32.totalorder %s384, %s400
    %p402 = scmp.eq.s32.totalorder %s31, 0
    %p403 = por %p401, %p402
    %s404 = ssub.s32 %s33, %s40
    %p405 = scmp.eq.s32.totalorder %s404, 0
    %s407 = sadd.s32 %s406, 1
    %s408 = scalar_select %p405, %s406, %s407
    %p411 = pneg %p405
    %p412 = scmp.eq.s32.totalorder %s25, 3
    %p413 = por %p411, %p412
    %p414 = scmp.ne.s32.totalorder %s406, %s409
    %p415 = scmp.eq.s32.totalorder %s25, 0
    %p416 = por %p414, %p415
    %p417 = scmp.ne.s32.totalorder %s406, %s409
    %p418 = scmp.eq.s32.totalorder %s30, 3
    %p419 = por %p417, %p418
    %p420 = scmp.ne.s32.totalorder %s409, %s410
    %p421 = scmp.eq.s32.totalorder %s30, 0
    %p422 = por %p420, %p421
    %p423 = scmp.ne.s32.totalorder %s409, %s410
    %p424 = scmp.eq.s32.totalorder %s31, 3
    %p425 = por %p423, %p424
    %p427 = scmp.ne.s32.totalorder %s410, %s426
    %p428 = scmp.eq.s32.totalorder %s31, 0
    %p429 = por %p427, %p428
    %s431 = sadd.s32 %s430, 1
    %p434 = scmp.eq.s32.totalorder %s25, 3
    %p435 = scmp.ne.s32.totalorder %s430, %s432
    %p436 = scmp.eq.s32.totalorder %s25, 0
    %p437 = por %p435, %p436
    %p438 = scmp.ne.s32.totalorder %s430, %s432
    %p439 = scmp.eq.s32.totalorder %s30, 3
    %p440 = por %p438, %p439
    %p441 = scmp.ne.s32.totalorder %s432, %s433
    %p442 = scmp.eq.s32.totalorder %s30, 0
    %p443 = por %p441, %p442
    %p444 = scmp.ne.s32.totalorder %s432, %s433
    %p445 = scmp.eq.s32.totalorder %s31, 3
    %p446 = por %p444, %p445
    %p448 = scmp.ne.s32.totalorder %s433, %s447
    %p449 = scmp.eq.s32.totalorder %s31, 0
    %p450 = por %p448, %p449
    %s452 = sadd.s32 %s451, 1
    %p455 = scmp.eq.s32.totalorder %s25, 3
    %p456 = scmp.ne.s32.totalorder %s451, %s453
    %p457 = scmp.eq.s32.totalorder %s25, 0
    %p458 = por %p456, %p457
    %p459 = scmp.ne.s32.totalorder %s451, %s453
    %p460 = scmp.eq.s32.totalorder %s30, 3
    %p461 = por %p459, %p460
    %p462 = scmp.ne.s32.totalorder %s453, %s454
    %p463 = scmp.eq.s32.totalorder %s30, 0
    %p464 = por %p462, %p463
    %p465 = scmp.ne.s32.totalorder %s453, %s454
    %p466 = scmp.eq.s32.totalorder %s31, 3
    %p467 = por %p465, %p466
    %p469 = scmp.ne.s32.totalorder %s454, %s468
    %p470 = scmp.eq.s32.totalorder %s31, 0
    %p471 = por %p469, %p470
    %s473 = sadd.s32 %s472, 1
    %p476 = scmp.eq.s32.totalorder %s25, 3
    %p477 = scmp.ne.s32.totalorder %s472, %s474
    %p478 = scmp.eq.s32.totalorder %s25, 0
    %p479 = por %p477, %p478
    %p480 = scmp.ne.s32.totalorder %s472, %s474
    %p481 = scmp.eq.s32.totalorder %s30, 3
    %p482 = por %p480, %p481
    %p483 = scmp.ne.s32.totalorder %s474, %s475
    %p484 = scmp.eq.s32.totalorder %s30, 0
    %p485 = por %p483, %p484
    %p486 = scmp.ne.s32.totalorder %s474, %s475
    %p487 = scmp.eq.s32.totalorder %s31, 3
    %p488 = por %p486, %p487
    %p490 = scmp.ne.s32.totalorder %s475, %s489
    %p491 = scmp.eq.s32.totalorder %s31, 0
    %p492 = por %p490, %p491
    %s494 = sadd.s32 %s493, 1
    %p497 = scmp.eq.s32.totalorder %s25, 3
    %p498 = scmp.ne.s32.totalorder %s493, %s495
    %p499 = scmp.eq.s32.totalorder %s25, 0
    %p500 = por %p498, %p499
    %p501 = scmp.ne.s32.totalorder %s493, %s495
    %p502 = scmp.eq.s32.totalorder %s30, 3
    %p503 = por %p501, %p502
    %p504 = scmp.ne.s32.totalorder %s495, %s496
    %p505 = scmp.eq.s32.totalorder %s30, 0
    %p506 = por %p504, %p505
    %p507 = scmp.ne.s32.totalorder %s495, %s496
    %p508 = scmp.eq.s32.totalorder %s31, 3
    %p509 = por %p507, %p508
    %p511 = scmp.ne.s32.totalorder %s496, %s510
    %p512 = scmp.eq.s32.totalorder %s31, 0
    %p513 = por %p511, %p512
    %s514 = ssub.s32 %s32, %s44
    %p515 = scmp.eq.s32.totalorder %s514, 0
    %s517 = sadd.s32 %s516, 1
    %s518 = scalar_select %p515, %s516, %s517
    %p521 = pneg %p515
    %p522 = scmp.eq.s32.totalorder %s25, 3
    %p523 = por %p521, %p522
    %p524 = scmp.ne.s32.totalorder %s516, %s519
    %p525 = scmp.eq.s32.totalorder %s25, 0
    %p526 = por %p524, %p525
    %p527 = scmp.ne.s32.totalorder %s516, %s519
    %p528 = scmp.eq.s32.totalorder %s30, 3
    %p529 = por %p527, %p528
    %p530 = scmp.ne.s32.totalorder %s519, %s520
    %p531 = scmp.eq.s32.totalorder %s30, 0
    %p532 = por %p530, %p531
    %p533 = scmp.ne.s32.totalorder %s519, %s520
    %p534 = scmp.eq.s32.totalorder %s31, 3
    %p535 = por %p533, %p534
    %p537 = scmp.ne.s32.totalorder %s520, %s536
    %p538 = scmp.eq.s32.totalorder %s31, 0
    %p539 = por %p537, %p538
    %p540 = scmp.le.s32.totalorder 1, %s25
    %p541 = scmp.lt.s32.totalorder %s25, 5
    %p542 = pnand %p540, %p541
    %p543 = pneg %p542
    // Predicated region
    $region9: #{clipmvit_forward.5} parent=5 // pred_check
      _
    $region10: #{clipmvit_forward.5} parent=5 // pred_check_branch
      %545 = sbr.rel (%p542) target = $region12
    $region11: #{clipmvit_forward.5} parent=5 // pred_region
      %s546 = ssub.s32 %s25, 1
      // Predicated region
      $region13: #{clipmvit_forward.5} parent=11 // pred_check
        %p547 = pneg %p84
      $region14: #{clipmvit_forward.5} parent=11 // pred_check_branch
        %549 = sbr.rel (%p547) target = $region16
      $region15: #{clipmvit_forward.5} parent=11 // pred_region
        _
      $region16: #{clipmvit_forward.5} parent=11 // pred_fallthru
        _
      // Predicated region
      $region17: #{clipmvit_forward.5} parent=11 // pred_check
        %p550 = pneg %p443
      $region18: #{clipmvit_forward.5} parent=11 // pred_check_branch
        %552 = sbr.rel (%p550) target = $region20
      $region19: #{clipmvit_forward.5} parent=11 // pred_region
        _
      $region20: #{clipmvit_forward.5} parent=11 // pred_fallthru
        _
      // Predicated region
      $region21: #{clipmvit_forward.5} parent=11 // pred_check
        %p553 = pneg %p464
      $region22: #{clipmvit_forward.5} parent=11 // pred_check_branch
        %555 = sbr.rel (%p553) target = $region24
      $region23: #{clipmvit_forward.5} parent=11 // pred_region
        _
      $region24: #{clipmvit_forward.5} parent=11 // pred_fallthru
        _
      // Predicated region
      $region25: #{clipmvit_forward.5} parent=11 // pred_check
        %p556 = pneg %p485
      $region26: #{clipmvit_forward.5} parent=11 // pred_check_branch
        %558 = sbr.rel (%p556) target = $region28
      $region27: #{clipmvit_forward.5} parent=11 // pred_region
        _
      $region28: #{clipmvit_forward.5} parent=11 // pred_fallthru
        _
      // Predicated region
      $region29: #{clipmvit_forward.5} parent=11 // pred_check
        %p559 = pneg %p506
      $region30: #{clipmvit_forward.5} parent=11 // pred_check_branch
        %561 = sbr.rel (%p559) target = $region32
      $region31: #{clipmvit_forward.5} parent=11 // pred_region
        _
      $region32: #{clipmvit_forward.5} parent=11 // pred_fallthru
        _
    $region12: #{clipmvit_forward.5} parent=5 // pred_fallthru
      _
    %p562 = scmp.lt.s32.totalorder %s25, 4
    // Predicated region
    $region33: #{clipmvit_forward.5} parent=5 // pred_check
      %p563 = pneg %p562
    $region34: #{clipmvit_forward.5} parent=5 // pred_check_branch
      %565 = sbr.rel (%p563) target = $region36
    $region35: #{clipmvit_forward.5} parent=5 // pred_region
      // Predicated region
      $region37: #{clipmvit_forward.5} parent=35 // pred_check
        %p566 = pneg %p57
      $region38: #{clipmvit_forward.5} parent=35 // pred_check_branch
        %568 = sbr.rel (%p566) target = $region40
      $region39: #{clipmvit_forward.5} parent=35 // pred_region
        %p569 = scmp.lt.s32.totalorder %s32, 1
        %s570 = scalar_select %p569, %s32, 1
        %s571 = smul.addr %s570, 2
        %s572 = smul.addr %s571, 8
        %s573 = scalar_lea.vmem %s0, %s572
      $region40: #{clipmvit_forward.5} parent=35 // pred_fallthru
        _
      // Predicated region
      $region41: #{clipmvit_forward.5} parent=35 // pred_check
        %p574 = pneg %p104
      $region42: #{clipmvit_forward.5} parent=35 // pred_check_branch
        %576 = sbr.rel (%p574) target = $region44
      $region43: #{clipmvit_forward.5} parent=35 // pred_region
        %p577 = scmp.lt.s32.totalorder %s32, 1
        %s578 = scalar_select %p577, %s32, 1
        %s579 = scalar_lea.vmem %s2, %s578
      $region44: #{clipmvit_forward.5} parent=35 // pred_fallthru
        _
      // Predicated region
      $region45: #{clipmvit_forward.5} parent=35 // pred_check
        %p580 = pneg %p130
      $region46: #{clipmvit_forward.5} parent=35 // pred_check_branch
        %582 = sbr.rel (%p580) target = $region48
      $region47: #{clipmvit_forward.5} parent=35 // pred_region
        %p583 = scmp.lt.s32.totalorder %s33, 1
        %s584 = scalar_select %p583, %s33, 1
        %s585 = scalar_lea.vmem %s3, %s584
      $region48: #{clipmvit_forward.5} parent=35 // pred_fallthru
        _
      // Predicated region
      $region49: #{clipmvit_forward.5} parent=35 // pred_check
        %p586 = pneg %p156
      $region50: #{clipmvit_forward.5} parent=35 // pred_check_branch
        %588 = sbr.rel (%p586) target = $region52
      $region51: #{clipmvit_forward.5} parent=35 // pred_region
        %p589 = scmp.lt.s32.totalorder %s33, 1
        %s590 = scalar_select %p589, %s33, 1
        %s591 = scalar_lea.vmem %s4, %s590
      $region52: #{clipmvit_forward.5} parent=35 // pred_fallthru
        _
      // Predicated region
      $region53: #{clipmvit_forward.5} parent=35 // pred_check
        %p592 = pneg %p182
      $region54: #{clipmvit_forward.5} parent=35 // pred_check_branch
        %594 = sbr.rel (%p592) target = $region56
      $region55: #{clipmvit_forward.5} parent=35 // pred_region
        %p595 = scmp.lt.s32.totalorder %s33, 1
        %s596 = scalar_select %p595, %s33, 1
        %s597 = smul.addr %s596, 4
        %s598 = smul.addr %s597, 4
        %s599 = scalar_lea.vmem %s5, %s598
      $region56: #{clipmvit_forward.5} parent=35 // pred_fallthru
        _
      // Predicated region
      $region57: #{clipmvit_forward.5} parent=35 // pred_check
        %p600 = pneg %p208
      $region58: #{clipmvit_forward.5} parent=35 // pred_check_branch
        %602 = sbr.rel (%p600) target = $region60
      $region59: #{clipmvit_forward.5} parent=35 // pred_region
        %p603 = scmp.lt.s32.totalorder %s33, 1
        %s604 = scalar_select %p603, %s33, 1
        %s605 = scalar_lea.vmem %s6, %s604
      $region60: #{clipmvit_forward.5} parent=35 // pred_fallthru
        _
      // Predicated region
      $region61: #{clipmvit_forward.5} parent=35 // pred_check
        %p606 = pneg %p234
      $region62: #{clipmvit_forward.5} parent=35 // pred_check_branch
        %608 = sbr.rel (%p606) target = $region64
      $region63: #{clipmvit_forward.5} parent=35 // pred_region
        %p609 = scmp.lt.s32.totalorder %s33, 1
        %s610 = scalar_select %p609, %s33, 1
        %s611 = smul.addr %s610, 4
        %s612 = smul.addr %s611, 4
        %s613 = scalar_lea.vmem %s7, %s612
      $region64: #{clipmvit_forward.5} parent=35 // pred_fallthru
        _
      // Predicated region
      $region65: #{clipmvit_forward.5} parent=35 // pred_check
        %p614 = pneg %p260
      $region66: #{clipmvit_forward.5} parent=35 // pred_check_branch
        %616 = sbr.rel (%p614) target = $region68
      $region67: #{clipmvit_forward.5} parent=35 // pred_region
        %p617 = scmp.lt.s32.totalorder %s33, 1
        %s618 = scalar_select %p617, %s33, 1
        %s619 = scalar_lea.vmem %s8, %s618
      $region68: #{clipmvit_forward.5} parent=35 // pred_fallthru
        _
      // Predicated region
      $region69: #{clipmvit_forward.5} parent=35 // pred_check
        %p620 = pneg %p286
      $region70: #{clipmvit_forward.5} parent=35 // pred_check_branch
        %622 = sbr.rel (%p620) target = $region72
      $region71: #{clipmvit_forward.5} parent=35 // pred_region
        %p623 = scmp.lt.s32.totalorder %s33, 1
        %s624 = scalar_select %p623, %s33, 1
        %s625 = scalar_lea.vmem %s9, %s624
      $region72: #{clipmvit_forward.5} parent=35 // pred_fallthru
        _
      // Predicated region
      $region73: #{clipmvit_forward.5} parent=35 // pred_check
        %p626 = pneg %p312
      $region74: #{clipmvit_forward.5} parent=35 // pred_check_branch
        %628 = sbr.rel (%p626) target = $region76
      $region75: #{clipmvit_forward.5} parent=35 // pred_region
        %p629 = scmp.lt.s32.totalorder %s33, 1
        %s630 = scalar_select %p629, %s33, 1
        %s631 = scalar_lea.vmem %s10, %s630
      $region76: #{clipmvit_forward.5} parent=35 // pred_fallthru
        _
      // Predicated region
      $region77: #{clipmvit_forward.5} parent=35 // pred_check
        %p632 = pneg %p338
      $region78: #{clipmvit_forward.5} parent=35 // pred_check_branch
        %634 = sbr.rel (%p632) target = $region80
      $region79: #{clipmvit_forward.5} parent=35 // pred_region
        %p635 = scmp.lt.s32.totalorder %s33, 1
        %s636 = scalar_select %p635, %s33, 1
        %s637 = smul.addr %s636, 4
        %s638 = smul.addr %s637, 4
        %s639 = scalar_lea.vmem %s11, %s638
      $region80: #{clipmvit_forward.5} parent=35 // pred_fallthru
        _
      // Predicated region
      $region81: #{clipmvit_forward.5} parent=35 // pred_check
        %p640 = pneg %p364
      $region82: #{clipmvit_forward.5} parent=35 // pred_check_branch
        %642 = sbr.rel (%p640) target = $region84
      $region83: #{clipmvit_forward.5} parent=35 // pred_region
        %p643 = scmp.lt.s32.totalorder %s33, 1
        %s644 = scalar_select %p643, %s33, 1
        %s645 = scalar_lea.vmem %s12, %s644
      $region84: #{clipmvit_forward.5} parent=35 // pred_fallthru
        _
      // Predicated region
      $region85: #{clipmvit_forward.5} parent=35 // pred_check
        %p646 = pneg %p390
      $region86: #{clipmvit_forward.5} parent=35 // pred_check_branch
        %648 = sbr.rel (%p646) target = $region88
      $region87: #{clipmvit_forward.5} parent=35 // pred_region
        %p649 = scmp.lt.s32.totalorder %s33, 1
        %s650 = scalar_select %p649, %s33, 1
        %s651 = smul.addr %s650, 16
        %s652 = smul.addr %s651, 4
        %s653 = scalar_lea.vmem %s13, %s652
      $region88: #{clipmvit_forward.5} parent=35 // pred_fallthru
        _
      // Predicated region
      $region89: #{clipmvit_forward.5} parent=35 // pred_check
        %p654 = pneg %p416
      $region90: #{clipmvit_forward.5} parent=35 // pred_check_branch
        %656 = sbr.rel (%p654) target = $region92
      $region91: #{clipmvit_forward.5} parent=35 // pred_region
        %p657 = scmp.lt.s32.totalorder %s33, 1
        %s658 = scalar_select %p657, %s33, 1
        %s659 = scalar_lea.vmem %s14, %s658
      $region92: #{clipmvit_forward.5} parent=35 // pred_fallthru
        _
    $region36: #{clipmvit_forward.5} parent=5 // pred_fallthru
      _
    %p660 = scmp.le.s32.totalorder 1, %s25
    %p661 = scmp.lt.s32.totalorder %s25, 5
    %p662 = pnand %p660, %p661
    %p663 = pneg %p662
    // Predicated region
    $region93: #{clipmvit_forward.5} parent=5 // pred_check
      _
    $region94: #{clipmvit_forward.5} parent=5 // pred_check_branch
      %665 = sbr.rel (%p662) target = $region96
    $region95: #{clipmvit_forward.5} parent=5 // pred_region
      %s666 = ssub.s32 %s25, 1
      %p667 = scmp.lt.s32.totalorder %s34, 1
      %s668 = scalar_select %p667, %s34, 1
      %s669 = smul.addr %s668, 2
      %s670 = smul.addr %s669, 8
      %s671 = scalar_lea.vmem %s0, %s670
      %p672 = pneg %p63
      %p673 = pneg %p60
      %p674 = pneg %p84
      %p675 = pneg %p81
      %p676 = scmp.lt.s32.totalorder %s34, 1
      %s677 = scalar_select %p676, %s34, 1
      %s678 = scalar_lea.vmem %s2, %s677
      %p679 = pneg %p110
      %p680 = pneg %p107
      %p681 = scmp.lt.s32.totalorder %s35, 1
      %s682 = scalar_select %p681, %s35, 1
      %s683 = scalar_lea.vmem %s3, %s682
      %p684 = pneg %p136
      %p685 = pneg %p133
      %p686 = scmp.lt.s32.totalorder %s35, 1
      %s687 = scalar_select %p686, %s35, 1
      %s688 = scalar_lea.vmem %s4, %s687
      %p689 = pneg %p162
      %p690 = pneg %p159
      %p691 = scmp.lt.s32.totalorder %s35, 1
      %s692 = scalar_select %p691, %s35, 1
      %s693 = smul.addr %s692, 4
      %s694 = smul.addr %s693, 4
      %s695 = scalar_lea.vmem %s5, %s694
      %p696 = pneg %p188
      %p697 = pneg %p185
      %p698 = scmp.lt.s32.totalorder %s35, 1
      %s699 = scalar_select %p698, %s35, 1
      %s700 = scalar_lea.vmem %s6, %s699
      %p701 = pneg %p214
      %p702 = pneg %p211
      %p703 = scmp.lt.s32.totalorder %s35, 1
      %s704 = scalar_select %p703, %s35, 1
      %s705 = smul.addr %s704, 4
      %s706 = smul.addr %s705, 4
      %s707 = scalar_lea.vmem %s7, %s706
      %p708 = pneg %p240
      %p709 = pneg %p237
      %p710 = scmp.lt.s32.totalorder %s35, 1
      %s711 = scalar_select %p710, %s35, 1
      %s712 = scalar_lea.vmem %s8, %s711
      %p713 = pneg %p266
      %p714 = pneg %p263
      %p715 = scmp.lt.s32.totalorder %s35, 1
      %s716 = scalar_select %p715, %s35, 1
      %s717 = scalar_lea.vmem %s9, %s716
      %p718 = pneg %p292
      %p719 = pneg %p289
      %p720 = scmp.lt.s32.totalorder %s35, 1
      %s721 = scalar_select %p720, %s35, 1
      %s722 = scalar_lea.vmem %s10, %s721
      %p723 = pneg %p318
      %p724 = pneg %p315
      %p725 = scmp.lt.s32.totalorder %s35, 1
      %s726 = scalar_select %p725, %s35, 1
      %s727 = smul.addr %s726, 4
      %s728 = smul.addr %s727, 4
      %s729 = scalar_lea.vmem %s11, %s728
      %p730 = pneg %p344
      %p731 = pneg %p341
      %p732 = scmp.lt.s32.totalorder %s35, 1
      %s733 = scalar_select %p732, %s35, 1
      %s734 = scalar_lea.vmem %s12, %s733
      %p735 = pneg %p370
      %p736 = pneg %p367
      %p737 = scmp.lt.s32.totalorder %s35, 1
      %s738 = scalar_select %p737, %s35, 1
      %s739 = smul.addr %s738, 16
      %s740 = smul.addr %s739, 4
      %s741 = scalar_lea.vmem %s13, %s740
      %p742 = pneg %p396
      %p743 = pneg %p393
      %p744 = scmp.lt.s32.totalorder %s35, 1
      %s745 = scalar_select %p744, %s35, 1
      %s746 = scalar_lea.vmem %s14, %s745
      %p747 = pneg %p422
      %p748 = pneg %p419
      %p749 = pneg %p443
      %p750 = pneg %p440
      %p751 = pneg %p464
      %p752 = pneg %p461
      %p753 = pneg %p485
      %p754 = pneg %p482
      %p755 = pneg %p506
      %p756 = pneg %p503
      %p757 = pneg %p532
      %p758 = pneg %p529
      %p759 = scmp.lt.s32.totalorder %s34, 1
      %s760 = scalar_select %p759, %s34, 1
      %s761 = scalar_lea.vmem %s19, %s760
      %p762 = scmp.lt.s32.totalorder %s34, 1
      %s763 = scalar_select %p762, %s34, 1
      %s764 = smul.addr %s763, 2
      %s765 = smul.addr %s764, 8
      %s766 = scalar_lea.vmem %s0, %s765
      %p767 = scmp.lt.s32.totalorder %s34, 1
      %s768 = scalar_select %p767, %s34, 1
      %s769 = scalar_lea.vmem %s2, %s768
      %p770 = scmp.lt.s32.totalorder %s35, 1
      %s771 = scalar_select %p770, %s35, 1
      %s772 = scalar_lea.vmem %s3, %s771
      %p773 = scmp.lt.s32.totalorder %s35, 1
      %s774 = scalar_select %p773, %s35, 1
      %s775 = scalar_lea.vmem %s4, %s774
      %p776 = scmp.lt.s32.totalorder %s35, 1
      %s777 = scalar_select %p776, %s35, 1
      %s778 = smul.addr %s777, 4
      %s779 = smul.addr %s778, 4
      %s780 = scalar_lea.vmem %s5, %s779
      %p781 = scmp.lt.s32.totalorder %s35, 1
      %s782 = scalar_select %p781, %s35, 1
      %s783 = scalar_lea.vmem %s6, %s782
      %p784 = scmp.lt.s32.totalorder %s35, 1
      %s785 = scalar_select %p784, %s35, 1
      %s786 = smul.addr %s785, 4
      %s787 = smul.addr %s786, 4
      %s788 = scalar_lea.vmem %s7, %s787
      %p789 = scmp.lt.s32.totalorder %s35, 1
      %s790 = scalar_select %p789, %s35, 1
      %s791 = scalar_lea.vmem %s8, %s790
      %p792 = scmp.lt.s32.totalorder %s35, 1
      %s793 = scalar_select %p792, %s35, 1
      %s794 = scalar_lea.vmem %s9, %s793
      %p795 = scmp.lt.s32.totalorder %s35, 1
      %s796 = scalar_select %p795, %s35, 1
      %s797 = scalar_lea.vmem %s10, %s796
      %p798 = scmp.lt.s32.totalorder %s35, 1
      %s799 = scalar_select %p798, %s35, 1
      %s800 = smul.addr %s799, 4
      %s801 = smul.addr %s800, 4
      %s802 = scalar_lea.vmem %s11, %s801
      %p803 = scmp.lt.s32.totalorder %s35, 1
      %s804 = scalar_select %p803, %s35, 1
      %s805 = scalar_lea.vmem %s12, %s804
      %p806 = scmp.lt.s32.totalorder %s35, 1
      %s807 = scalar_select %p806, %s35, 1
      %s808 = smul.addr %s807, 16
      %s809 = smul.addr %s808, 4
      %s810 = scalar_lea.vmem %s13, %s809
      %p811 = scmp.lt.s32.totalorder %s35, 1
      %s812 = scalar_select %p811, %s35, 1
      %s813 = scalar_lea.vmem %s14, %s812
      %p814 = scmp.lt.s32.totalorder %s34, 1
      %s815 = scalar_select %p814, %s34, 1
      %s816 = scalar_lea.vmem %s19, %s815
      %p818 = scmp.eq.s32.totalorder %s35, 0
      // Predicated region
      $region97: #{clipmvit_forward.5} parent=95 // pred_check
        %p819 = pneg %p818
      $region98: #{clipmvit_forward.5} parent=95 // pred_check_branch
        %821 = sbr.rel (%p819) target = $region100
      $region99: #{clipmvit_forward.5} parent=95 // pred_region
        %v822 = vld [vmem:[%s766] sm:$0xff]
        %v823 = vld [vmem:[%s766 + $0x8] sm:$0xff]
        %vm824 = vcmask 261120
        %825 = vst.msk [vmem:[#allocation2] sm:$0xff] %vm824, %v822
        %826 = vst.msk [vmem:[#allocation2 + $0x8] sm:$0xff] %vm824, %v823
      $region100: #{clipmvit_forward.5} parent=95 // pred_fallthru
        _
      %v827 = vld [vmem:[#allocation2] sm:$0xff]
      %v828 = vld [vmem:[#allocation2 + $0x8] sm:$0xff]
      %v829 = vld [vmem:[%s1] sm:$0xff]
      %v830 = vld [vmem:[%s1 + $0x8] sm:$0xff]
      %v831 = vld [vmem:[%s772] sm:$0x1]
      %v832 = vld [vmem:[%s775] sm:$0x1]
      %vm833 = vcmask 261120
      %v834 = vsel %vm833, %v827, 0.0
      %835 = vadd.xlane.f32.xlu0 %v834
      %v836 = vpop.xlane.xlu0 %835
      %v837 = vsel %vm833, %v828, 0.0
      %838 = vadd.xlane.f32.xlu0 %v837
      %v839 = vpop.xlane.xlu0 %838
      %v840 = vrcp.pop 32.0
      %v841 = vmul.f32 32.0, %v840
      %v842 = vsub.f32 1.0, %v841
      %v843 = vmul.f32 %v840, %v842
      %v844 = vadd.f32 %v840, %v843
      %vm845 = vweird.f32 %v840
      %v846 = vsel %vm845, %v840, %v844
      %v847 = vmul.f32 %v836, %v846
      %v848 = vmul.f32 %v839, %v846
      %v849 = vsub.f32 %v827, %v847
      %v850 = vsub.f32 %v828, %v848
      %v851 = vmul.f32 %v849, %v849
      %v852 = vmul.f32 %v850, %v850
      %v853 = vsel %vm833, %v851, 0.0
      %854 = vadd.xlane.f32.xlu0 %v853
      %v855 = vpop.xlane.xlu0 %854
      %v856 = vsel %vm833, %v852, 0.0
      %857 = vadd.xlane.f32.xlu0 %v856
      %v858 = vpop.xlane.xlu0 %857
      %v859 = vmul.f32 %v855, %v846
      %v860 = vmul.f32 %v858, %v846
      %v861 = vadd.f32 %v859, 1e-05
      %v862 = vadd.f32 %v860, 1e-05
      %v863 = vrsqrt.pop %v861
      %v864 = vmul.f32 %v863, %v861
      %v865 = vmul.f32 %v864, %v863
      %v866 = vmul.f32 0.5, %v865
      %v867 = vsub.f32 1.5, %v866
      %v868 = vmul.f32 %v863, %v867
      %vm869 = vweird.f32 %v861
      %vm870 = vweird.f32 %v863
      %vm871 = vmor %vm869, %vm870
      %v872 = vsel %vm871, %v863, %v868
      %v873 = vrsqrt.pop %v862
      %v874 = vmul.f32 %v873, %v862
      %v875 = vmul.f32 %v874, %v873
      %v876 = vmul.f32 0.5, %v875
      %v877 = vsub.f32 1.5, %v876
      %v878 = vmul.f32 %v873, %v877
      %vm879 = vweird.f32 %v862
      %vm880 = vweird.f32 %v873
      %vm881 = vmor %vm879, %vm880
      %v882 = vsel %vm881, %v873, %v878
      %v883 = vmul.f32 %v849, %v872
      %v884 = vmul.f32 %v850, %v882
      %v886 = vperm.slane %v831, 0
      %v888 = vmul.f32 %v883, %v886
      %v889 = vmul.f32 %v884, %v886
      %v891 = vperm.slane %v832, 0
      %v893 = vadd.f32 %v888, %v891
      %v894 = vadd.f32 %v889, %v891
      %v895 = vpack.c.bf16 %v894, %v893
      %v896 = vld [vmem:[%s780] sm:$0xf]
      %v897 = vld [vmem:[%s780 + $0x4] sm:$0xf]
      %v898 = vld [vmem:[%s780 + $0x8] sm:$0xf]
      %v899 = vld [vmem:[%s780 + $0xc] sm:$0xf]
      %v900 = vld [vmem:[%s783] sm:$0x1]
      %v902 = vperm.slane %v900, 0
      %v908 = vunpack.c.l.b16 %v896
      %v909 = vunpack.c.l.b16 %v897
      %v910 = vunpack.c.l.b16 %v898
      %v911 = vunpack.c.l.b16 %v899
      %v912 = vpack.c.b16 %v909, %v908
      %v913 = vpack.c.b16 %v911, %v910
      %v917 = vsel %vm833, %v895, 0
      %919 = vmatpush.bf16.msra.mxu0 0
      %920 = vmatpush.bf16.msra.mxu0 0
      %921 = vmatpush.bf16.msra.mxu0 0
      %922 = vmatpush.bf16.msra.mxu0 0
      %923 = vmatpush.bf16.msra.mxu0 0
      %924 = vmatpush.bf16.msra.mxu0 0
      %925 = vmatpush.bf16.msra.mxu0 %v913
      %926 = vmatpush.bf16.msra.mxu0 %v912
      %927 = vmatmul.bf16.gmra.mxu0 %v917
      %v928 = vpop.f32.mrf.mxu0
      %v929 = vadd.f32 %v902, %v928
      %v930 = vpop.f32.mrf.mxu0
      %v931 = vadd.f32 %v902, %v930
      %932 = vdwg.mxu0
      %v933 = vld [vmem:[%s788] sm:$0xf]
      %v934 = vld [vmem:[%s788 + $0x4] sm:$0xf]
      %v935 = vld [vmem:[%s788 + $0x8] sm:$0xf]
      %v936 = vld [vmem:[%s788 + $0xc] sm:$0xf]
      %v937 = vpack.c.bf16 %v931, %v929
      %939 = vrot.lane.b32.xlu0 %v937, 96
      %v940 = vpop.permute.xlu0 %939
      %vm941 = vcmask 130048
      %v943 = vsel %vm941, %v937, 0
      %v946 = vsel %vm941, %v940, 0
      %948 = vmatpush.bf16.xpose.msra.mxu0 0
      %949 = vmatpush.bf16.xpose.msra.mxu0 0
      %950 = vmatpush.bf16.xpose.msra.mxu0 0
      %951 = vmatpush.bf16.xpose.msra.mxu0 0
      %952 = vmatpush.bf16.xpose.msra.mxu0 0
      %953 = vmatpush.bf16.xpose.msra.mxu0 0
      %954 = vmatpush.bf16.xpose.msra.mxu0 0
      %955 = vmatpush.bf16.xpose.msra.mxu0 %v946
      %956 = vmatmul.bf16.gmra.mxu0 %v943
      %v957 = vpop.f32.mrf.mxu0
      %v958 = vadd.f32 0.0, %v957
      %v959 = vpop.f32.mrf.mxu0
      %v960 = vadd.f32 0.0, %v959
      %961 = vdwg.mxu0
      %v962 = vmul.f32 %v958, 0.25
      %v963 = vmul.f32 %v960, 0.25
      %v964 = vadd.f32 %v962, %v829
      %v965 = vadd.f32 %v963, %v830
      %v966 = vsel %vm941, %v964, -inf
      %967 = vmax.xlane.f32.xlu0 %v966
      %v968 = vpop.xlane.xlu0 %967
      %v969 = vsel %vm941, %v965, -inf
      %970 = vmax.xlane.f32.xlu0 %v969
      %v971 = vpop.xlane.xlu0 %970
      %v972 = vsub.f32 %v964, %v968
      %v973 = vsub.f32 %v965, %v971
      %v974 = vmul.f32 %v972, 1.442695
      %v975 = vpow.pop %v974
      %v976 = vmul.f32 %v973, 1.442695
      %v977 = vpow.pop %v976
      %v978 = vsel %vm941, %v975, 0.0
      %979 = vadd.xlane.f32.xlu0 %v978
      %v980 = vpop.xlane.xlu0 %979
      %v981 = vsel %vm941, %v977, 0.0
      %982 = vadd.xlane.f32.xlu0 %v981
      %v983 = vpop.xlane.xlu0 %982
      %v984 = vrcp.pop %v980
      %v985 = vmul.f32 %v980, %v984
      %v986 = vsub.f32 1.0, %v985
      %v987 = vmul.f32 %v984, %v986
      %v988 = vadd.f32 %v984, %v987
      %vm989 = vweird.f32 %v980
      %vm990 = vweird.f32 %v984
      %vm991 = vmor %vm989, %vm990
      %v992 = vsel %vm991, %v984, %v988
      %v993 = vand.u32 2147483647, %v980
      %vm994 = vcmp.eq.f32.partialorder %v993, 8.507059e+37
      %v995 = vand.u32 %v980, 2147483648
      %v996 = vor.u32 1.1754944e-38, %v995
      %v997 = vsel %vm994, %v996, %v992
      %v998 = vmul.f32 %v975, %v997
      %v999 = vrcp.pop %v983
      %v1000 = vmul.f32 %v983, %v999
      %v1001 = vsub.f32 1.0, %v1000
      %v1002 = vmul.f32 %v999, %v1001
      %v1003 = vadd.f32 %v999, %v1002
      %vm1004 = vweird.f32 %v983
      %vm1005 = vweird.f32 %v999
      %vm1006 = vmor %vm1004, %vm1005
      %v1007 = vsel %vm1006, %v999, %v1003
      %v1008 = vand.u32 2147483647, %v983
      %vm1009 = vcmp.eq.f32.partialorder %v1008, 8.507059e+37
      %v1010 = vand.u32 %v983, 2147483648
      %v1011 = vor.u32 1.1754944e-38, %v1010
      %v1012 = vsel %vm1009, %v1011, %v1007
      %v1013 = vmul.f32 %v977, %v1012
      %v1014 = vpack.c.bf16 %v1013, %v998
      %1015 = vrot.lane.b32.xlu0 %v937, 64
      %v1016 = vpop.permute.xlu0 %1015
      %v1019 = vsel %vm941, %v1014, 0
      %1021 = vmatpush.bf16.msra.mxu0 0
      %1022 = vmatpush.bf16.msra.mxu0 0
      %1023 = vmatpush.bf16.msra.mxu0 0
      %1024 = vmatpush.bf16.msra.mxu0 0
      %1025 = vmatpush.bf16.msra.mxu0 0
      %1026 = vmatpush.bf16.msra.mxu0 0
      %1027 = vmatpush.bf16.msra.mxu0 0
      %1028 = vmatpush.bf16.msra.mxu0 %v1016
      %1029 = vmatmul.bf16.gmra.mxu0 %v1019
      %v1030 = vpop.f32.mrf.mxu0
      %v1031 = vadd.f32 0.0, %v1030
      %v1032 = vpop.f32.mrf.mxu0
      %v1033 = vadd.f32 0.0, %v1032
      %1034 = vdwg.mxu0
      %v1035 = vpack.c.bf16 %v1033, %v1031
      %1036 = vrot.lane.b32.xlu0 %v937, 112
      %v1037 = vpop.permute.xlu0 %1036
      %1038 = vrot.lane.b32.xlu0 %v937, 80
      %v1039 = vpop.permute.xlu0 %1038
      %v1041 = vsel %vm941, %v1037, 0
      %v1044 = vsel %vm941, %v1039, 0
      %1046 = vmatpush.bf16.xpose.msra.mxu0 0
      %1047 = vmatpush.bf16.xpose.msra.mxu0 0
      %1048 = vmatpush.bf16.xpose.msra.mxu0 0
      %1049 = vmatpush.bf16.xpose.msra.mxu0 0
      %1050 = vmatpush.bf16.xpose.msra.mxu0 0
      %1051 = vmatpush.bf16.xpose.msra.mxu0 0
      %1052 = vmatpush.bf16.xpose.msra.mxu0 0
      %1053 = vmatpush.bf16.xpose.msra.mxu0 %v1044
      %1054 = vmatmul.bf16.gmra.mxu0 %v1041
      %v1055 = vpop.f32.mrf.mxu0
      %v1056 = vadd.f32 0.0, %v1055
      %v1057 = vpop.f32.mrf.mxu0
      %v1058 = vadd.f32 0.0, %v1057
      %1059 = vdwg.mxu0
      %v1060 = vmul.f32 %v1056, 0.25
      %v1061 = vmul.f32 %v1058, 0.25
      %v1062 = vadd.f32 %v1060, %v829
      %v1063 = vadd.f32 %v1061, %v830
      %v1064 = vsel %vm941, %v1062, -inf
      %1065 = vmax.xlane.f32.xlu0 %v1064
      %v1066 = vpop.xlane.xlu0 %1065
      %v1067 = vsel %vm941, %v1063, -inf
      %1068 = vmax.xlane.f32.xlu0 %v1067
      %v1069 = vpop.xlane.xlu0 %1068
      %v1070 = vsub.f32 %v1062, %v1066
      %v1071 = vsub.f32 %v1063, %v1069
      %v1072 = vmul.f32 %v1070, 1.442695
      %v1073 = vpow.pop %v1072
      %v1074 = vmul.f32 %v1071, 1.442695
      %v1075 = vpow.pop %v1074
      %v1076 = vsel %vm941, %v1073, 0.0
      %1077 = vadd.xlane.f32.xlu0 %v1076
      %v1078 = vpop.xlane.xlu0 %1077
      %v1079 = vsel %vm941, %v1075, 0.0
      %1080 = vadd.xlane.f32.xlu0 %v1079
      %v1081 = vpop.xlane.xlu0 %1080
      %v1082 = vrcp.pop %v1078
      %v1083 = vmul.f32 %v1078, %v1082
      %v1084 = vsub.f32 1.0, %v1083
      %v1085 = vmul.f32 %v1082, %v1084
      %v1086 = vadd.f32 %v1082, %v1085
      %vm1087 = vweird.f32 %v1078
      %vm1088 = vweird.f32 %v1082
      %vm1089 = vmor %vm1087, %vm1088
      %v1090 = vsel %vm1089, %v1082, %v1086
      %v1091 = vand.u32 2147483647, %v1078
      %vm1092 = vcmp.eq.f32.partialorder %v1091, 8.507059e+37
      %v1093 = vand.u32 %v1078, 2147483648
      %v1094 = vor.u32 1.1754944e-38, %v1093
      %v1095 = vsel %vm1092, %v1094, %v1090
      %v1096 = vmul.f32 %v1073, %v1095
      %v1097 = vrcp.pop %v1081
      %v1098 = vmul.f32 %v1081, %v1097
      %v1099 = vsub.f32 1.0, %v1098
      %v1100 = vmul.f32 %v1097, %v1099
      %v1101 = vadd.f32 %v1097, %v1100
      %vm1102 = vweird.f32 %v1081
      %vm1103 = vweird.f32 %v1097
      %vm1104 = vmor %vm1102, %vm1103
      %v1105 = vsel %vm1104, %v1097, %v1101
      %v1106 = vand.u32 2147483647, %v1081
      %vm1107 = vcmp.eq.f32.partialorder %v1106, 8.507059e+37
      %v1108 = vand.u32 %v1081, 2147483648
      %v1109 = vor.u32 1.1754944e-38, %v1108
      %v1110 = vsel %vm1107, %v1109, %v1105
      %v1111 = vmul.f32 %v1075, %v1110
      %v1112 = vpack.c.bf16 %v1111, %v1096
      %1113 = vrot.lane.b32.xlu0 %v937, 48
      %v1114 = vpop.permute.xlu0 %1113
      %v1117 = vsel %vm941, %v1112, 0
      %1119 = vmatpush.bf16.msra.mxu0 0
      %1120 = vmatpush.bf16.msra.mxu0 0
      %1121 = vmatpush.bf16.msra.mxu0 0
      %1122 = vmatpush.bf16.msra.mxu0 0
      %1123 = vmatpush.bf16.msra.mxu0 0
      %1124 = vmatpush.bf16.msra.mxu0 0
      %1125 = vmatpush.bf16.msra.mxu0 0
      %1126 = vmatpush.bf16.msra.mxu0 %v1114
      %1127 = vmatmul.bf16.gmra.mxu0 %v1117
      %v1128 = vpop.f32.mrf.mxu0
      %v1129 = vadd.f32 0.0, %v1128
      %v1130 = vpop.f32.mrf.mxu0
      %v1131 = vadd.f32 0.0, %v1130
      %1132 = vdwg.mxu0
      %v1133 = vpack.c.bf16 %v1131, %v1129
      %v1136 = vunpack.c.l.b16 %v935
      %v1137 = vunpack.c.l.b16 %v936
      %v1138 = vpack.c.b16 %v1137, %v1136
      %v1141 = vsel %vm941, %v1133, 0
      %1143 = vmatpush.bf16.msra.mxu0 0
      %1144 = vmatpush.bf16.msra.mxu0 0
      %1145 = vmatpush.bf16.msra.mxu0 0
      %1146 = vmatpush.bf16.msra.mxu0 0
      %1147 = vmatpush.bf16.msra.mxu0 0
      %1148 = vmatpush.bf16.msra.mxu0 0
      %1149 = vmatpush.bf16.msra.mxu0 0
      %1150 = vmatpush.bf16.msra.mxu0 %v1138
      %1151 = vmatmul.bf16.gmra.mxu0 %v1141
      %v1152 = vpop.f32.mrf.mxu0
      %v1153 = vadd.f32 0.0, %v1152
      %v1154 = vpop.f32.mrf.mxu0
      %v1155 = vadd.f32 0.0, %v1154
      %1156 = vdwg.mxu0
      %v1159 = vunpack.c.l.b16 %v933
      %v1160 = vunpack.c.l.b16 %v934
      %v1161 = vpack.c.b16 %v1160, %v1159
      %v1164 = vsel %vm941, %v1035, 0
      %1166 = vmatpush.bf16.msra.mxu0 0
      %1167 = vmatpush.bf16.msra.mxu0 0
      %1168 = vmatpush.bf16.msra.mxu0 0
      %1169 = vmatpush.bf16.msra.mxu0 0
      %1170 = vmatpush.bf16.msra.mxu0 0
      %1171 = vmatpush.bf16.msra.mxu0 0
      %1172 = vmatpush.bf16.msra.mxu0 0
      %1173 = vmatpush.bf16.msra.mxu0 %v1161
      %1174 = vmatmul.bf16.gmra.mxu0 %v1164
      %v1175 = vpop.f32.mrf.mxu0
      %v1176 = vadd.f32 %v1153, %v1175
      %v1177 = vpop.f32.mrf.mxu0
      %v1178 = vadd.f32 %v1155, %v1177
      %1179 = vdwg.mxu0
      %v1180 = vadd.f32 %v827, %v1176
      %v1181 = vadd.f32 %v828, %v1178
      %v1182 = vld [vmem:[%s791] sm:$0x1]
      %v1184 = vperm.slane %v1182, 0
      %v1186 = vadd.f32 %v1180, %v1184
      %v1187 = vadd.f32 %v1181, %v1184
      %v1188 = vld [vmem:[%s794] sm:$0x1]
      %v1189 = vld [vmem:[%s797] sm:$0x1]
      %v1190 = vsel %vm833, %v1186, 0.0
      %1191 = vadd.xlane.f32.xlu0 %v1190
      %v1192 = vpop.xlane.xlu0 %1191
      %v1193 = vsel %vm833, %v1187, 0.0
      %1194 = vadd.xlane.f32.xlu0 %v1193
      %v1195 = vpop.xlane.xlu0 %1194
      %v1196 = vmul.f32 %v1192, %v846
      %v1197 = vmul.f32 %v1195, %v846
      %v1198 = vsub.f32 %v1186, %v1196
      %v1199 = vsub.f32 %v1187, %v1197
      %v1200 = vmul.f32 %v1198, %v1198
      %v1201 = vmul.f32 %v1199, %v1199
      %v1202 = vsel %vm833, %v1200, 0.0
      %1203 = vadd.xlane.f32.xlu0 %v1202
      %v1204 = vpop.xlane.xlu0 %1203
      %v1205 = vsel %vm833, %v1201, 0.0
      %1206 = vadd.xlane.f32.xlu0 %v1205
      %v1207 = vpop.xlane.xlu0 %1206
      %v1208 = vmul.f32 %v1204, %v846
      %v1209 = vmul.f32 %v1207, %v846
      %v1210 = vadd.f32 %v1208, 1e-05
      %v1211 = vadd.f32 %v1209, 1e-05
      %v1212 = vrsqrt.pop %v1210
      %v1213 = vmul.f32 %v1212, %v1210
      %v1214 = vmul.f32 %v1213, %v1212
      %v1215 = vmul.f32 0.5, %v1214
      %v1216 = vsub.f32 1.5, %v1215
      %v1217 = vmul.f32 %v1212, %v1216
      %vm1218 = vweird.f32 %v1210
      %vm1219 = vweird.f32 %v1212
      %vm1220 = vmor %vm1218, %vm1219
      %v1221 = vsel %vm1220, %v1212, %v1217
      %v1222 = vrsqrt.pop %v1211
      %v1223 = vmul.f32 %v1222, %v1211
      %v1224 = vmul.f32 %v1223, %v1222
      %v1225 = vmul.f32 0.5, %v1224
      %v1226 = vsub.f32 1.5, %v1225
      %v1227 = vmul.f32 %v1222, %v1226
      %vm1228 = vweird.f32 %v1211
      %vm1229 = vweird.f32 %v1222
      %vm1230 = vmor %vm1228, %vm1229
      %v1231 = vsel %vm1230, %v1222, %v1227
      %v1232 = vmul.f32 %v1198, %v1221
      %v1233 = vmul.f32 %v1199, %v1231
      %v1235 = vperm.slane %v1188, 0
      %v1237 = vmul.f32 %v1232, %v1235
      %v1238 = vmul.f32 %v1233, %v1235
      %v1240 = vperm.slane %v1189, 0
      %v1242 = vadd.f32 %v1237, %v1240
      %v1243 = vadd.f32 %v1238, %v1240
      %v1244 = vpack.c.bf16 %v1243, %v1242
      %v1245 = vld [vmem:[%s802] sm:$0xf]
      %v1246 = vld [vmem:[%s802 + $0x4] sm:$0xf]
      %v1247 = vld [vmem:[%s802 + $0x8] sm:$0xf]
      %v1248 = vld [vmem:[%s802 + $0xc] sm:$0xf]
      %v1249 = vld [vmem:[%s805] sm:$0x1]
      %v1251 = vperm.slane %v1249, 0
      %v1257 = vunpack.c.l.b16 %v1245
      %v1258 = vunpack.c.l.b16 %v1246
      %v1259 = vunpack.c.l.b16 %v1247
      %v1260 = vunpack.c.l.b16 %v1248
      %v1261 = vpack.c.b16 %v1258, %v1257
      %v1262 = vpack.c.b16 %v1260, %v1259
      %v1266 = vsel %vm833, %v1244, 0
      %1268 = vmatpush.bf16.msra.mxu0 0
      %1269 = vmatpush.bf16.msra.mxu0 0
      %1270 = vmatpush.bf16.msra.mxu0 0
      %1271 = vmatpush.bf16.msra.mxu0 0
      %1272 = vmatpush.bf16.msra.mxu0 0
      %1273 = vmatpush.bf16.msra.mxu0 0
      %1274 = vmatpush.bf16.msra.mxu0 %v1262
      %1275 = vmatpush.bf16.msra.mxu0 %v1261
      %1276 = vmatmul.bf16.gmra.mxu0 %v1266
      %v1277 = vpop.f32.mrf.mxu0
      %v1278 = vadd.f32 %v1251, %v1277
      %v1279 = vpop.f32.mrf.mxu0
      %v1280 = vadd.f32 %v1251, %v1279
      %1281 = vdwg.mxu0
      %v1282 = vmul.f32 %v1278, %v1278
      %v1283 = vmul.f32 %v1280, %v1280
      %v1284 = vmul.f32 %v1278, %v1282
      %v1285 = vmul.f32 %v1280, %v1283
      %v1286 = vmul.f32 %v1284, 0.044715
      %v1287 = vmul.f32 %v1285, 0.044715
      %v1288 = vadd.f32 %v1278, %v1286
      %v1289 = vadd.f32 %v1280, %v1287
      %v1290 = vmul.f32 %v1288, 0.7978846
      %v1291 = vmul.f32 %v1289, 0.7978846
      %v1292 = vtanh.pop %v1290
      %v1293 = vtanh.pop %v1291
      %v1294 = vadd.f32 %v1292, 1.0
      %v1295 = vadd.f32 %v1293, 1.0
      %v1296 = vmul.f32 %v1294, 0.5
      %v1297 = vmul.f32 %v1295, 0.5
      %v1298 = vmul.f32 %v1278, %v1296
      %v1299 = vmul.f32 %v1280, %v1297
      %v1300 = vpack.c.bf16 %v1299, %v1298
      %v1301 = vld [vmem:[%s810] sm:$0xf]
      %v1302 = vld [vmem:[%s810 + $0x4] sm:$0xf]
      %v1303 = vld [vmem:[%s810 + $0x8] sm:$0xf]
      %v1304 = vld [vmem:[%s810 + $0xc] sm:$0xf]
      %v1305 = vld [vmem:[%s810 + $0x10] sm:$0xf]
      %v1306 = vld [vmem:[%s810 + $0x14] sm:$0xf]
      %v1307 = vld [vmem:[%s810 + $0x18] sm:$0xf]
      %v1308 = vld [vmem:[%s810 + $0x1c] sm:$0xf]
      %v1309 = vld [vmem:[%s810 + $0x20] sm:$0xf]
      %v1310 = vld [vmem:[%s810 + $0x24] sm:$0xf]
      %v1311 = vld [vmem:[%s810 + $0x28] sm:$0xf]
      %v1312 = vld [vmem:[%s810 + $0x2c] sm:$0xf]
      %v1313 = vld [vmem:[%s810 + $0x30] sm:$0xf]
      %v1314 = vld [vmem:[%s810 + $0x34] sm:$0xf]
      %v1315 = vld [vmem:[%s810 + $0x38] sm:$0xf]
      %v1316 = vld [vmem:[%s810 + $0x3c] sm:$0xf]
      %v1317 = vld [vmem:[%s813] sm:$0x1]
      %v1319 = vperm.slane %v1317, 0
      %v1337 = vunpack.c.l.b16 %v1301
      %v1338 = vunpack.c.l.b16 %v1302
      %v1339 = vunpack.c.l.b16 %v1303
      %v1340 = vunpack.c.l.b16 %v1304
      %v1341 = vunpack.c.l.b16 %v1305
      %v1342 = vunpack.c.l.b16 %v1306
      %v1343 = vunpack.c.l.b16 %v1307
      %v1344 = vunpack.c.l.b16 %v1308
      %v1345 = vunpack.c.l.b16 %v1309
      %v1346 = vunpack.c.l.b16 %v1310
      %v1347 = vunpack.c.l.b16 %v1311
      %v1348 = vunpack.c.l.b16 %v1312
      %v1349 = vunpack.c.l.b16 %v1313
      %v1350 = vunpack.c.l.b16 %v1314
      %v1351 = vunpack.c.l.b16 %v1315
      %v1352 = vunpack.c.l.b16 %v1316
      %v1353 = vpack.c.b16 %v1338, %v1337
      %v1354 = vpack.c.b16 %v1340, %v1339
      %v1355 = vpack.c.b16 %v1342, %v1341
      %v1356 = vpack.c.b16 %v1344, %v1343
      %v1357 = vpack.c.b16 %v1346, %v1345
      %v1358 = vpack.c.b16 %v1348, %v1347
      %v1359 = vpack.c.b16 %v1350, %v1349
      %v1360 = vpack.c.b16 %v1352, %v1351
      %1369 = vmatpush.bf16.msra.mxu0 %v1360
      %1370 = vmatpush.bf16.msra.mxu0 %v1359
      %1371 = vmatpush.bf16.msra.mxu0 %v1358
      %1372 = vmatpush.bf16.msra.mxu0 %v1357
      %1373 = vmatpush.bf16.msra.mxu0 %v1356
      %1374 = vmatpush.bf16.msra.mxu0 %v1355
      %1375 = vmatpush.bf16.msra.mxu0 %v1354
      %1376 = vmatpush.bf16.msra.mxu0 %v1353
      %1377 = vmatmul.bf16.gmra.mxu0 %v1300
      %v1378 = vpop.f32.mrf.mxu0
      %v1379 = vadd.f32 %v1319, %v1378
      %v1380 = vpop.f32.mrf.mxu0
      %v1381 = vadd.f32 %v1319, %v1380
      %1382 = vdwg.mxu0
      %v1383 = vadd.f32 %v1186, %v1379
      %v1384 = vadd.f32 %v1187, %v1381
      %1385 = vst.msk [vmem:[#allocation2] sm:$0xff] %vm833, %v1383
      %1386 = vst.msk [vmem:[#allocation2 + $0x8] sm:$0xff] %vm833, %v1384
      %p1387 = scmp.eq.s32.totalorder %s35, 1
      // Predicated region
      $region101: #{clipmvit_forward.5} parent=95 // pred_check
        %p1388 = pneg %p1387
      $region102: #{clipmvit_forward.5} parent=95 // pred_check_branch
        %1390 = sbr.rel (%p1388) target = $region104
      $region103: #{clipmvit_forward.5} parent=95 // pred_region
        %v1391 = vld [vmem:[%s15] sm:$0x1]
        %v1392 = vld [vmem:[%s16] sm:$0x1]
        %v1393 = vsel %vm833, %v1383, 0.0
        %1394 = vadd.xlane.f32.xlu0 %v1393
        %v1395 = vpop.xlane.xlu0 %1394
        %v1396 = vsel %vm833, %v1384, 0.0
        %1397 = vadd.xlane.f32.xlu0 %v1396
        %v1398 = vpop.xlane.xlu0 %1397
        %v1399 = vmul.f32 %v1395, %v846
        %v1400 = vmul.f32 %v1398, %v846
        %v1401 = vsub.f32 %v1383, %v1399
        %v1402 = vsub.f32 %v1384, %v1400
        %v1403 = vmul.f32 %v1401, %v1401
        %v1404 = vmul.f32 %v1402, %v1402
        %v1405 = vsel %vm833, %v1403, 0.0
        %1406 = vadd.xlane.f32.xlu0 %v1405
        %v1407 = vpop.xlane.xlu0 %1406
        %v1408 = vsel %vm833, %v1404, 0.0
        %1409 = vadd.xlane.f32.xlu0 %v1408
        %v1410 = vpop.xlane.xlu0 %1409
        %v1411 = vmul.f32 %v1407, %v846
        %v1412 = vmul.f32 %v1410, %v846
        %v1413 = vadd.f32 %v1411, 1e-05
        %v1414 = vadd.f32 %v1412, 1e-05
        %v1415 = vrsqrt.pop %v1413
        %v1416 = vmul.f32 %v1415, %v1413
        %v1417 = vmul.f32 %v1416, %v1415
        %v1418 = vmul.f32 0.5, %v1417
        %v1419 = vsub.f32 1.5, %v1418
        %v1420 = vmul.f32 %v1415, %v1419
        %vm1421 = vweird.f32 %v1413
        %vm1422 = vweird.f32 %v1415
        %vm1423 = vmor %vm1421, %vm1422
        %v1424 = vsel %vm1423, %v1415, %v1420
        %v1425 = vrsqrt.pop %v1414
        %v1426 = vmul.f32 %v1425, %v1414
        %v1427 = vmul.f32 %v1426, %v1425
        %v1428 = vmul.f32 0.5, %v1427
        %v1429 = vsub.f32 1.5, %v1428
        %v1430 = vmul.f32 %v1425, %v1429
        %vm1431 = vweird.f32 %v1414
        %vm1432 = vweird.f32 %v1425
        %vm1433 = vmor %vm1431, %vm1432
        %v1434 = vsel %vm1433, %v1425, %v1430
        %v1435 = vmul.f32 %v1401, %v1424
        %v1436 = vmul.f32 %v1402, %v1434
        %v1438 = vperm.slane %v1391, 0
        %v1440 = vmul.f32 %v1435, %v1438
        %v1441 = vmul.f32 %v1436, %v1438
        %v1443 = vperm.slane %v1392, 0
        %v1445 = vadd.f32 %v1440, %v1443
        %v1446 = vadd.f32 %v1441, %v1443
        %v1447 = vld [vmem:[%s769] sm:$0x1]
        %v1449 = vsel %vm941, %v1447, 0
        %1451 = vmatpush.msra.mxu0 0.0
        %1452 = vmatpush.msra.mxu0 0.0
        %1453 = vmatpush.msra.mxu0 0.0
        %1454 = vmatpush.msra.mxu0 0.0
        %1455 = vmatpush.msra.mxu0 0.0
        %1456 = vmatpush.msra.mxu0 0.0
        %1457 = vmatpush.msra.mxu0 0.0
        %1458 = vmatpush.msra.mxu0 0.0
        %1459 = vmatpush.msra.mxu0 0.0
        %1460 = vmatpush.msra.mxu0 0.0
        %1461 = vmatpush.msra.mxu0 0.0
        %1462 = vmatpush.msra.mxu0 0.0
        %1463 = vmatpush.msra.mxu0 0.0
        %1464 = vmatpush.msra.mxu0 0.0
        %1465 = vmatpush.msra.mxu0 %v1446
        %1466 = vmatpush.msra.mxu0 %v1445
        %1467 = vmatmul.f32.gmra.mxu0 %v1449
        %v1468 = vpop.f32.mrf.mxu0
        %v1469 = vadd.f32 0.0, %v1468
        %1470 = vdwg.mxu0
        %v1471 = vpack.c.bf16 %v1469, %v1469
        %v1472 = vld [vmem:[%s17] sm:$0xf]
        %v1473 = vld [vmem:[%s17 + $0x4] sm:$0xf]
        %v1474 = vld [vmem:[%s17 + $0x8] sm:$0xf]
        %v1475 = vld [vmem:[%s17 + $0xc] sm:$0xf]
        %v1476 = vld [vmem:[%s18] sm:$0x1]
        %v1481 = vunpack.c.l.b16 %v1472
        %v1482 = vunpack.c.l.b16 %v1473
        %v1483 = vunpack.c.l.b16 %v1474
        %v1484 = vunpack.c.l.b16 %v1475
        %v1485 = vpack.c.b16 %v1482, %v1481
        %v1486 = vpack.c.b16 %v1484, %v1483
        %v1490 = vsel %vm833, %v1471, 0
        %1492 = vmatpush.bf16.msra.mxu0 0
        %1493 = vmatpush.bf16.msra.mxu0 0
        %1494 = vmatpush.bf16.msra.mxu0 0
        %1495 = vmatpush.bf16.msra.mxu0 0
        %1496 = vmatpush.bf16.msra.mxu0 0
        %1497 = vmatpush.bf16.msra.mxu0 0
        %1498 = vmatpush.bf16.msra.mxu0 %v1486
        %1499 = vmatpush.bf16.msra.mxu0 %v1485
        %1500 = vmatmul.bf16.gmra.mxu0 %v1490
        %v1501 = vpop.f32.mrf.mxu0
        %v1502 = vadd.f32 %v1476, %v1501
        %v1503 = vpop.f32.mrf.mxu0
        %1504 = vdwg.mxu0
        %v1505 = vmul.f32 %v1502, %v1502
        %vm1506 = vcmask 253952
        %v1507 = vsel %vm1506, %v1505, 0.0
        %1508 = vadd.xlane.f32.xlu0 %v1507
        %v1509 = vpop.xlane.xlu0 %1508
        %v1510 = vmax.f32 %v1509, 1e-24
        %v1511 = vrsqrt.pop %v1510
        %v1512 = vmul.f32 %v1511, %v1510
        %v1513 = vmul.f32 %v1512, %v1511
        %v1514 = vmul.f32 0.5, %v1513
        %v1515 = vsub.f32 1.5, %v1514
        %v1516 = vmul.f32 %v1511, %v1515
        %vm1517 = vweird.f32 %v1510
        %vm1518 = vweird.f32 %v1511
        %vm1519 = vmor %vm1517, %vm1518
        %v1520 = vsel %vm1519, %v1511, %v1516
        %v1521 = vmul.f32 %v1502, %v1520
        %1522 = vst.msk [vmem:[%s816] sm:$0x1] %vm1506, %v1521
      $region104: #{clipmvit_forward.5} parent=95 // pred_fallthru
        _
      %p1523 = scmp.lt.s32.totalorder %s34, 1
      %s1524 = scalar_select %p1523, %s34, 1
      %s1525 = scalar_lea.vmem %s19, %s1524
      // Predicated region
      $region105: #{clipmvit_forward.5} parent=95 // pred_check
        %p1526 = pneg %p529
      $region106: #{clipmvit_forward.5} parent=95 // pred_check_branch
        %1528 = sbr.rel (%p1526) target = $region108
      $region107: #{clipmvit_forward.5} parent=95 // pred_region
        _
      $region108: #{clipmvit_forward.5} parent=95 // pred_fallthru
        _
    $region96: #{clipmvit_forward.5} parent=5 // pred_fallthru
      _
    %p1529 = scmp.le.s32.totalorder 2, %s25
    // Predicated region
    $region109: #{clipmvit_forward.5} parent=5 // pred_check
      %p1530 = pneg %p1529
    $region110: #{clipmvit_forward.5} parent=5 // pred_check_branch
      %1532 = sbr.rel (%p1530) target = $region112
    $region111: #{clipmvit_forward.5} parent=5 // pred_region
      %s1533 = ssub.s32 %s25, 2
      // Predicated region
      $region113: #{clipmvit_forward.5} parent=111 // pred_check
        %p1534 = pneg %p535
      $region114: #{clipmvit_forward.5} parent=111 // pred_check_branch
        %1536 = sbr.rel (%p1534) target = $region116
      $region115: #{clipmvit_forward.5} parent=111 // pred_region
        %p1537 = scmp.lt.s32.totalorder %s36, 1
        %s1538 = scalar_select %p1537, %s36, 1
        %s1539 = scalar_lea.vmem %s19, %s1538
      $region116: #{clipmvit_forward.5} parent=111 // pred_fallthru
        _
    $region112: #{clipmvit_forward.5} parent=5 // pred_fallthru
      _
  $region6: #{clipmvit_forward.5} parent=0 // loop_footer
    %s29 = sadd.s32 1, %s25
  $region7: #{clipmvit_forward.5} parent=0 // loop_footer_branch
    %24 = sbr.rel target = $region3
  $region8: #{clipmvit_forward.5} parent=0 // loop_exit
    _

// kernel: clipmvit_forward.6
$region0: #{clipmvit_forward.6}
  #allocation0 [shape = 'u32[]', space=smem, size = 0x4, offset = 0x4, fixed_abs, tag = 'smem constant byte address 0x4 - core index']
  #allocation1 [shape = 'u32[72,128]{1,0:T(1,128)}', space=vmem, size = 0x9000, scoped, tag = 'internal scratch']
  #allocation2 [shape = 'f32[8,32]{1,0:T(8,128)}', space=vmem, size = 0x1000, scoped, tag = 'scratch operand']
  %s0 = inlined_call_operand.vmem [shape: f32[2,8,32], index: 0, kind: input, shape index: {}]
  %s1 = inlined_call_operand.vmem [shape: f32[8,8], index: 1, kind: input, shape index: {}]
  %s2 = inlined_call_operand.vmem [shape: f32[2,1,8], index: 2, kind: input, shape index: {}]
  %s3 = inlined_call_operand.vmem [shape: f32[2,1,32], index: 3, kind: input, shape index: {}]
  %s4 = inlined_call_operand.vmem [shape: f32[2,1,32], index: 4, kind: input, shape index: {}]
  %s5 = inlined_call_operand.vmem [shape: bf16[2,32,96], index: 5, kind: input, shape index: {}]
  %s6 = inlined_call_operand.vmem [shape: f32[2,1,96], index: 6, kind: input, shape index: {}]
  %s7 = inlined_call_operand.vmem [shape: bf16[2,32,32], index: 7, kind: input, shape index: {}]
  %s8 = inlined_call_operand.vmem [shape: f32[2,1,32], index: 8, kind: input, shape index: {}]
  %s9 = inlined_call_operand.vmem [shape: f32[2,1,32], index: 9, kind: input, shape index: {}]
  %s10 = inlined_call_operand.vmem [shape: f32[2,1,32], index: 10, kind: input, shape index: {}]
  %s11 = inlined_call_operand.vmem [shape: bf16[2,32,128], index: 11, kind: input, shape index: {}]
  %s12 = inlined_call_operand.vmem [shape: f32[2,1,128], index: 12, kind: input, shape index: {}]
  %s13 = inlined_call_operand.vmem [shape: bf16[2,128,32], index: 13, kind: input, shape index: {}]
  %s14 = inlined_call_operand.vmem [shape: f32[2,1,32], index: 14, kind: input, shape index: {}]
  %s15 = inlined_call_operand.vmem [shape: f32[1,32], index: 15, kind: input, shape index: {}]
  %s16 = inlined_call_operand.vmem [shape: f32[1,32], index: 16, kind: input, shape index: {}]
  %s17 = inlined_call_operand.vmem [shape: bf16[32,32], index: 17, kind: input, shape index: {}]
  %s18 = inlined_call_operand.vmem [shape: f32[1,32], index: 18, kind: input, shape index: {}]
  %s19 = inlined_call_operand.vmem [shape: f32[2,1,32], index: 19, kind: output, shape index: {}]
  %s20 = sld [smem:[#allocation0]]
  $region117: #{clipmvit_forward.6} parent=0
    _
  %s22 = ssub.s32 1, %s20
  %s23 = scalar_select 0, %s22, %s20
  loop: start=0, step=1, limit=6
  $region2: #{clipmvit_forward.6} parent=0 // loop_pre_header
    _
  $region3: #{clipmvit_forward.6} parent=0 // loop_header
    %s25 = sphi 0, %s29
    %p26 = scmp.ge.s32.totalorder %s25, 6
    %s32 = sphi 0, %s44
    %s33 = sphi 0, %s40
    %s34 = sphi 0, %s32
    %s35 = sphi 0, %s33
    %s36 = sphi 0, %s34
    %s37 = sphi 0, %s35
    %s47 = sphi 0, %s49
    %s50 = sphi 0, %s47
    %s51 = sphi 0, %s50
    %s67 = sphi 0, %s51
    %s71 = sphi 0, %s71
    %s73 = sphi 0, %s71
    %s74 = sphi 0, %s73
    %s88 = sphi 0, %s74
    %s94 = sphi 0, %s96
    %s97 = sphi 0, %s94
    %s98 = sphi 0, %s97
    %s114 = sphi 0, %s98
    %s120 = sphi 0, %s122
    %s123 = sphi 0, %s120
    %s124 = sphi 0, %s123
    %s140 = sphi 0, %s124
    %s146 = sphi 0, %s148
    %s149 = sphi 0, %s146
    %s150 = sphi 0, %s149
    %s166 = sphi 0, %s150
    %s172 = sphi 0, %s174
    %s175 = sphi 0, %s172
    %s176 = sphi 0, %s175
    %s192 = sphi 0, %s176
    %s198 = sphi 0, %s200
    %s201 = sphi 0, %s198
    %s202 = sphi 0, %s201
    %s218 = sphi 0, %s202
    %s224 = sphi 0, %s226
    %s227 = sphi 0, %s224
    %s228 = sphi 0, %s227
    %s244 = sphi 0, %s228
    %s250 = sphi 0, %s252
    %s253 = sphi 0, %s250
    %s254 = sphi 0, %s253
    %s270 = sphi 0, %s254
    %s276 = sphi 0, %s278
    %s279 = sphi 0, %s276
    %s280 = sphi 0, %s279
    %s296 = sphi 0, %s280
    %s302 = sphi 0, %s304
    %s305 = sphi 0, %s302
    %s306 = sphi 0, %s305
    %s322 = sphi 0, %s306
    %s328 = sphi 0, %s330
    %s331 = sphi 0, %s328
    %s332 = sphi 0, %s331
    %s348 = sphi 0, %s332
    %s354 = sphi 0, %s356
    %s357 = sphi 0, %s354
    %s358 = sphi 0, %s357
    %s374 = sphi 0, %s358
    %s380 = sphi 0, %s382
    %s383 = sphi 0, %s380
    %s384 = sphi 0, %s383
    %s400 = sphi 0, %s384
    %s406 = sphi 0, %s408
    %s409 = sphi 0, %s406
    %s410 = sphi 0, %s409
    %s426 = sphi 0, %s410
    %s430 = sphi 0, %s430
    %s432 = sphi 0, %s430
    %s433 = sphi 0, %s432
    %s447 = sphi 0, %s433
    %s451 = sphi 0, %s451
    %s453 = sphi 0, %s451
    %s454 = sphi 0, %s453
    %s468 = sphi 0, %s454
    %s472 = sphi 0, %s472
    %s474 = sphi 0, %s472
    %s475 = sphi 0, %s474
    %s489 = sphi 0, %s475
    %s493 = sphi 0, %s493
    %s495 = sphi 0, %s493
    %s496 = sphi 0, %s495
    %s510 = sphi 0, %s496
    %s516 = sphi 0, %s518
    %s519 = sphi 0, %s516
    %s520 = sphi 0, %s519
    %s536 = sphi 0, %s520
  $region4: #{clipmvit_forward.6} parent=0 // loop_header_branch
    %28 = sbr.rel (%p26) target = $region8
  $region5: #{clipmvit_forward.6} parent=0 // loop_body
    %s30 = ssub.s32 %s25, 1
    %s31 = ssub.s32 %s25, 2
    %s38 = sadd.s32 1, %s33
    %p39 = scmp.ge.s32.totalorder %s38, 2
    %s40 = scalar_select %p39, 0, %s38
    %s41 = sadd.s32 1, %s32
    %s42 = scalar_select %p39, %s41, %s32
    %p43 = scmp.ge.s32.totalorder %s42, 2
    %s44 = scalar_select %p43, 0, %s42
    %s45 = ssub.s32 %s32, %s44
    %p46 = scmp.eq.s32.totalorder %s45, 0
    %s48 = sadd.s32 %s47, 1
    %s49 = scalar_select %p46, %s47, %s48
    %p52 = pneg %p46
    %p53 = scmp.eq.s32.totalorder %s25, 3
    %p54 = por %p52, %p53
    %p55 = scmp.ne.s32.totalorder %s47, %s50
    %p56 = scmp.eq.s32.totalorder %s25, 0
    %p57 = por %p55, %p56
    %p58 = scmp.ne.s32.totalorder %s47, %s50
    %p59 = scmp.eq.s32.totalorder %s30, 3
    %p60 = por %p58, %p59
    %p61 = scmp.ne.s32.totalorder %s50, %s51
    %p62 = scmp.eq.s32.totalorder %s30, 0
    %p63 = por %p61, %p62
    %p64 = scmp.ne.s32.totalorder %s50, %s51
    %p65 = scmp.eq.s32.totalorder %s31, 3
    %p66 = por %p64, %p65
    %p68 = scmp.ne.s32.totalorder %s51, %s67
    %p69 = scmp.eq.s32.totalorder %s31, 0
    %p70 = por %p68, %p69
    %s72 = sadd.s32 %s71, 1
    %p75 = scmp.eq.s32.totalorder %s25, 3
    %p76 = scmp.ne.s32.totalorder %s71, %s73
    %p77 = scmp.eq.s32.totalorder %s25, 0
    %p78 = por %p76, %p77
    %p79 = scmp.ne.s32.totalorder %s71, %s73
    %p80 = scmp.eq.s32.totalorder %s30, 3
    %p81 = por %p79, %p80
    %p82 = scmp.ne.s32.totalorder %s73, %s74
    %p83 = scmp.eq.s32.totalorder %s30, 0
    %p84 = por %p82, %p83
    %p85 = scmp.ne.s32.totalorder %s73, %s74
    %p86 = scmp.eq.s32.totalorder %s31, 3
    %p87 = por %p85, %p86
    %p89 = scmp.ne.s32.totalorder %s74, %s88
    %p90 = scmp.eq.s32.totalorder %s31, 0
    %p91 = por %p89, %p90
    %s92 = ssub.s32 %s32, %s44
    %p93 = scmp.eq.s32.totalorder %s92, 0
    %s95 = sadd.s32 %s94, 1
    %s96 = scalar_select %p93, %s94, %s95
    %p99 = pneg %p93
    %p100 = scmp.eq.s32.totalorder %s25, 3
    %p101 = por %p99, %p100
    %p102 = scmp.ne.s32.totalorder %s94, %s97
    %p103 = scmp.eq.s32.totalorder %s25, 0
    %p104 = por %p102, %p103
    %p105 = scmp.ne.s32.totalorder %s94, %s97
    %p106 = scmp.eq.s32.totalorder %s30, 3
    %p107 = por %p105, %p106
    %p108 = scmp.ne.s32.totalorder %s97, %s98
    %p109 = scmp.eq.s32.totalorder %s30, 0
    %p110 = por %p108, %p109
    %p111 = scmp.ne.s32.totalorder %s97, %s98
    %p112 = scmp.eq.s32.totalorder %s31, 3
    %p113 = por %p111, %p112
    %p115 = scmp.ne.s32.totalorder %s98, %s114
    %p116 = scmp.eq.s32.totalorder %s31, 0
    %p117 = por %p115, %p116
    %s118 = ssub.s32 %s33, %s40
    %p119 = scmp.eq.s32.totalorder %s118, 0
    %s121 = sadd.s32 %s120, 1
    %s122 = scalar_select %p119, %s120, %s121
    %p125 = pneg %p119
    %p126 = scmp.eq.s32.totalorder %s25, 3
    %p127 = por %p125, %p126
    %p128 = scmp.ne.s32.totalorder %s120, %s123
    %p129 = scmp.eq.s32.totalorder %s25, 0
    %p130 = por %p128, %p129
    %p131 = scmp.ne.s32.totalorder %s120, %s123
    %p132 = scmp.eq.s32.totalorder %s30, 3
    %p133 = por %p131, %p132
    %p134 = scmp.ne.s32.totalorder %s123, %s124
    %p135 = scmp.eq.s32.totalorder %s30, 0
    %p136 = por %p134, %p135
    %p137 = scmp.ne.s32.totalorder %s123, %s124
    %p138 = scmp.eq.s32.totalorder %s31, 3
    %p139 = por %p137, %p138
    %p141 = scmp.ne.s32.totalorder %s124, %s140
    %p142 = scmp.eq.s32.totalorder %s31, 0
    %p143 = por %p141, %p142
    %s144 = ssub.s32 %s33, %s40
    %p145 = scmp.eq.s32.totalorder %s144, 0
    %s147 = sadd.s32 %s146, 1
    %s148 = scalar_select %p145, %s146, %s147
    %p151 = pneg %p145
    %p152 = scmp.eq.s32.totalorder %s25, 3
    %p153 = por %p151, %p152
    %p154 = scmp.ne.s32.totalorder %s146, %s149
    %p155 = scmp.eq.s32.totalorder %s25, 0
    %p156 = por %p154, %p155
    %p157 = scmp.ne.s32.totalorder %s146, %s149
    %p158 = scmp.eq.s32.totalorder %s30, 3
    %p159 = por %p157, %p158
    %p160 = scmp.ne.s32.totalorder %s149, %s150
    %p161 = scmp.eq.s32.totalorder %s30, 0
    %p162 = por %p160, %p161
    %p163 = scmp.ne.s32.totalorder %s149, %s150
    %p164 = scmp.eq.s32.totalorder %s31, 3
    %p165 = por %p163, %p164
    %p167 = scmp.ne.s32.totalorder %s150, %s166
    %p168 = scmp.eq.s32.totalorder %s31, 0
    %p169 = por %p167, %p168
    %s170 = ssub.s32 %s33, %s40
    %p171 = scmp.eq.s32.totalorder %s170, 0
    %s173 = sadd.s32 %s172, 1
    %s174 = scalar_select %p171, %s172, %s173
    %p177 = pneg %p171
    %p178 = scmp.eq.s32.totalorder %s25, 3
    %p179 = por %p177, %p178
    %p180 = scmp.ne.s32.totalorder %s172, %s175
    %p181 = scmp.eq.s32.totalorder %s25, 0
    %p182 = por %p180, %p181
    %p183 = scmp.ne.s32.totalorder %s172, %s175
    %p184 = scmp.eq.s32.totalorder %s30, 3
    %p185 = por %p183, %p184
    %p186 = scmp.ne.s32.totalorder %s175, %s176
    %p187 = scmp.eq.s32.totalorder %s30, 0
    %p188 = por %p186, %p187
    %p189 = scmp.ne.s32.totalorder %s175, %s176
    %p190 = scmp.eq.s32.totalorder %s31, 3
    %p191 = por %p189, %p190
    %p193 = scmp.ne.s32.totalorder %s176, %s192
    %p194 = scmp.eq.s32.totalorder %s31, 0
    %p195 = por %p193, %p194
    %s196 = ssub.s32 %s33, %s40
    %p197 = scmp.eq.s32.totalorder %s196, 0
    %s199 = sadd.s32 %s198, 1
    %s200 = scalar_select %p197, %s198, %s199
    %p203 = pneg %p197
    %p204 = scmp.eq.s32.totalorder %s25, 3
    %p205 = por %p203, %p204
    %p206 = scmp.ne.s32.totalorder %s198, %s201
    %p207 = scmp.eq.s32.totalorder %s25, 0
    %p208 = por %p206, %p207
    %p209 = scmp.ne.s32.totalorder %s198, %s201
    %p210 = scmp.eq.s32.totalorder %s30, 3
    %p211 = por %p209, %p210
    %p212 = scmp.ne.s32.totalorder %s201, %s202
    %p213 = scmp.eq.s32.totalorder %s30, 0
    %p214 = por %p212, %p213
    %p215 = scmp.ne.s32.totalorder %s201, %s202
    %p216 = scmp.eq.s32.totalorder %s31, 3
    %p217 = por %p215, %p216
    %p219 = scmp.ne.s32.totalorder %s202, %s218
    %p220 = scmp.eq.s32.totalorder %s31, 0
    %p221 = por %p219, %p220
    %s222 = ssub.s32 %s33, %s40
    %p223 = scmp.eq.s32.totalorder %s222, 0
    %s225 = sadd.s32 %s224, 1
    %s226 = scalar_select %p223, %s224, %s225
    %p229 = pneg %p223
    %p230 = scmp.eq.s32.totalorder %s25, 3
    %p231 = por %p229, %p230
    %p232 = scmp.ne.s32.totalorder %s224, %s227
    %p233 = scmp.eq.s32.totalorder %s25, 0
    %p234 = por %p232, %p233
    %p235 = scmp.ne.s32.totalorder %s224, %s227
    %p236 = scmp.eq.s32.totalorder %s30, 3
    %p237 = por %p235, %p236
    %p238 = scmp.ne.s32.totalorder %s227, %s228
    %p239 = scmp.eq.s32.totalorder %s30, 0
    %p240 = por %p238, %p239
    %p241 = scmp.ne.s32.totalorder %s227, %s228
    %p242 = scmp.eq.s32.totalorder %s31, 3
    %p243 = por %p241, %p242
    %p245 = scmp.ne.s32.totalorder %s228, %s244
    %p246 = scmp.eq.s32.totalorder %s31, 0
    %p247 = por %p245, %p246
    %s248 = ssub.s32 %s33, %s40
    %p249 = scmp.eq.s32.totalorder %s248, 0
    %s251 = sadd.s32 %s250, 1
    %s252 = scalar_select %p249, %s250, %s251
    %p255 = pneg %p249
    %p256 = scmp.eq.s32.totalorder %s25, 3
    %p257 = por %p255, %p256
    %p258 = scmp.ne.s32.totalorder %s250, %s253
    %p259 = scmp.eq.s32.totalorder %s25, 0
    %p260 = por %p258, %p259
    %p261 = scmp.ne.s32.totalorder %s250, %s253
    %p262 = scmp.eq.s32.totalorder %s30, 3
    %p263 = por %p261, %p262
    %p264 = scmp.ne.s32.totalorder %s253, %s254
    %p265 = scmp.eq.s32.totalorder %s30, 0
    %p266 = por %p264, %p265
    %p267 = scmp.ne.s32.totalorder %s253, %s254
    %p268 = scmp.eq.s32.totalorder %s31, 3
    %p269 = por %p267, %p268
    %p271 = scmp.ne.s32.totalorder %s254, %s270
    %p272 = scmp.eq.s32.totalorder %s31, 0
    %p273 = por %p271, %p272
    %s274 = ssub.s32 %s33, %s40
    %p275 = scmp.eq.s32.totalorder %s274, 0
    %s277 = sadd.s32 %s276, 1
    %s278 = scalar_select %p275, %s276, %s277
    %p281 = pneg %p275
    %p282 = scmp.eq.s32.totalorder %s25, 3
    %p283 = por %p281, %p282
    %p284 = scmp.ne.s32.totalorder %s276, %s279
    %p285 = scmp.eq.s32.totalorder %s25, 0
    %p286 = por %p284, %p285
    %p287 = scmp.ne.s32.totalorder %s276, %s279
    %p288 = scmp.eq.s32.totalorder %s30, 3
    %p289 = por %p287, %p288
    %p290 = scmp.ne.s32.totalorder %s279, %s280
    %p291 = scmp.eq.s32.totalorder %s30, 0
    %p292 = por %p290, %p291
    %p293 = scmp.ne.s32.totalorder %s279, %s280
    %p294 = scmp.eq.s32.totalorder %s31, 3
    %p295 = por %p293, %p294
    %p297 = scmp.ne.s32.totalorder %s280, %s296
    %p298 = scmp.eq.s32.totalorder %s31, 0
    %p299 = por %p297, %p298
    %s300 = ssub.s32 %s33, %s40
    %p301 = scmp.eq.s32.totalorder %s300, 0
    %s303 = sadd.s32 %s302, 1
    %s304 = scalar_select %p301, %s302, %s303
    %p307 = pneg %p301
    %p308 = scmp.eq.s32.totalorder %s25, 3
    %p309 = por %p307, %p308
    %p310 = scmp.ne.s32.totalorder %s302, %s305
    %p311 = scmp.eq.s32.totalorder %s25, 0
    %p312 = por %p310, %p311
    %p313 = scmp.ne.s32.totalorder %s302, %s305
    %p314 = scmp.eq.s32.totalorder %s30, 3
    %p315 = por %p313, %p314
    %p316 = scmp.ne.s32.totalorder %s305, %s306
    %p317 = scmp.eq.s32.totalorder %s30, 0
    %p318 = por %p316, %p317
    %p319 = scmp.ne.s32.totalorder %s305, %s306
    %p320 = scmp.eq.s32.totalorder %s31, 3
    %p321 = por %p319, %p320
    %p323 = scmp.ne.s32.totalorder %s306, %s322
    %p324 = scmp.eq.s32.totalorder %s31, 0
    %p325 = por %p323, %p324
    %s326 = ssub.s32 %s33, %s40
    %p327 = scmp.eq.s32.totalorder %s326, 0
    %s329 = sadd.s32 %s328, 1
    %s330 = scalar_select %p327, %s328, %s329
    %p333 = pneg %p327
    %p334 = scmp.eq.s32.totalorder %s25, 3
    %p335 = por %p333, %p334
    %p336 = scmp.ne.s32.totalorder %s328, %s331
    %p337 = scmp.eq.s32.totalorder %s25, 0
    %p338 = por %p336, %p337
    %p339 = scmp.ne.s32.totalorder %s328, %s331
    %p340 = scmp.eq.s32.totalorder %s30, 3
    %p341 = por %p339, %p340
    %p342 = scmp.ne.s32.totalorder %s331, %s332
    %p343 = scmp.eq.s32.totalorder %s30, 0
    %p344 = por %p342, %p343
    %p345 = scmp.ne.s32.totalorder %s331, %s332
    %p346 = scmp.eq.s32.totalorder %s31, 3
    %p347 = por %p345, %p346
    %p349 = scmp.ne.s32.totalorder %s332, %s348
    %p350 = scmp.eq.s32.totalorder %s31, 0
    %p351 = por %p349, %p350
    %s352 = ssub.s32 %s33, %s40
    %p353 = scmp.eq.s32.totalorder %s352, 0
    %s355 = sadd.s32 %s354, 1
    %s356 = scalar_select %p353, %s354, %s355
    %p359 = pneg %p353
    %p360 = scmp.eq.s32.totalorder %s25, 3
    %p361 = por %p359, %p360
    %p362 = scmp.ne.s32.totalorder %s354, %s357
    %p363 = scmp.eq.s32.totalorder %s25, 0
    %p364 = por %p362, %p363
    %p365 = scmp.ne.s32.totalorder %s354, %s357
    %p366 = scmp.eq.s32.totalorder %s30, 3
    %p367 = por %p365, %p366
    %p368 = scmp.ne.s32.totalorder %s357, %s358
    %p369 = scmp.eq.s32.totalorder %s30, 0
    %p370 = por %p368, %p369
    %p371 = scmp.ne.s32.totalorder %s357, %s358
    %p372 = scmp.eq.s32.totalorder %s31, 3
    %p373 = por %p371, %p372
    %p375 = scmp.ne.s32.totalorder %s358, %s374
    %p376 = scmp.eq.s32.totalorder %s31, 0
    %p377 = por %p375, %p376
    %s378 = ssub.s32 %s33, %s40
    %p379 = scmp.eq.s32.totalorder %s378, 0
    %s381 = sadd.s32 %s380, 1
    %s382 = scalar_select %p379, %s380, %s381
    %p385 = pneg %p379
    %p386 = scmp.eq.s32.totalorder %s25, 3
    %p387 = por %p385, %p386
    %p388 = scmp.ne.s32.totalorder %s380, %s383
    %p389 = scmp.eq.s32.totalorder %s25, 0
    %p390 = por %p388, %p389
    %p391 = scmp.ne.s32.totalorder %s380, %s383
    %p392 = scmp.eq.s32.totalorder %s30, 3
    %p393 = por %p391, %p392
    %p394 = scmp.ne.s32.totalorder %s383, %s384
    %p395 = scmp.eq.s32.totalorder %s30, 0
    %p396 = por %p394, %p395
    %p397 = scmp.ne.s32.totalorder %s383, %s384
    %p398 = scmp.eq.s32.totalorder %s31, 3
    %p399 = por %p397, %p398
    %p401 = scmp.ne.s32.totalorder %s384, %s400
    %p402 = scmp.eq.s32.totalorder %s31, 0
    %p403 = por %p401, %p402
    %s404 = ssub.s32 %s33, %s40
    %p405 = scmp.eq.s32.totalorder %s404, 0
    %s407 = sadd.s32 %s406, 1
    %s408 = scalar_select %p405, %s406, %s407
    %p411 = pneg %p405
    %p412 = scmp.eq.s32.totalorder %s25, 3
    %p413 = por %p411, %p412
    %p414 = scmp.ne.s32.totalorder %s406, %s409
    %p415 = scmp.eq.s32.totalorder %s25, 0
    %p416 = por %p414, %p415
    %p417 = scmp.ne.s32.totalorder %s406, %s409
    %p418 = scmp.eq.s32.totalorder %s30, 3
    %p419 = por %p417, %p418
    %p420 = scmp.ne.s32.totalorder %s409, %s410
    %p421 = scmp.eq.s32.totalorder %s30, 0
    %p422 = por %p420, %p421
    %p423 = scmp.ne.s32.totalorder %s409, %s410
    %p424 = scmp.eq.s32.totalorder %s31, 3
    %p425 = por %p423, %p424
    %p427 = scmp.ne.s32.totalorder %s410, %s426
    %p428 = scmp.eq.s32.totalorder %s31, 0
    %p429 = por %p427, %p428
    %s431 = sadd.s32 %s430, 1
    %p434 = scmp.eq.s32.totalorder %s25, 3
    %p435 = scmp.ne.s32.totalorder %s430, %s432
    %p436 = scmp.eq.s32.totalorder %s25, 0
    %p437 = por %p435, %p436
    %p438 = scmp.ne.s32.totalorder %s430, %s432
    %p439 = scmp.eq.s32.totalorder %s30, 3
    %p440 = por %p438, %p439
    %p441 = scmp.ne.s32.totalorder %s432, %s433
    %p442 = scmp.eq.s32.totalorder %s30, 0
    %p443 = por %p441, %p442
    %p444 = scmp.ne.s32.totalorder %s432, %s433
    %p445 = scmp.eq.s32.totalorder %s31, 3
    %p446 = por %p444, %p445
    %p448 = scmp.ne.s32.totalorder %s433, %s447
    %p449 = scmp.eq.s32.totalorder %s31, 0
    %p450 = por %p448, %p449
    %s452 = sadd.s32 %s451, 1
    %p455 = scmp.eq.s32.totalorder %s25, 3
    %p456 = scmp.ne.s32.totalorder %s451, %s453
    %p457 = scmp.eq.s32.totalorder %s25, 0
    %p458 = por %p456, %p457
    %p459 = scmp.ne.s32.totalorder %s451, %s453
    %p460 = scmp.eq.s32.totalorder %s30, 3
    %p461 = por %p459, %p460
    %p462 = scmp.ne.s32.totalorder %s453, %s454
    %p463 = scmp.eq.s32.totalorder %s30, 0
    %p464 = por %p462, %p463
    %p465 = scmp.ne.s32.totalorder %s453, %s454
    %p466 = scmp.eq.s32.totalorder %s31, 3
    %p467 = por %p465, %p466
    %p469 = scmp.ne.s32.totalorder %s454, %s468
    %p470 = scmp.eq.s32.totalorder %s31, 0
    %p471 = por %p469, %p470
    %s473 = sadd.s32 %s472, 1
    %p476 = scmp.eq.s32.totalorder %s25, 3
    %p477 = scmp.ne.s32.totalorder %s472, %s474
    %p478 = scmp.eq.s32.totalorder %s25, 0
    %p479 = por %p477, %p478
    %p480 = scmp.ne.s32.totalorder %s472, %s474
    %p481 = scmp.eq.s32.totalorder %s30, 3
    %p482 = por %p480, %p481
    %p483 = scmp.ne.s32.totalorder %s474, %s475
    %p484 = scmp.eq.s32.totalorder %s30, 0
    %p485 = por %p483, %p484
    %p486 = scmp.ne.s32.totalorder %s474, %s475
    %p487 = scmp.eq.s32.totalorder %s31, 3
    %p488 = por %p486, %p487
    %p490 = scmp.ne.s32.totalorder %s475, %s489
    %p491 = scmp.eq.s32.totalorder %s31, 0
    %p492 = por %p490, %p491
    %s494 = sadd.s32 %s493, 1
    %p497 = scmp.eq.s32.totalorder %s25, 3
    %p498 = scmp.ne.s32.totalorder %s493, %s495
    %p499 = scmp.eq.s32.totalorder %s25, 0
    %p500 = por %p498, %p499
    %p501 = scmp.ne.s32.totalorder %s493, %s495
    %p502 = scmp.eq.s32.totalorder %s30, 3
    %p503 = por %p501, %p502
    %p504 = scmp.ne.s32.totalorder %s495, %s496
    %p505 = scmp.eq.s32.totalorder %s30, 0
    %p506 = por %p504, %p505
    %p507 = scmp.ne.s32.totalorder %s495, %s496
    %p508 = scmp.eq.s32.totalorder %s31, 3
    %p509 = por %p507, %p508
    %p511 = scmp.ne.s32.totalorder %s496, %s510
    %p512 = scmp.eq.s32.totalorder %s31, 0
    %p513 = por %p511, %p512
    %s514 = ssub.s32 %s32, %s44
    %p515 = scmp.eq.s32.totalorder %s514, 0
    %s517 = sadd.s32 %s516, 1
    %s518 = scalar_select %p515, %s516, %s517
    %p521 = pneg %p515
    %p522 = scmp.eq.s32.totalorder %s25, 3
    %p523 = por %p521, %p522
    %p524 = scmp.ne.s32.totalorder %s516, %s519
    %p525 = scmp.eq.s32.totalorder %s25, 0
    %p526 = por %p524, %p525
    %p527 = scmp.ne.s32.totalorder %s516, %s519
    %p528 = scmp.eq.s32.totalorder %s30, 3
    %p529 = por %p527, %p528
    %p530 = scmp.ne.s32.totalorder %s519, %s520
    %p531 = scmp.eq.s32.totalorder %s30, 0
    %p532 = por %p530, %p531
    %p533 = scmp.ne.s32.totalorder %s519, %s520
    %p534 = scmp.eq.s32.totalorder %s31, 3
    %p535 = por %p533, %p534
    %p537 = scmp.ne.s32.totalorder %s520, %s536
    %p538 = scmp.eq.s32.totalorder %s31, 0
    %p539 = por %p537, %p538
    %p540 = scmp.le.s32.totalorder 1, %s25
    %p541 = scmp.lt.s32.totalorder %s25, 5
    %p542 = pnand %p540, %p541
    %p543 = pneg %p542
    // Predicated region
    $region9: #{clipmvit_forward.6} parent=5 // pred_check
      _
    $region10: #{clipmvit_forward.6} parent=5 // pred_check_branch
      %545 = sbr.rel (%p542) target = $region12
    $region11: #{clipmvit_forward.6} parent=5 // pred_region
      %s546 = ssub.s32 %s25, 1
      // Predicated region
      $region13: #{clipmvit_forward.6} parent=11 // pred_check
        %p547 = pneg %p84
      $region14: #{clipmvit_forward.6} parent=11 // pred_check_branch
        %549 = sbr.rel (%p547) target = $region16
      $region15: #{clipmvit_forward.6} parent=11 // pred_region
        _
      $region16: #{clipmvit_forward.6} parent=11 // pred_fallthru
        _
      // Predicated region
      $region17: #{clipmvit_forward.6} parent=11 // pred_check
        %p550 = pneg %p443
      $region18: #{clipmvit_forward.6} parent=11 // pred_check_branch
        %552 = sbr.rel (%p550) target = $region20
      $region19: #{clipmvit_forward.6} parent=11 // pred_region
        _
      $region20: #{clipmvit_forward.6} parent=11 // pred_fallthru
        _
      // Predicated region
      $region21: #{clipmvit_forward.6} parent=11 // pred_check
        %p553 = pneg %p464
      $region22: #{clipmvit_forward.6} parent=11 // pred_check_branch
        %555 = sbr.rel (%p553) target = $region24
      $region23: #{clipmvit_forward.6} parent=11 // pred_region
        _
      $region24: #{clipmvit_forward.6} parent=11 // pred_fallthru
        _
      // Predicated region
      $region25: #{clipmvit_forward.6} parent=11 // pred_check
        %p556 = pneg %p485
      $region26: #{clipmvit_forward.6} parent=11 // pred_check_branch
        %558 = sbr.rel (%p556) target = $region28
      $region27: #{clipmvit_forward.6} parent=11 // pred_region
        _
      $region28: #{clipmvit_forward.6} parent=11 // pred_fallthru
        _
      // Predicated region
      $region29: #{clipmvit_forward.6} parent=11 // pred_check
        %p559 = pneg %p506
      $region30: #{clipmvit_forward.6} parent=11 // pred_check_branch
        %561 = sbr.rel (%p559) target = $region32
      $region31: #{clipmvit_forward.6} parent=11 // pred_region
        _
      $region32: #{clipmvit_forward.6} parent=11 // pred_fallthru
        _
    $region12: #{clipmvit_forward.6} parent=5 // pred_fallthru
      _
    %p562 = scmp.lt.s32.totalorder %s25, 4
    // Predicated region
    $region33: #{clipmvit_forward.6} parent=5 // pred_check
      %p563 = pneg %p562
    $region34: #{clipmvit_forward.6} parent=5 // pred_check_branch
      %565 = sbr.rel (%p563) target = $region36
    $region35: #{clipmvit_forward.6} parent=5 // pred_region
      // Predicated region
      $region37: #{clipmvit_forward.6} parent=35 // pred_check
        %p566 = pneg %p57
      $region38: #{clipmvit_forward.6} parent=35 // pred_check_branch
        %568 = sbr.rel (%p566) target = $region40
      $region39: #{clipmvit_forward.6} parent=35 // pred_region
        %p569 = scmp.lt.s32.totalorder %s32, 1
        %s570 = scalar_select %p569, %s32, 1
        %s571 = smul.addr %s570, 8
        %s572 = scalar_lea.vmem %s0, %s571
      $region40: #{clipmvit_forward.6} parent=35 // pred_fallthru
        _
      // Predicated region
      $region41: #{clipmvit_forward.6} parent=35 // pred_check
        %p573 = pneg %p104
      $region42: #{clipmvit_forward.6} parent=35 // pred_check_branch
        %575 = sbr.rel (%p573) target = $region44
      $region43: #{clipmvit_forward.6} parent=35 // pred_region
        %p576 = scmp.lt.s32.totalorder %s32, 1
        %s577 = scalar_select %p576, %s32, 1
        %s578 = scalar_lea.vmem %s2, %s577
      $region44: #{clipmvit_forward.6} parent=35 // pred_fallthru
        _
      // Predicated region
      $region45: #{clipmvit_forward.6} parent=35 // pred_check
        %p579 = pneg %p130
      $region46: #{clipmvit_forward.6} parent=35 // pred_check_branch
        %581 = sbr.rel (%p579) target = $region48
      $region47: #{clipmvit_forward.6} parent=35 // pred_region
        %p582 = scmp.lt.s32.totalorder %s33, 1
        %s583 = scalar_select %p582, %s33, 1
        %s584 = scalar_lea.vmem %s3, %s583
      $region48: #{clipmvit_forward.6} parent=35 // pred_fallthru
        _
      // Predicated region
      $region49: #{clipmvit_forward.6} parent=35 // pred_check
        %p585 = pneg %p156
      $region50: #{clipmvit_forward.6} parent=35 // pred_check_branch
        %587 = sbr.rel (%p585) target = $region52
      $region51: #{clipmvit_forward.6} parent=35 // pred_region
        %p588 = scmp.lt.s32.totalorder %s33, 1
        %s589 = scalar_select %p588, %s33, 1
        %s590 = scalar_lea.vmem %s4, %s589
      $region52: #{clipmvit_forward.6} parent=35 // pred_fallthru
        _
      // Predicated region
      $region53: #{clipmvit_forward.6} parent=35 // pred_check
        %p591 = pneg %p182
      $region54: #{clipmvit_forward.6} parent=35 // pred_check_branch
        %593 = sbr.rel (%p591) target = $region56
      $region55: #{clipmvit_forward.6} parent=35 // pred_region
        %p594 = scmp.lt.s32.totalorder %s33, 1
        %s595 = scalar_select %p594, %s33, 1
        %s596 = smul.addr %s595, 4
        %s597 = smul.addr %s596, 4
        %s598 = scalar_lea.vmem %s5, %s597
      $region56: #{clipmvit_forward.6} parent=35 // pred_fallthru
        _
      // Predicated region
      $region57: #{clipmvit_forward.6} parent=35 // pred_check
        %p599 = pneg %p208
      $region58: #{clipmvit_forward.6} parent=35 // pred_check_branch
        %601 = sbr.rel (%p599) target = $region60
      $region59: #{clipmvit_forward.6} parent=35 // pred_region
        %p602 = scmp.lt.s32.totalorder %s33, 1
        %s603 = scalar_select %p602, %s33, 1
        %s604 = scalar_lea.vmem %s6, %s603
      $region60: #{clipmvit_forward.6} parent=35 // pred_fallthru
        _
      // Predicated region
      $region61: #{clipmvit_forward.6} parent=35 // pred_check
        %p605 = pneg %p234
      $region62: #{clipmvit_forward.6} parent=35 // pred_check_branch
        %607 = sbr.rel (%p605) target = $region64
      $region63: #{clipmvit_forward.6} parent=35 // pred_region
        %p608 = scmp.lt.s32.totalorder %s33, 1
        %s609 = scalar_select %p608, %s33, 1
        %s610 = smul.addr %s609, 4
        %s611 = smul.addr %s610, 4
        %s612 = scalar_lea.vmem %s7, %s611
      $region64: #{clipmvit_forward.6} parent=35 // pred_fallthru
        _
      // Predicated region
      $region65: #{clipmvit_forward.6} parent=35 // pred_check
        %p613 = pneg %p260
      $region66: #{clipmvit_forward.6} parent=35 // pred_check_branch
        %615 = sbr.rel (%p613) target = $region68
      $region67: #{clipmvit_forward.6} parent=35 // pred_region
        %p616 = scmp.lt.s32.totalorder %s33, 1
        %s617 = scalar_select %p616, %s33, 1
        %s618 = scalar_lea.vmem %s8, %s617
      $region68: #{clipmvit_forward.6} parent=35 // pred_fallthru
        _
      // Predicated region
      $region69: #{clipmvit_forward.6} parent=35 // pred_check
        %p619 = pneg %p286
      $region70: #{clipmvit_forward.6} parent=35 // pred_check_branch
        %621 = sbr.rel (%p619) target = $region72
      $region71: #{clipmvit_forward.6} parent=35 // pred_region
        %p622 = scmp.lt.s32.totalorder %s33, 1
        %s623 = scalar_select %p622, %s33, 1
        %s624 = scalar_lea.vmem %s9, %s623
      $region72: #{clipmvit_forward.6} parent=35 // pred_fallthru
        _
      // Predicated region
      $region73: #{clipmvit_forward.6} parent=35 // pred_check
        %p625 = pneg %p312
      $region74: #{clipmvit_forward.6} parent=35 // pred_check_branch
        %627 = sbr.rel (%p625) target = $region76
      $region75: #{clipmvit_forward.6} parent=35 // pred_region
        %p628 = scmp.lt.s32.totalorder %s33, 1
        %s629 = scalar_select %p628, %s33, 1
        %s630 = scalar_lea.vmem %s10, %s629
      $region76: #{clipmvit_forward.6} parent=35 // pred_fallthru
        _
      // Predicated region
      $region77: #{clipmvit_forward.6} parent=35 // pred_check
        %p631 = pneg %p338
      $region78: #{clipmvit_forward.6} parent=35 // pred_check_branch
        %633 = sbr.rel (%p631) target = $region80
      $region79: #{clipmvit_forward.6} parent=35 // pred_region
        %p634 = scmp.lt.s32.totalorder %s33, 1
        %s635 = scalar_select %p634, %s33, 1
        %s636 = smul.addr %s635, 4
        %s637 = smul.addr %s636, 4
        %s638 = scalar_lea.vmem %s11, %s637
      $region80: #{clipmvit_forward.6} parent=35 // pred_fallthru
        _
      // Predicated region
      $region81: #{clipmvit_forward.6} parent=35 // pred_check
        %p639 = pneg %p364
      $region82: #{clipmvit_forward.6} parent=35 // pred_check_branch
        %641 = sbr.rel (%p639) target = $region84
      $region83: #{clipmvit_forward.6} parent=35 // pred_region
        %p642 = scmp.lt.s32.totalorder %s33, 1
        %s643 = scalar_select %p642, %s33, 1
        %s644 = scalar_lea.vmem %s12, %s643
      $region84: #{clipmvit_forward.6} parent=35 // pred_fallthru
        _
      // Predicated region
      $region85: #{clipmvit_forward.6} parent=35 // pred_check
        %p645 = pneg %p390
      $region86: #{clipmvit_forward.6} parent=35 // pred_check_branch
        %647 = sbr.rel (%p645) target = $region88
      $region87: #{clipmvit_forward.6} parent=35 // pred_region
        %p648 = scmp.lt.s32.totalorder %s33, 1
        %s649 = scalar_select %p648, %s33, 1
        %s650 = smul.addr %s649, 16
        %s651 = smul.addr %s650, 4
        %s652 = scalar_lea.vmem %s13, %s651
      $region88: #{clipmvit_forward.6} parent=35 // pred_fallthru
        _
      // Predicated region
      $region89: #{clipmvit_forward.6} parent=35 // pred_check
        %p653 = pneg %p416
      $region90: #{clipmvit_forward.6} parent=35 // pred_check_branch
        %655 = sbr.rel (%p653) target = $region92
      $region91: #{clipmvit_forward.6} parent=35 // pred_region
        %p656 = scmp.lt.s32.totalorder %s33, 1
        %s657 = scalar_select %p656, %s33, 1
        %s658 = scalar_lea.vmem %s14, %s657
      $region92: #{clipmvit_forward.6} parent=35 // pred_fallthru
        _
    $region36: #{clipmvit_forward.6} parent=5 // pred_fallthru
      _
    %p659 = scmp.le.s32.totalorder 1, %s25
    %p660 = scmp.lt.s32.totalorder %s25, 5
    %p661 = pnand %p659, %p660
    %p662 = pneg %p661
    // Predicated region
    $region93: #{clipmvit_forward.6} parent=5 // pred_check
      _
    $region94: #{clipmvit_forward.6} parent=5 // pred_check_branch
      %664 = sbr.rel (%p661) target = $region96
    $region95: #{clipmvit_forward.6} parent=5 // pred_region
      %s665 = ssub.s32 %s25, 1
      %p666 = scmp.lt.s32.totalorder %s34, 1
      %s667 = scalar_select %p666, %s34, 1
      %s668 = smul.addr %s667, 8
      %s669 = scalar_lea.vmem %s0, %s668
      %p670 = pneg %p63
      %p671 = pneg %p60
      %p672 = pneg %p84
      %p673 = pneg %p81
      %p674 = scmp.lt.s32.totalorder %s34, 1
      %s675 = scalar_select %p674, %s34, 1
      %s676 = scalar_lea.vmem %s2, %s675
      %p677 = pneg %p110
      %p678 = pneg %p107
      %p679 = scmp.lt.s32.totalorder %s35, 1
      %s680 = scalar_select %p679, %s35, 1
      %s681 = scalar_lea.vmem %s3, %s680
      %p682 = pneg %p136
      %p683 = pneg %p133
      %p684 = scmp.lt.s32.totalorder %s35, 1
      %s685 = scalar_select %p684, %s35, 1
      %s686 = scalar_lea.vmem %s4, %s685
      %p687 = pneg %p162
      %p688 = pneg %p159
      %p689 = scmp.lt.s32.totalorder %s35, 1
      %s690 = scalar_select %p689, %s35, 1
      %s691 = smul.addr %s690, 4
      %s692 = smul.addr %s691, 4
      %s693 = scalar_lea.vmem %s5, %s692
      %p694 = pneg %p188
      %p695 = pneg %p185
      %p696 = scmp.lt.s32.totalorder %s35, 1
      %s697 = scalar_select %p696, %s35, 1
      %s698 = scalar_lea.vmem %s6, %s697
      %p699 = pneg %p214
      %p700 = pneg %p211
      %p701 = scmp.lt.s32.totalorder %s35, 1
      %s702 = scalar_select %p701, %s35, 1
      %s703 = smul.addr %s702, 4
      %s704 = smul.addr %s703, 4
      %s705 = scalar_lea.vmem %s7, %s704
      %p706 = pneg %p240
      %p707 = pneg %p237
      %p708 = scmp.lt.s32.totalorder %s35, 1
      %s709 = scalar_select %p708, %s35, 1
      %s710 = scalar_lea.vmem %s8, %s709
      %p711 = pneg %p266
      %p712 = pneg %p263
      %p713 = scmp.lt.s32.totalorder %s35, 1
      %s714 = scalar_select %p713, %s35, 1
      %s715 = scalar_lea.vmem %s9, %s714
      %p716 = pneg %p292
      %p717 = pneg %p289
      %p718 = scmp.lt.s32.totalorder %s35, 1
      %s719 = scalar_select %p718, %s35, 1
      %s720 = scalar_lea.vmem %s10, %s719
      %p721 = pneg %p318
      %p722 = pneg %p315
      %p723 = scmp.lt.s32.totalorder %s35, 1
      %s724 = scalar_select %p723, %s35, 1
      %s725 = smul.addr %s724, 4
      %s726 = smul.addr %s725, 4
      %s727 = scalar_lea.vmem %s11, %s726
      %p728 = pneg %p344
      %p729 = pneg %p341
      %p730 = scmp.lt.s32.totalorder %s35, 1
      %s731 = scalar_select %p730, %s35, 1
      %s732 = scalar_lea.vmem %s12, %s731
      %p733 = pneg %p370
      %p734 = pneg %p367
      %p735 = scmp.lt.s32.totalorder %s35, 1
      %s736 = scalar_select %p735, %s35, 1
      %s737 = smul.addr %s736, 16
      %s738 = smul.addr %s737, 4
      %s739 = scalar_lea.vmem %s13, %s738
      %p740 = pneg %p396
      %p741 = pneg %p393
      %p742 = scmp.lt.s32.totalorder %s35, 1
      %s743 = scalar_select %p742, %s35, 1
      %s744 = scalar_lea.vmem %s14, %s743
      %p745 = pneg %p422
      %p746 = pneg %p419
      %p747 = pneg %p443
      %p748 = pneg %p440
      %p749 = pneg %p464
      %p750 = pneg %p461
      %p751 = pneg %p485
      %p752 = pneg %p482
      %p753 = pneg %p506
      %p754 = pneg %p503
      %p755 = pneg %p532
      %p756 = pneg %p529
      %p757 = scmp.lt.s32.totalorder %s34, 1
      %s758 = scalar_select %p757, %s34, 1
      %s759 = scalar_lea.vmem %s19, %s758
      %p760 = scmp.lt.s32.totalorder %s34, 1
      %s761 = scalar_select %p760, %s34, 1
      %s762 = smul.addr %s761, 8
      %s763 = scalar_lea.vmem %s0, %s762
      %p764 = scmp.lt.s32.totalorder %s34, 1
      %s765 = scalar_select %p764, %s34, 1
      %s766 = scalar_lea.vmem %s2, %s765
      %p767 = scmp.lt.s32.totalorder %s35, 1
      %s768 = scalar_select %p767, %s35, 1
      %s769 = scalar_lea.vmem %s3, %s768
      %p770 = scmp.lt.s32.totalorder %s35, 1
      %s771 = scalar_select %p770, %s35, 1
      %s772 = scalar_lea.vmem %s4, %s771
      %p773 = scmp.lt.s32.totalorder %s35, 1
      %s774 = scalar_select %p773, %s35, 1
      %s775 = smul.addr %s774, 4
      %s776 = smul.addr %s775, 4
      %s777 = scalar_lea.vmem %s5, %s776
      %p778 = scmp.lt.s32.totalorder %s35, 1
      %s779 = scalar_select %p778, %s35, 1
      %s780 = scalar_lea.vmem %s6, %s779
      %p781 = scmp.lt.s32.totalorder %s35, 1
      %s782 = scalar_select %p781, %s35, 1
      %s783 = smul.addr %s782, 4
      %s784 = smul.addr %s783, 4
      %s785 = scalar_lea.vmem %s7, %s784
      %p786 = scmp.lt.s32.totalorder %s35, 1
      %s787 = scalar_select %p786, %s35, 1
      %s788 = scalar_lea.vmem %s8, %s787
      %p789 = scmp.lt.s32.totalorder %s35, 1
      %s790 = scalar_select %p789, %s35, 1
      %s791 = scalar_lea.vmem %s9, %s790
      %p792 = scmp.lt.s32.totalorder %s35, 1
      %s793 = scalar_select %p792, %s35, 1
      %s794 = scalar_lea.vmem %s10, %s793
      %p795 = scmp.lt.s32.totalorder %s35, 1
      %s796 = scalar_select %p795, %s35, 1
      %s797 = smul.addr %s796, 4
      %s798 = smul.addr %s797, 4
      %s799 = scalar_lea.vmem %s11, %s798
      %p800 = scmp.lt.s32.totalorder %s35, 1
      %s801 = scalar_select %p800, %s35, 1
      %s802 = scalar_lea.vmem %s12, %s801
      %p803 = scmp.lt.s32.totalorder %s35, 1
      %s804 = scalar_select %p803, %s35, 1
      %s805 = smul.addr %s804, 16
      %s806 = smul.addr %s805, 4
      %s807 = scalar_lea.vmem %s13, %s806
      %p808 = scmp.lt.s32.totalorder %s35, 1
      %s809 = scalar_select %p808, %s35, 1
      %s810 = scalar_lea.vmem %s14, %s809
      %p811 = scmp.lt.s32.totalorder %s34, 1
      %s812 = scalar_select %p811, %s34, 1
      %s813 = scalar_lea.vmem %s19, %s812
      %p815 = scmp.eq.s32.totalorder %s35, 0
      // Predicated region
      $region97: #{clipmvit_forward.6} parent=95 // pred_check
        %p816 = pneg %p815
      $region98: #{clipmvit_forward.6} parent=95 // pred_check_branch
        %818 = sbr.rel (%p816) target = $region100
      $region99: #{clipmvit_forward.6} parent=95 // pred_region
        %v819 = vld [vmem:[%s763] sm:$0xff]
        %vm820 = vcmask 261120
        %821 = vst.msk [vmem:[#allocation2] sm:$0xff] %vm820, %v819
      $region100: #{clipmvit_forward.6} parent=95 // pred_fallthru
        _
      %v822 = vld [vmem:[#allocation2] sm:$0xff]
      %v823 = vld [vmem:[%s1] sm:$0xff]
      %v824 = vld [vmem:[%s769] sm:$0x1]
      %v825 = vld [vmem:[%s772] sm:$0x1]
      %vm826 = vcmask 261120
      %v827 = vsel %vm826, %v822, 0.0
      %828 = vadd.xlane.f32.xlu0 %v827
      %v829 = vpop.xlane.xlu0 %828
      %v830 = vrcp.pop 32.0
      %v831 = vmul.f32 32.0, %v830
      %v832 = vsub.f32 1.0, %v831
      %v833 = vmul.f32 %v830, %v832
      %v834 = vadd.f32 %v830, %v833
      %vm835 = vweird.f32 %v830
      %v836 = vsel %vm835, %v830, %v834
      %v837 = vmul.f32 %v829, %v836
      %v838 = vsub.f32 %v822, %v837
      %v839 = vmul.f32 %v838, %v838
      %v840 = vsel %vm826, %v839, 0.0
      %841 = vadd.xlane.f32.xlu0 %v840
      %v842 = vpop.xlane.xlu0 %841
      %v843 = vmul.f32 %v842, %v836
      %v844 = vadd.f32 %v843, 1e-05
      %v845 = vrsqrt.pop %v844
      %v846 = vmul.f32 %v845, %v844
      %v847 = vmul.f32 %v846, %v845
      %v848 = vmul.f32 0.5, %v847
      %v849 = vsub.f32 1.5, %v848
      %v850 = vmul.f32 %v845, %v849
      %vm851 = vweird.f32 %v844
      %vm852 = vweird.f32 %v845
      %vm853 = vmor %vm851, %vm852
      %v854 = vsel %vm853, %v845, %v850
      %v855 = vmul.f32 %v838, %v854
      %v857 = vperm.slane %v824, 0
      %v859 = vmul.f32 %v855, %v857
      %v861 = vperm.slane %v825, 0
      %v863 = vadd.f32 %v859, %v861
      %v864 = vpack.c.bf16 %v863, %v863
      %v865 = vld [vmem:[%s777] sm:$0xf]
      %v866 = vld [vmem:[%s777 + $0x4] sm:$0xf]
      %v867 = vld [vmem:[%s777 + $0x8] sm:$0xf]
      %v868 = vld [vmem:[%s777 + $0xc] sm:$0xf]
      %v869 = vld [vmem:[%s780] sm:$0x1]
      %v871 = vperm.slane %v869, 0
      %v877 = vunpack.c.l.b16 %v865
      %v878 = vunpack.c.l.b16 %v866
      %v879 = vunpack.c.l.b16 %v867
      %v880 = vunpack.c.l.b16 %v868
      %v881 = vpack.c.b16 %v878, %v877
      %v882 = vpack.c.b16 %v880, %v879
      %v886 = vsel %vm826, %v864, 0
      %888 = vmatpush.bf16.msra.mxu0 0
      %889 = vmatpush.bf16.msra.mxu0 0
      %890 = vmatpush.bf16.msra.mxu0 0
      %891 = vmatpush.bf16.msra.mxu0 0
      %892 = vmatpush.bf16.msra.mxu0 0
      %893 = vmatpush.bf16.msra.mxu0 0
      %894 = vmatpush.bf16.msra.mxu0 %v882
      %895 = vmatpush.bf16.msra.mxu0 %v881
      %896 = vmatmul.bf16.gmra.mxu0 %v886
      %v897 = vpop.f32.mrf.mxu0
      %v898 = vadd.f32 %v871, %v897
      %v899 = vpop.f32.mrf.mxu0
      %900 = vdwg.mxu0
      %v901 = vld [vmem:[%s785] sm:$0xf]
      %v902 = vld [vmem:[%s785 + $0x4] sm:$0xf]
      %v903 = vld [vmem:[%s785 + $0x8] sm:$0xf]
      %v904 = vld [vmem:[%s785 + $0xc] sm:$0xf]
      %v905 = vpack.c.bf16 %v898, %v898
      %907 = vrot.lane.b32.xlu0 %v905, 96
      %v908 = vpop.permute.xlu0 %907
      %vm909 = vcmask 130048
      %v911 = vsel %vm909, %v905, 0
      %v914 = vsel %vm909, %v908, 0
      %916 = vmatpush.bf16.xpose.msra.mxu0 0
      %917 = vmatpush.bf16.xpose.msra.mxu0 0
      %918 = vmatpush.bf16.xpose.msra.mxu0 0
      %919 = vmatpush.bf16.xpose.msra.mxu0 0
      %920 = vmatpush.bf16.xpose.msra.mxu0 0
      %921 = vmatpush.bf16.xpose.msra.mxu0 0
      %922 = vmatpush.bf16.xpose.msra.mxu0 0
      %923 = vmatpush.bf16.xpose.msra.mxu0 %v914
      %924 = vmatmul.bf16.gmra.mxu0 %v911
      %v925 = vpop.f32.mrf.mxu0
      %v926 = vadd.f32 0.0, %v925
      %v927 = vpop.f32.mrf.mxu0
      %928 = vdwg.mxu0
      %v929 = vmul.f32 %v926, 0.25
      %v930 = vadd.f32 %v929, %v823
      %vm931 = vcmask 64512
      %v932 = vsel %vm931, %v930, -inf
      %933 = vmax.xlane.f32.xlu0 %v932
      %v934 = vpop.xlane.xlu0 %933
      %v935 = vsub.f32 %v930, %v934
      %v936 = vmul.f32 %v935, 1.442695
      %v937 = vpow.pop %v936
      %v938 = vsel %vm931, %v937, 0.0
      %939 = vadd.xlane.f32.xlu0 %v938
      %v940 = vpop.xlane.xlu0 %939
      %v941 = vrcp.pop %v940
      %v942 = vmul.f32 %v940, %v941
      %v943 = vsub.f32 1.0, %v942
      %v944 = vmul.f32 %v941, %v943
      %v945 = vadd.f32 %v941, %v944
      %vm946 = vweird.f32 %v940
      %vm947 = vweird.f32 %v941
      %vm948 = vmor %vm946, %vm947
      %v949 = vsel %vm948, %v941, %v945
      %v950 = vand.u32 2147483647, %v940
      %vm951 = vcmp.eq.f32.partialorder %v950, 8.507059e+37
      %v952 = vand.u32 %v940, 2147483648
      %v953 = vor.u32 1.1754944e-38, %v952
      %v954 = vsel %vm951, %v953, %v949
      %v955 = vmul.f32 %v937, %v954
      %v956 = vpack.c.bf16 %v955, %v955
      %957 = vrot.lane.b32.xlu0 %v905, 64
      %v958 = vpop.permute.xlu0 %957
      %v960 = vsel %vm931, %v956, 0
      %vm962 = vcmask 1043456
      %v964 = vsel %vm962, %v958, 0
      %966 = vmatpush.bf16.msra.mxu0 0
      %967 = vmatpush.bf16.msra.mxu0 0
      %968 = vmatpush.bf16.msra.mxu0 0
      %969 = vmatpush.bf16.msra.mxu0 0
      %970 = vmatpush.bf16.msra.mxu0 0
      %971 = vmatpush.bf16.msra.mxu0 0
      %972 = vmatpush.bf16.msra.mxu0 0
      %973 = vmatpush.bf16.msra.mxu0 %v964
      %974 = vmatmul.bf16.gmra.mxu0 %v960
      %v975 = vpop.f32.mrf.mxu0
      %v976 = vadd.f32 0.0, %v975
      %v977 = vpop.f32.mrf.mxu0
      %978 = vdwg.mxu0
      %v979 = vpack.c.bf16 %v976, %v976
      %980 = vrot.lane.b32.xlu0 %v905, 112
      %v981 = vpop.permute.xlu0 %980
      %982 = vrot.lane.b32.xlu0 %v905, 80
      %v983 = vpop.permute.xlu0 %982
      %v985 = vsel %vm909, %v981, 0
      %v988 = vsel %vm909, %v983, 0
      %990 = vmatpush.bf16.xpose.msra.mxu0 0
      %991 = vmatpush.bf16.xpose.msra.mxu0 0
      %992 = vmatpush.bf16.xpose.msra.mxu0 0
      %993 = vmatpush.bf16.xpose.msra.mxu0 0
      %994 = vmatpush.bf16.xpose.msra.mxu0 0
      %995 = vmatpush.bf16.xpose.msra.mxu0 0
      %996 = vmatpush.bf16.xpose.msra.mxu0 0
      %997 = vmatpush.bf16.xpose.msra.mxu0 %v988
      %998 = vmatmul.bf16.gmra.mxu0 %v985
      %v999 = vpop.f32.mrf.mxu0
      %v1000 = vadd.f32 0.0, %v999
      %v1001 = vpop.f32.mrf.mxu0
      %1002 = vdwg.mxu0
      %v1003 = vmul.f32 %v1000, 0.25
      %v1004 = vadd.f32 %v1003, %v823
      %v1005 = vsel %vm931, %v1004, -inf
      %1006 = vmax.xlane.f32.xlu0 %v1005
      %v1007 = vpop.xlane.xlu0 %1006
      %v1008 = vsub.f32 %v1004, %v1007
      %v1009 = vmul.f32 %v1008, 1.442695
      %v1010 = vpow.pop %v1009
      %v1011 = vsel %vm931, %v1010, 0.0
      %1012 = vadd.xlane.f32.xlu0 %v1011
      %v1013 = vpop.xlane.xlu0 %1012
      %v1014 = vrcp.pop %v1013
      %v1015 = vmul.f32 %v1013, %v1014
      %v1016 = vsub.f32 1.0, %v1015
      %v1017 = vmul.f32 %v1014, %v1016
      %v1018 = vadd.f32 %v1014, %v1017
      %vm1019 = vweird.f32 %v1013
      %vm1020 = vweird.f32 %v1014
      %vm1021 = vmor %vm1019, %vm1020
      %v1022 = vsel %vm1021, %v1014, %v1018
      %v1023 = vand.u32 2147483647, %v1013
      %vm1024 = vcmp.eq.f32.partialorder %v1023, 8.507059e+37
      %v1025 = vand.u32 %v1013, 2147483648
      %v1026 = vor.u32 1.1754944e-38, %v1025
      %v1027 = vsel %vm1024, %v1026, %v1022
      %v1028 = vmul.f32 %v1010, %v1027
      %v1029 = vpack.c.bf16 %v1028, %v1028
      %1030 = vrot.lane.b32.xlu0 %v905, 48
      %v1031 = vpop.permute.xlu0 %1030
      %v1033 = vsel %vm931, %v1029, 0
      %v1036 = vsel %vm962, %v1031, 0
      %1038 = vmatpush.bf16.msra.mxu0 0
      %1039 = vmatpush.bf16.msra.mxu0 0
      %1040 = vmatpush.bf16.msra.mxu0 0
      %1041 = vmatpush.bf16.msra.mxu0 0
      %1042 = vmatpush.bf16.msra.mxu0 0
      %1043 = vmatpush.bf16.msra.mxu0 0
      %1044 = vmatpush.bf16.msra.mxu0 0
      %1045 = vmatpush.bf16.msra.mxu0 %v1036
      %1046 = vmatmul.bf16.gmra.mxu0 %v1033
      %v1047 = vpop.f32.mrf.mxu0
      %v1048 = vadd.f32 0.0, %v1047
      %v1049 = vpop.f32.mrf.mxu0
      %1050 = vdwg.mxu0
      %v1051 = vpack.c.bf16 %v1048, %v1048
      %v1054 = vunpack.c.l.b16 %v903
      %v1055 = vunpack.c.l.b16 %v904
      %v1056 = vpack.c.b16 %v1055, %v1054
      %v1059 = vsel %vm909, %v1051, 0
      %1061 = vmatpush.bf16.msra.mxu0 0
      %1062 = vmatpush.bf16.msra.mxu0 0
      %1063 = vmatpush.bf16.msra.mxu0 0
      %1064 = vmatpush.bf16.msra.mxu0 0
      %1065 = vmatpush.bf16.msra.mxu0 0
      %1066 = vmatpush.bf16.msra.mxu0 0
      %1067 = vmatpush.bf16.msra.mxu0 0
      %1068 = vmatpush.bf16.msra.mxu0 %v1056
      %1069 = vmatmul.bf16.gmra.mxu0 %v1059
      %v1070 = vpop.f32.mrf.mxu0
      %v1071 = vadd.f32 0.0, %v1070
      %v1072 = vpop.f32.mrf.mxu0
      %1073 = vdwg.mxu0
      %v1076 = vunpack.c.l.b16 %v901
      %v1077 = vunpack.c.l.b16 %v902
      %v1078 = vpack.c.b16 %v1077, %v1076
      %v1081 = vsel %vm909, %v979, 0
      %1083 = vmatpush.bf16.msra.mxu0 0
      %1084 = vmatpush.bf16.msra.mxu0 0
      %1085 = vmatpush.bf16.msra.mxu0 0
      %1086 = vmatpush.bf16.msra.mxu0 0
      %1087 = vmatpush.bf16.msra.mxu0 0
      %1088 = vmatpush.bf16.msra.mxu0 0
      %1089 = vmatpush.bf16.msra.mxu0 0
      %1090 = vmatpush.bf16.msra.mxu0 %v1078
      %1091 = vmatmul.bf16.gmra.mxu0 %v1081
      %v1092 = vpop.f32.mrf.mxu0
      %v1093 = vadd.f32 %v1071, %v1092
      %v1094 = vpop.f32.mrf.mxu0
      %1095 = vdwg.mxu0
      %v1096 = vadd.f32 %v822, %v1093
      %v1097 = vld [vmem:[%s788] sm:$0x1]
      %v1099 = vperm.slane %v1097, 0
      %v1101 = vadd.f32 %v1096, %v1099
      %v1102 = vld [vmem:[%s791] sm:$0x1]
      %v1103 = vld [vmem:[%s794] sm:$0x1]
      %v1104 = vsel %vm826, %v1101, 0.0
      %1105 = vadd.xlane.f32.xlu0 %v1104
      %v1106 = vpop.xlane.xlu0 %1105
      %v1107 = vmul.f32 %v1106, %v836
      %v1108 = vsub.f32 %v1101, %v1107
      %v1109 = vmul.f32 %v1108, %v1108
      %v1110 = vsel %vm826, %v1109, 0.0
      %1111 = vadd.xlane.f32.xlu0 %v1110
      %v1112 = vpop.xlane.xlu0 %1111
      %v1113 = vmul.f32 %v1112, %v836
      %v1114 = vadd.f32 %v1113, 1e-05
      %v1115 = vrsqrt.pop %v1114
      %v1116 = vmul.f32 %v1115, %v1114
      %v1117 = vmul.f32 %v1116, %v1115
      %v1118 = vmul.f32 0.5, %v1117
      %v1119 = vsub.f32 1.5, %v1118
      %v1120 = vmul.f32 %v1115, %v1119
      %vm1121 = vweird.f32 %v1114
      %vm1122 = vweird.f32 %v1115
      %vm1123 = vmor %vm1121, %vm1122
      %v1124 = vsel %vm1123, %v1115, %v1120
      %v1125 = vmul.f32 %v1108, %v1124
      %v1127 = vperm.slane %v1102, 0
      %v1129 = vmul.f32 %v1125, %v1127
      %v1131 = vperm.slane %v1103, 0
      %v1133 = vadd.f32 %v1129, %v1131
      %v1134 = vpack.c.bf16 %v1133, %v1133
      %v1135 = vld [vmem:[%s799] sm:$0xf]
      %v1136 = vld [vmem:[%s799 + $0x4] sm:$0xf]
      %v1137 = vld [vmem:[%s799 + $0x8] sm:$0xf]
      %v1138 = vld [vmem:[%s799 + $0xc] sm:$0xf]
      %v1139 = vld [vmem:[%s802] sm:$0x1]
      %v1141 = vperm.slane %v1139, 0
      %v1147 = vunpack.c.l.b16 %v1135
      %v1148 = vunpack.c.l.b16 %v1136
      %v1149 = vunpack.c.l.b16 %v1137
      %v1150 = vunpack.c.l.b16 %v1138
      %v1151 = vpack.c.b16 %v1148, %v1147
      %v1152 = vpack.c.b16 %v1150, %v1149
      %v1156 = vsel %vm826, %v1134, 0
      %1158 = vmatpush.bf16.msra.mxu0 0
      %1159 = vmatpush.bf16.msra.mxu0 0
      %1160 = vmatpush.bf16.msra.mxu0 0
      %1161 = vmatpush.bf16.msra.mxu0 0
      %1162 = vmatpush.bf16.msra.mxu0 0
      %1163 = vmatpush.bf16.msra.mxu0 0
      %1164 = vmatpush.bf16.msra.mxu0 %v1152
      %1165 = vmatpush.bf16.msra.mxu0 %v1151
      %1166 = vmatmul.bf16.gmra.mxu0 %v1156
      %v1167 = vpop.f32.mrf.mxu0
      %v1168 = vadd.f32 %v1141, %v1167
      %v1169 = vpop.f32.mrf.mxu0
      %1170 = vdwg.mxu0
      %v1171 = vmul.f32 %v1168, %v1168
      %v1172 = vmul.f32 %v1168, %v1171
      %v1173 = vmul.f32 %v1172, 0.044715
      %v1174 = vadd.f32 %v1168, %v1173
      %v1175 = vmul.f32 %v1174, 0.7978846
      %v1176 = vtanh.pop %v1175
      %v1177 = vadd.f32 %v1176, 1.0
      %v1178 = vmul.f32 %v1177, 0.5
      %v1179 = vmul.f32 %v1168, %v1178
      %v1180 = vpack.c.bf16 %v1179, %v1179
      %v1181 = vld [vmem:[%s807] sm:$0xf]
      %v1182 = vld [vmem:[%s807 + $0x4] sm:$0xf]
      %v1183 = vld [vmem:[%s807 + $0x8] sm:$0xf]
      %v1184 = vld [vmem:[%s807 + $0xc] sm:$0xf]
      %v1185 = vld [vmem:[%s807 + $0x10] sm:$0xf]
      %v1186 = vld [vmem:[%s807 + $0x14] sm:$0xf]
      %v1187 = vld [vmem:[%s807 + $0x18] sm:$0xf]
      %v1188 = vld [vmem:[%s807 + $0x1c] sm:$0xf]
      %v1189 = vld [vmem:[%s807 + $0x20] sm:$0xf]
      %v1190 = vld [vmem:[%s807 + $0x24] sm:$0xf]
      %v1191 = vld [vmem:[%s807 + $0x28] sm:$0xf]
      %v1192 = vld [vmem:[%s807 + $0x2c] sm:$0xf]
      %v1193 = vld [vmem:[%s807 + $0x30] sm:$0xf]
      %v1194 = vld [vmem:[%s807 + $0x34] sm:$0xf]
      %v1195 = vld [vmem:[%s807 + $0x38] sm:$0xf]
      %v1196 = vld [vmem:[%s807 + $0x3c] sm:$0xf]
      %v1197 = vld [vmem:[%s810] sm:$0x1]
      %v1199 = vperm.slane %v1197, 0
      %v1217 = vunpack.c.l.b16 %v1181
      %v1218 = vunpack.c.l.b16 %v1182
      %v1219 = vunpack.c.l.b16 %v1183
      %v1220 = vunpack.c.l.b16 %v1184
      %v1221 = vunpack.c.l.b16 %v1185
      %v1222 = vunpack.c.l.b16 %v1186
      %v1223 = vunpack.c.l.b16 %v1187
      %v1224 = vunpack.c.l.b16 %v1188
      %v1225 = vunpack.c.l.b16 %v1189
      %v1226 = vunpack.c.l.b16 %v1190
      %v1227 = vunpack.c.l.b16 %v1191
      %v1228 = vunpack.c.l.b16 %v1192
      %v1229 = vunpack.c.l.b16 %v1193
      %v1230 = vunpack.c.l.b16 %v1194
      %v1231 = vunpack.c.l.b16 %v1195
      %v1232 = vunpack.c.l.b16 %v1196
      %v1233 = vpack.c.b16 %v1218, %v1217
      %v1234 = vpack.c.b16 %v1220, %v1219
      %v1235 = vpack.c.b16 %v1222, %v1221
      %v1236 = vpack.c.b16 %v1224, %v1223
      %v1237 = vpack.c.b16 %v1226, %v1225
      %v1238 = vpack.c.b16 %v1228, %v1227
      %v1239 = vpack.c.b16 %v1230, %v1229
      %v1240 = vpack.c.b16 %v1232, %v1231
      %1249 = vmatpush.bf16.msra.mxu0 %v1240
      %1250 = vmatpush.bf16.msra.mxu0 %v1239
      %1251 = vmatpush.bf16.msra.mxu0 %v1238
      %1252 = vmatpush.bf16.msra.mxu0 %v1237
      %1253 = vmatpush.bf16.msra.mxu0 %v1236
      %1254 = vmatpush.bf16.msra.mxu0 %v1235
      %1255 = vmatpush.bf16.msra.mxu0 %v1234
      %1256 = vmatpush.bf16.msra.mxu0 %v1233
      %1257 = vmatmul.bf16.gmra.mxu0 %v1180
      %v1258 = vpop.f32.mrf.mxu0
      %v1259 = vadd.f32 %v1199, %v1258
      %v1260 = vpop.f32.mrf.mxu0
      %1261 = vdwg.mxu0
      %v1262 = vadd.f32 %v1101, %v1259
      %1263 = vst.msk [vmem:[#allocation2] sm:$0xff] %vm826, %v1262
      %p1264 = scmp.eq.s32.totalorder %s35, 1
      // Predicated region
      $region101: #{clipmvit_forward.6} parent=95 // pred_check
        %p1265 = pneg %p1264
      $region102: #{clipmvit_forward.6} parent=95 // pred_check_branch
        %1267 = sbr.rel (%p1265) target = $region104
      $region103: #{clipmvit_forward.6} parent=95 // pred_region
        %v1268 = vld [vmem:[%s15] sm:$0x1]
        %v1269 = vld [vmem:[%s16] sm:$0x1]
        %v1270 = vsel %vm826, %v1262, 0.0
        %1271 = vadd.xlane.f32.xlu0 %v1270
        %v1272 = vpop.xlane.xlu0 %1271
        %v1273 = vmul.f32 %v1272, %v836
        %v1274 = vsub.f32 %v1262, %v1273
        %v1275 = vmul.f32 %v1274, %v1274
        %v1276 = vsel %vm826, %v1275, 0.0
        %1277 = vadd.xlane.f32.xlu0 %v1276
        %v1278 = vpop.xlane.xlu0 %1277
        %v1279 = vmul.f32 %v1278, %v836
        %v1280 = vadd.f32 %v1279, 1e-05
        %v1281 = vrsqrt.pop %v1280
        %v1282 = vmul.f32 %v1281, %v1280
        %v1283 = vmul.f32 %v1282, %v1281
        %v1284 = vmul.f32 0.5, %v1283
        %v1285 = vsub.f32 1.5, %v1284
        %v1286 = vmul.f32 %v1281, %v1285
        %vm1287 = vweird.f32 %v1280
        %vm1288 = vweird.f32 %v1281
        %vm1289 = vmor %vm1287, %vm1288
        %v1290 = vsel %vm1289, %v1281, %v1286
        %v1291 = vmul.f32 %v1274, %v1290
        %v1293 = vperm.slane %v1268, 0
        %v1295 = vmul.f32 %v1291, %v1293
        %v1297 = vperm.slane %v1269, 0
        %v1299 = vadd.f32 %v1295, %v1297
        %v1300 = vld [vmem:[%s766] sm:$0x1]
        %v1302 = vsel %vm931, %v1300, 0
        %1304 = vmatpush.msra.mxu0 0.0
        %1305 = vmatpush.msra.mxu0 0.0
        %1306 = vmatpush.msra.mxu0 0.0
        %1307 = vmatpush.msra.mxu0 0.0
        %1308 = vmatpush.msra.mxu0 0.0
        %1309 = vmatpush.msra.mxu0 0.0
        %1310 = vmatpush.msra.mxu0 0.0
        %1311 = vmatpush.msra.mxu0 0.0
        %1312 = vmatpush.msra.mxu0 0.0
        %1313 = vmatpush.msra.mxu0 0.0
        %1314 = vmatpush.msra.mxu0 0.0
        %1315 = vmatpush.msra.mxu0 0.0
        %1316 = vmatpush.msra.mxu0 0.0
        %1317 = vmatpush.msra.mxu0 0.0
        %1318 = vmatpush.msra.mxu0 0.0
        %1319 = vmatpush.msra.mxu0 %v1299
        %1320 = vmatmul.f32.gmra.mxu0 %v1302
        %v1321 = vpop.f32.mrf.mxu0
        %v1322 = vadd.f32 0.0, %v1321
        %1323 = vdwg.mxu0
        %v1324 = vpack.c.bf16 %v1322, %v1322
        %v1325 = vld [vmem:[%s17] sm:$0xf]
        %v1326 = vld [vmem:[%s17 + $0x4] sm:$0xf]
        %v1327 = vld [vmem:[%s17 + $0x8] sm:$0xf]
        %v1328 = vld [vmem:[%s17 + $0xc] sm:$0xf]
        %v1329 = vld [vmem:[%s18] sm:$0x1]
        %v1334 = vunpack.c.l.b16 %v1325
        %v1335 = vunpack.c.l.b16 %v1326
        %v1336 = vunpack.c.l.b16 %v1327
        %v1337 = vunpack.c.l.b16 %v1328
        %v1338 = vpack.c.b16 %v1335, %v1334
        %v1339 = vpack.c.b16 %v1337, %v1336
        %v1343 = vsel %vm826, %v1324, 0
        %1345 = vmatpush.bf16.msra.mxu0 0
        %1346 = vmatpush.bf16.msra.mxu0 0
        %1347 = vmatpush.bf16.msra.mxu0 0
        %1348 = vmatpush.bf16.msra.mxu0 0
        %1349 = vmatpush.bf16.msra.mxu0 0
        %1350 = vmatpush.bf16.msra.mxu0 0
        %1351 = vmatpush.bf16.msra.mxu0 %v1339
        %1352 = vmatpush.bf16.msra.mxu0 %v1338
        %1353 = vmatmul.bf16.gmra.mxu0 %v1343
        %v1354 = vpop.f32.mrf.mxu0
        %v1355 = vadd.f32 %v1329, %v1354
        %v1356 = vpop.f32.mrf.mxu0
        %1357 = vdwg.mxu0
        %v1358 = vmul.f32 %v1355, %v1355
        %vm1359 = vcmask 253952
        %v1360 = vsel %vm1359, %v1358, 0.0
        %1361 = vadd.xlane.f32.xlu0 %v1360
        %v1362 = vpop.xlane.xlu0 %1361
        %v1363 = vmax.f32 %v1362, 1e-24
        %v1364 = vrsqrt.pop %v1363
        %v1365 = vmul.f32 %v1364, %v1363
        %v1366 = vmul.f32 %v1365, %v1364
        %v1367 = vmul.f32 0.5, %v1366
        %v1368 = vsub.f32 1.5, %v1367
        %v1369 = vmul.f32 %v1364, %v1368
        %vm1370 = vweird.f32 %v1363
        %vm1371 = vweird.f32 %v1364
        %vm1372 = vmor %vm1370, %vm1371
        %v1373 = vsel %vm1372, %v1364, %v1369
        %v1374 = vmul.f32 %v1355, %v1373
        %1375 = vst.msk [vmem:[%s813] sm:$0x1] %vm1359, %v1374
      $region104: #{clipmvit_forward.6} parent=95 // pred_fallthru
        _
      %p1376 = scmp.lt.s32.totalorder %s34, 1
      %s1377 = scalar_select %p1376, %s34, 1
      %s1378 = scalar_lea.vmem %s19, %s1377
      // Predicated region
      $region105: #{clipmvit_forward.6} parent=95 // pred_check
        %p1379 = pneg %p529
      $region106: #{clipmvit_forward.6} parent=95 // pred_check_branch
        %1381 = sbr.rel (%p1379) target = $region108
      $region107: #{clipmvit_forward.6} parent=95 // pred_region
        _
      $region108: #{clipmvit_forward.6} parent=95 // pred_fallthru
        _
    $region96: #{clipmvit_forward.6} parent=5 // pred_fallthru
      _
    %p1382 = scmp.le.s32.totalorder 2, %s25
    // Predicated region
    $region109: #{clipmvit_forward.6} parent=5 // pred_check
      %p1383 = pneg %p1382
    $region110: #{clipmvit_forward.6} parent=5 // pred_check_branch
      %1385 = sbr.rel (%p1383) target = $region112
    $region111: #{clipmvit_forward.6} parent=5 // pred_region
      %s1386 = ssub.s32 %s25, 2
      // Predicated region
      $region113: #{clipmvit_forward.6} parent=111 // pred_check
        %p1387 = pneg %p535
      $region114: #{clipmvit_forward.6} parent=111 // pred_check_branch
        %1389 = sbr.rel (%p1387) target = $region116
      $region115: #{clipmvit_forward.6} parent=111 // pred_region
        %p1390 = scmp.lt.s32.totalorder %s36, 1
        %s1391 = scalar_select %p1390, %s36, 1
        %s1392 = scalar_lea.vmem %s19, %s1391
      $region116: #{clipmvit_forward.6} parent=111 // pred_fallthru
        _
    $region112: #{clipmvit_forward.6} parent=5 // pred_fallthru
      _
  $region6: #{clipmvit_forward.6} parent=0 // loop_footer
    %s29 = sadd.s32 1, %s25
  $region7: #{clipmvit_forward.6} parent=0 // loop_footer_branch
    %24 = sbr.rel target = $region3
  $region8: #{clipmvit_forward.6} parent=0 // loop_exit
    _

</llo_original>
